<compile_context>
chip_gen: v6e
topology: v6e:2x2x1
jax: 0.10.0
libtpu: 0.0.40
codegen_flags: <defaults>
</compile_context>

<pallas_src>
import functools

import jax
import jax.numpy as jnp
from jax import lax
from jax.experimental import pallas as pl
from jax.experimental.pallas import tpu as pltpu

LANE = 128
SUBLANE = 8
_VMEM_LIMIT = 48 * 1024 * 1024  # explicit scoped-VMEM budget (>= all defaults, < v7x physical)


def _round_up(n, m):
    return (n + m - 1) // m * m


def _pad_axis(x, size, axis):
    pad = size - x.shape[axis]
    if pad <= 0:
        return x
    widths = [(0, 0)] * x.ndim
    widths[axis] = (0, pad)
    return jnp.pad(x, widths)


def _pad2d(w, rows, cols):
    return _pad_axis(_pad_axis(w, rows, 0), cols, 1)


def fold_bn(gamma, beta, mean, var, eps=1e-5):
    """Inference-mode BatchNorm folded to per-channel scale/bias."""
    scale = gamma / jnp.sqrt(var + eps)
    return scale, beta - mean * scale


# ---------------------------------------------------------------------------
# Fused matmul + bias (+ReLU) kernel (used for the 1x1 "expand" conv)
# ---------------------------------------------------------------------------
def _matmul_bias_kernel(x_ref, w_ref, b_ref, o_ref, *, relu):
    acc = jnp.dot(x_ref[...], w_ref[...], preferred_element_type=jnp.float32)
    acc = acc + b_ref[...]
    if relu:
        acc = jnp.maximum(acc, 0.0)
    o_ref[...] = acc.astype(o_ref.dtype)


def matmul_bias(x, w, b, relu=False, out_dtype=jnp.bfloat16):
    """out = relu?(x @ w + b); x/w bf16 (MXU-native), f32 accumulation + bias."""
    M, K = x.shape
    cout = w.shape[1]
    # Large row tiles amortize the ~0.35us/step overhead, but keep >= 4 grid
    # steps so v7x megacore still has >= 2 steps/core and the DMA pipeline
    # has something to overlap.
    tm = max(SUBLANE, min(512, _round_up(pl.cdiv(M, 4), SUBLANE)))
    mp = _round_up(M, tm)
    x = _pad_axis(x, mp, 0)
    out = pl.pallas_call(
        functools.partial(_matmul_bias_kernel, relu=relu),
        out_shape=jax.ShapeDtypeStruct((mp, cout), out_dtype),
        grid=(mp // tm,),
        in_specs=[
            pl.BlockSpec((tm, K), lambda i: (i, 0)),     # activation rows (pipelined)
            pl.BlockSpec((K, cout), lambda i: (0, 0)),   # weight (BN scale folded), resident
            pl.BlockSpec((1, cout), lambda i: (0, 0)),   # BN bias (f32)
        ],
        out_specs=pl.BlockSpec((tm, cout), lambda i: (i, 0)),
        compiler_params=pltpu.CompilerParams(
            dimension_semantics=("parallel",),
            vmem_limit_bytes=_VMEM_LIMIT),
        cost_estimate=pl.CostEstimate(
            flops=2 * mp * K * cout, transcendentals=0,
            bytes_accessed=2 * (mp * K + K * cout + mp * cout) + 4 * cout),
    )(x, w, b)
    return out[:M]


# ---------------------------------------------------------------------------
# Fully fused ResBlock kernel
#   conv3x3(+BN1 folded)+ReLU -> conv1x1(+BN2) -> (+skip) -> ReLU
# ---------------------------------------------------------------------------
def _tap_tables(stride):
    """Static (input_ref_index, row_offset, col_offset) per 3x3 tap."""
    if stride == 1:
        taps = tuple((0, dy, dx) for dy in range(3) for dx in range(3))
        skip_tap = (0, 1, 1)
    else:  # stride 2: four spatial-phase inputs, ref index = 2*(dy%2)+(dx%2)
        taps = tuple((2 * (dy % 2) + (dx % 2), dy // 2, dx // 2)
                     for dy in range(3) for dx in range(3))
        skip_tap = (3, 0, 0)
    return taps, skip_tap


def _resblock_kernel(*refs, taps, skip_tap, th, wo, n_x, has_proj):
    """One fused ResBlock tile; all intermediates stay in VMEM / vregs."""
    x_refs = refs[:n_x]
    w1_ref, b1_ref, w2_ref, b2_ref = refs[n_x:n_x + 4]
    if has_proj:
        ws_ref, bs_ref, o_ref = refs[n_x + 4:]
    else:
        (o_ref,) = refs[n_x + 4:]

    j = pl.program_id(1)
    r0 = pl.multiple_of(j * th, th)          # first output row of this tile
    cip = x_refs[0].shape[-1]
    cop = o_ref.shape[-1]
    m = th * wo

    def load_tap(tap):
        ti, ro, co = tap                     # all contiguous loads, no strided access
        v = x_refs[ti][0, pl.ds(r0 + ro, th), pl.ds(co, wo), :]
        return v.reshape(m, cip)

    # 3x3 conv (+BN1 scale folded into w1): 9 bf16 MXU matmuls, f32 accumulation.
    acc = jnp.zeros((m, cop), jnp.float32)
    for t, tap in enumerate(taps):
        acc = acc + jnp.dot(load_tap(tap), w1_ref[t],
                            preferred_element_type=jnp.float32)
    h = jnp.maximum(acc + b1_ref[...], 0.0)                   # BN1 bias + ReLU (f32)

    # 1x1 conv2 (+BN2 scale folded); h never leaves the kernel.
    out = jnp.dot(h.astype(w2_ref.dtype), w2_ref[...],
                  preferred_element_type=jnp.float32) + b2_ref[...]

    # Skip branch: center tap of the (strided) input, fused (no HBM round trip).
    xc = load_tap(skip_tap)
    if has_proj:
        out = out + jnp.dot(xc, ws_ref[...],
                            preferred_element_type=jnp.float32) + bs_ref[...]
    else:
        out = out + xc.astype(jnp.float32)

    o_ref[...] = jnp.maximum(out, 0.0).reshape(1, th, wo, cop).astype(o_ref.dtype)


def _pick_row_tile(ho, n_batch):
    """Largest output-row tile that still leaves >= 2 row tiles, so the total
    grid has >= 2*N steps (v7x megacore sharding + DMA pipelining)."""
    if ho <= 1:
        return max(ho, 1)
    target = max(2, 4 // max(n_batch, 1))
    for tiles in range(target, ho + 1):
        if ho % tiles == 0:
            return ho // tiles
    return ho


def resblock_pallas(x, blk):
    """x: (N, H, W, Cin_padded) bf16 NHWC -> (N, Ho, Wo, Cout_padded) bf16."""
    N, H, W, cip = x.shape
    stride = blk['stride']
    co = blk['conv1_w'].shape[3]
    cop = _round_up(co, LANE)

    s1, b1 = fold_bn(*blk['bn1'])
    s2, b2 = fold_bn(*blk['bn2'])

    # Fold the BN scale into the conv weight columns; only the bias stays in-kernel.
    w1 = _pad_axis(_pad_axis(blk['conv1_w'] * s1, cip, 2), cop, 3)
    w1 = w1.reshape(9, cip, cop).astype(jnp.bfloat16)
    b1p = _pad_axis(b1, cop, 0).reshape(1, cop).astype(jnp.float32)
    w2 = _pad2d(blk['conv2_w'][0, 0] * s2, cop, cop).astype(jnp.bfloat16)
    b2p = _pad_axis(b2, cop, 0).reshape(1, cop).astype(jnp.float32)

    has_proj = blk['skip'] is not None
    proj_args, proj_specs = [], []
    if has_proj:
        ss, bs = fold_bn(*blk['skip']['bn'])
        ws = _pad2d(blk['skip']['w'][0, 0] * ss, cip, cop).astype(jnp.bfloat16)
        bsp = _pad_axis(bs, cop, 0).reshape(1, cop).astype(jnp.float32)
        proj_args = [ws, bsp]
        proj_specs = [pl.BlockSpec((cip, cop), lambda n, j: (0, 0)),
                      pl.BlockSpec((1, cop), lambda n, j: (0, 0))]

    ho = (H - 1) // stride + 1
    wo = (W - 1) // stride + 1
    th = _pick_row_tile(ho, N)

    # Cheap XLA-side spatial zero-pad (pad=1, ~1x bytes -- NOT a 9x im2col).
    # For stride 2 the padded input is additionally split into its 4 spatial
    # phases so every 3x3 tap in the kernel is a plain contiguous slice.
    xp = jnp.pad(x, ((0, 0), (1, 1), (1, 1), (0, 0)))
    if stride == 1:
        x_inputs = [xp]
    else:
        x_inputs = [xp[:, r::2, c::2, :] for r in (0, 1) for c in (0, 1)]
    x_specs = [pl.BlockSpec((1,) + xi.shape[1:], lambda n, j: (n, 0, 0, 0))
               for xi in x_inputs]

    taps, skip_tap = _tap_tables(stride)
    kernel = functools.partial(_resblock_kernel, taps=taps, skip_tap=skip_tap,
                               th=th, wo=wo, n_x=len(x_inputs), has_proj=has_proj)

    flops = 2 * N * ho * wo * (9 * cip * cop + cop * cop
                               + (cip * cop if has_proj else 0))
    bytes_accessed = 2 * (N * (H + 2) * (W + 2) * cip + 9 * cip * cop
                          + cop * cop + N * ho * wo * cop)

    return pl.pallas_call(
        kernel,
        out_shape=jax.ShapeDtypeStruct((N, ho, wo, cop), jnp.bfloat16),
        grid=(N, ho // th),
        in_specs=x_specs + [
            pl.BlockSpec((9, cip, cop), lambda n, j: (0, 0, 0)),  # conv1 w, VMEM-resident
            pl.BlockSpec((1, cop), lambda n, j: (0, 0)),          # BN1 bias
            pl.BlockSpec((cop, cop), lambda n, j: (0, 0)),        # conv2 w
            pl.BlockSpec((1, cop), lambda n, j: (0, 0)),          # BN2 bias
        ] + proj_specs,
        out_specs=pl.BlockSpec((1, th, wo, cop), lambda n, j: (n, j, 0, 0)),
        compiler_params=pltpu.CompilerParams(
            dimension_semantics=("parallel", "parallel"),
            vmem_limit_bytes=_VMEM_LIMIT),
        cost_estimate=pl.CostEstimate(flops=flops, transcendentals=0,
                                      bytes_accessed=bytes_accessed),
    )(*x_inputs, w1, b1p, w2, b2p, *proj_args)


# ---------------------------------------------------------------------------
# Head: global average pool + linear (fused, lane-dense padded class dim)
# ---------------------------------------------------------------------------
def _head_kernel(x_ref, w_ref, b_ref, o_ref):
    pooled = jnp.mean(x_ref[...].astype(jnp.float32), axis=1)    # (N, Cp)
    out = jnp.dot(pooled, w_ref[...], preferred_element_type=jnp.float32)
    o_ref[...] = (out + b_ref[...]).astype(o_ref.dtype)


def avgpool_linear(x_nhwc, w, b):
    # TODO(synk): like F.avg_pool2d(x, x.shape[-1]) this assumes square spatial.
    N, H, W, C = x_nhwc.shape
    ncls = w.shape[1]
    x3 = x_nhwc.reshape(N, H * W, C)
    return pl.pallas_call(
        _head_kernel,
        out_shape=jax.ShapeDtypeStruct((N, ncls), jnp.float32),
    )(x3, w, b.reshape(1, ncls))


# ---------------------------------------------------------------------------
# ResNet forward (Pallas path)
# ---------------------------------------------------------------------------
def resnet_forward_pallas(x_nchw, params):
    # TODO(synk): BatchNorm is folded in inference mode (running stats); the
    # training-mode batch-statistics update is not computed in-kernel.
    x = jnp.transpose(x_nchw, (0, 2, 3, 1))                      # NCHW -> NHWC
    N, H, W, cin = x.shape
    cp_in = _round_up(cin, LANE)
    x = _pad_axis(x, cp_in, -1).astype(jnp.bfloat16)

    # expand: 1x1 conv + BN (scale folded into the weight), no ReLU.
    w = params['expand']['w']
    cp0 = _round_up(w.shape[3], LANE)
    s0, b0 = fold_bn(*params['expand']['bn'])
    w0 = _pad2d((w * s0)[0, 0], cp_in, cp0).astype(jnp.bfloat16)
    b0p = _pad_axis(b0, cp0, 0).reshape(1, cp0).astype(jnp.float32)
    x = matmul_bias(x.reshape(N * H * W, cp_in), w0, b0p, relu=False)
    x = x.reshape(N, H, W, cp0)

    # One fused pallas_call per ResBlock.
    for blk in params['blocks']:
        x = resblock_pallas(x, blk)

    # head: global average pool + linear (lane-dense padded class columns).
    w_head = params['head']['w']
    b_head = params['head']['b']
    c_last, n_cls = w_head.shape
    cp_last = _round_up(c_last, LANE)
    np_cls = _round_up(n_cls, LANE)
    w_hp = _pad2d(w_head, cp_last, np_cls)
    b_hp = _pad_axis(b_head, np_cls, 0)
    logits = avgpool_linear(x, w_hp, b_hp)
    return logits[:, :n_cls]


# ---------------------------------------------------------------------------
# Pure-JAX f32 reference (same folded-BN inference math)
# ---------------------------------------------------------------------------
def resnet_forward_ref(x_nchw, params):
    dn = ('NHWC', 'HWIO', 'NHWC')

    def bn(x, bn_params):
        s, b = fold_bn(*bn_params)
        return x * s + b

    x = jnp.transpose(x_nchw, (0, 2, 3, 1))
    x = bn(lax.conv_general_dilated(x, params['expand']['w'], (1, 1), 'VALID',
                                    dimension_numbers=dn), params['expand']['bn'])
    for blk in params['blocks']:
        s = blk['stride']
        h = bn(lax.conv_general_dilated(x, blk['conv1_w'], (s, s),
                                        [(1, 1), (1, 1)], dimension_numbers=dn),
               blk['bn1'])
        h = jnp.maximum(h, 0.0)
        h = bn(lax.conv_general_dilated(h, blk['conv2_w'], (1, 1), 'VALID',
                                        dimension_numbers=dn), blk['bn2'])
        if blk['skip'] is None:
            sk = x
        else:
            sk = bn(lax.conv_general_dilated(x, blk['skip']['w'], (s, s), 'VALID',
                                             dimension_numbers=dn),
                    blk['skip']['bn'])
        x = jnp.maximum(h + sk, 0.0)
    pooled = jnp.mean(x, axis=(1, 2))
    return pooled @ params['head']['w'] + params['head']['b']


# ---------------------------------------------------------------------------
# Parameter init (deterministic, shapes match the PyTorch module)
# ---------------------------------------------------------------------------
def init_resnet_params(key, in_channels, block_features, num_classes):
    feats = [block_features[0]] + list(block_features)

    def nk():
        nonlocal key
        key, sub = jax.random.split(key)
        return sub

    def conv_w(kh, kw, ci, co):
        std = 1.0 / jnp.sqrt(jnp.float32(kh * kw * ci))
        return jax.random.normal(nk(), (kh, kw, ci, co), jnp.float32) * std

    def bn_params(c):
        gamma = jax.random.uniform(nk(), (c,), jnp.float32, 0.5, 1.5)
        beta = jax.random.normal(nk(), (c,), jnp.float32) * 0.1
        mean = jax.random.normal(nk(), (c,), jnp.float32) * 0.1
        var = jax.random.uniform(nk(), (c,), jnp.float32, 0.5, 1.5)
        return (gamma, beta, mean, var)

    params = {
        'expand': {'w': conv_w(1, 1, in_channels, feats[0]),
                   'bn': bn_params(feats[0])},
        'blocks': [],
    }
    for i in range(len(feats) - 1):
        ci, co = feats[i], feats[i + 1]
        stride = 1 if ci >= co else 2
        params['blocks'].append({
            'stride': stride,
            'conv1_w': conv_w(3, 3, ci, co), 'bn1': bn_params(co),
            'conv2_w': conv_w(1, 1, co, co), 'bn2': bn_params(co),
            'skip': None if (stride == 1 and ci == co) else
                    {'w': conv_w(1, 1, ci, co), 'bn': bn_params(co)},
        })
    c_last = feats[-1]
    bound = 1.0 / jnp.sqrt(jnp.float32(c_last))
    params['head'] = {
        'w': jax.random.uniform(nk(), (c_last, num_classes), jnp.float32, -bound, bound),
        'b': jax.random.uniform(nk(), (num_classes,), jnp.float32, -bound, bound),
    }
    return params


if __name__ == "__main__":
    key = jax.random.PRNGKey(0)
    kx, kp = jax.random.split(key)

    N, C, H, W = 2, 4, 16, 16
    block_features = [16, 32]
    num_classes = 10

    x = jax.random.normal(kx, (N, C, H, W), jnp.float32)
    params = init_resnet_params(kp, C, block_features, num_classes)

    fwd = jax.jit(lambda inp: resnet_forward_pallas(inp, params))
    out = jax.block_until_ready(fwd(x))

    ref = resnet_forward_ref(x, params)
    assert out.shape == (N, num_classes)
    err = float(jnp.max(jnp.abs(out - ref)))
    scale = float(jnp.max(jnp.abs(ref)))
    # bf16 matmuls (f32 accumulation) vs. a pure-f32 reference.
    assert err <= 5e-2 + 5e-2 * scale, (err, scale)

    print("KERNEL_OK")
</pallas_src>

<mosaic_0001>
module attributes {stable_mosaic.version = 11 : i64} {
  func.func @_matmul_bias_kernel(%arg0: i32, %arg1: memref<128x128xbf16, #tpu.memory_space<vmem>>, %arg2: memref<128x128xbf16, #tpu.memory_space<vmem>>, %arg3: memref<1x128xf32, #tpu.memory_space<vmem>>, %arg4: memref<128x128xbf16, #tpu.memory_space<vmem>>) attributes {dimension_semantics = [#tpu.dimension_semantics<parallel>], iteration_bounds = array<i64: 4>, scalar_prefetch = 0 : i64, scratch_operands = 0 : i64, tpu.core_type = #tpu.core_type<tc>, window_params = [{transform_indices = @transform_0, window_bounds = array<i64: 128, 128>}, {pipeline_mode = #tpu.pipeline_mode<synchronous>, transform_indices = @transform_1, window_bounds = array<i64: 128, 128>}, {pipeline_mode = #tpu.pipeline_mode<synchronous>, transform_indices = @transform_2, window_bounds = array<i64: 1, 128>}, {transform_indices = @transform_3, window_bounds = array<i64: 128, 128>}]} {
    %c0 = arith.constant 0 : index
    %c0_0 = arith.constant 0 : index
    %0 = vector.load %arg1[%c0, %c0_0] : memref<128x128xbf16, #tpu.memory_space<vmem>>, vector<128x128xbf16>
    %c0_1 = arith.constant 0 : index
    %c0_2 = arith.constant 0 : index
    %1 = vector.load %arg2[%c0_1, %c0_2] : memref<128x128xbf16, #tpu.memory_space<vmem>>, vector<128x128xbf16>
    %cst = arith.constant dense<0.000000e+00> : vector<128x128xf32>
    %2 = tpu.matmul %0, %1, %cst {dimension_numbers = #tpu.dot_dimension_numbers<[1], [0], [0], [1], [0, 0, 1, 1], [], []>} : vector<128x128xbf16>, vector<128x128xbf16>, vector<128x128xf32> -> vector<128x128xf32>
    %c0_3 = arith.constant 0 : index
    %c0_4 = arith.constant 0 : index
    %3 = vector.load %arg3[%c0_3, %c0_4] : memref<1x128xf32, #tpu.memory_space<vmem>>, vector<1x128xf32>
    %4 = vector.broadcast %3 : vector<1x128xf32> to vector<128x128xf32>
    %5 = arith.addf %2, %4 : vector<128x128xf32>
    %6 = arith.truncf %5 : vector<128x128xf32> to vector<128x128xbf16>
    %c0_5 = arith.constant 0 : index
    %c0_6 = arith.constant 0 : index
    %7 = vector.load %arg4[%c0_5, %c0_6] : memref<128x128xbf16, #tpu.memory_space<vmem>>, vector<128x128xbf16>
    tpu.vector_store %arg4[%c0_5, %c0_6], %6 {strides = array<i32>} : memref<128x128xbf16, #tpu.memory_space<vmem>>, vector<128x128xbf16>,
    return
  }
  func.func @transform_0(%arg0: i32) -> (i32, i32) {
    %c0_i32 = arith.constant 0 : i32
    %c0_i32_0 = arith.constant 0 : i32
    return %arg0, %c0_i32 : i32, i32
  }
  func.func @transform_1(%arg0: i32) -> (i32, i32) {
    %c0_i32 = arith.constant 0 : i32
    %c0_i32_0 = arith.constant 0 : i32
    %c0_i32_1 = arith.constant 0 : i32
    return %c0_i32, %c0_i32_0 : i32, i32
  }
  func.func @transform_2(%arg0: i32) -> (i32, i32) {
    %c0_i32 = arith.constant 0 : i32
    %c0_i32_0 = arith.constant 0 : i32
    %c0_i32_1 = arith.constant 0 : i32
    return %c0_i32, %c0_i32_0 : i32, i32
  }
  func.func @transform_3(%arg0: i32) -> (i32, i32) {
    %c0_i32 = arith.constant 0 : i32
    %c0_i32_0 = arith.constant 0 : i32
    return %arg0, %c0_i32 : i32, i32
  }
}

module attributes {stable_mosaic.version = 11 : i64} {
  func.func @_resblock_kernel(%arg0: i32, %arg1: i32, %arg2: memref<1x18x18x128xbf16, #tpu.memory_space<vmem>>, %arg3: memref<9x128x128xbf16, #tpu.memory_space<vmem>>, %arg4: memref<1x128xf32, #tpu.memory_space<vmem>>, %arg5: memref<128x128xbf16, #tpu.memory_space<vmem>>, %arg6: memref<1x128xf32, #tpu.memory_space<vmem>>, %arg7: memref<1x8x16x128xbf16, #tpu.memory_space<vmem>>) attributes {dimension_semantics = [#tpu.dimension_semantics<parallel>, #tpu.dimension_semantics<parallel>], iteration_bounds = array<i64: 2, 2>, scalar_prefetch = 0 : i64, scratch_operands = 0 : i64, tpu.core_type = #tpu.core_type<tc>, window_params = [{transform_indices = @transform_0, window_bounds = array<i64: 1, 18, 18, 128>}, {pipeline_mode = #tpu.pipeline_mode<synchronous>, transform_indices = @transform_1, window_bounds = array<i64: 9, 128, 128>}, {pipeline_mode = #tpu.pipeline_mode<synchronous>, transform_indices = @transform_2, window_bounds = array<i64: 1, 128>}, {pipeline_mode = #tpu.pipeline_mode<synchronous>, transform_indices = @transform_3, window_bounds = array<i64: 128, 128>}, {pipeline_mode = #tpu.pipeline_mode<synchronous>, transform_indices = @transform_4, window_bounds = array<i64: 1, 128>}, {transform_indices = @transform_5, window_bounds = array<i64: 1, 8, 16, 128>}]} {
    %c8_i32 = arith.constant 8 : i32
    %0 = arith.muli %arg1, %c8_i32 : i32
    %1 = tpu.assume_multiple %0, 8 : i32
    %cst = arith.constant 0.000000e+00 : f32
    %2 = vector.broadcast %cst : f32 to vector<128x128xf32>
    %c0_i32 = arith.constant 0 : i32
    %3 = arith.addi %1, %c0_i32 : i32
    %c0 = arith.constant 0 : index
    %4 = arith.index_cast %3 : i32 to index
    %c0_0 = arith.constant 0 : index
    %c0_1 = arith.constant 0 : index
    %5 = vector.load %arg2[%c0, %4, %c0_0, %c0_1] : memref<1x18x18x128xbf16, #tpu.memory_space<vmem>>, vector<1x8x16x128xbf16>
    %6 = vector.shape_cast %5 : vector<1x8x16x128xbf16> to vector<8x16x128xbf16>
    %7 = vector.shape_cast %6 : vector<8x16x128xbf16> to vector<128x128xbf16>
    %c0_2 = arith.constant 0 : index
    %c0_3 = arith.constant 0 : index
    %c0_4 = arith.constant 0 : index
    %8 = vector.load %arg3[%c0_2, %c0_3, %c0_4] : memref<9x128x128xbf16, #tpu.memory_space<vmem>>, vector<1x128x128xbf16>
    %9 = vector.shape_cast %8 : vector<1x128x128xbf16> to vector<128x128xbf16>
    %cst_5 = arith.constant dense<0.000000e+00> : vector<128x128xf32>
    %10 = tpu.matmul %7, %9, %cst_5 {dimension_numbers = #tpu.dot_dimension_numbers<[1], [0], [0], [1], [0, 0, 1, 1], [], []>} : vector<128x128xbf16>, vector<128x128xbf16>, vector<128x128xf32> -> vector<128x128xf32>
    %11 = arith.addf %2, %10 : vector<128x128xf32>
    %c0_i32_6 = arith.constant 0 : i32
    %12 = arith.addi %1, %c0_i32_6 : i32
    %c0_7 = arith.constant 0 : index
    %13 = arith.index_cast %12 : i32 to index
    %c1 = arith.constant 1 : index
    %c0_8 = arith.constant 0 : index
    %14 = vector.load %arg2[%c0_7, %13, %c1, %c0_8] : memref<1x18x18x128xbf16, #tpu.memory_space<vmem>>, vector<1x8x16x128xbf16>
    %15 = vector.shape_cast %14 : vector<1x8x16x128xbf16> to vector<8x16x128xbf16>
    %16 = vector.shape_cast %15 : vector<8x16x128xbf16> to vector<128x128xbf16>
    %c1_9 = arith.constant 1 : index
    %c0_10 = arith.constant 0 : index
    %c0_11 = arith.constant 0 : index
    %17 = vector.load %arg3[%c1_9, %c0_10, %c0_11] : memref<9x128x128xbf16, #tpu.memory_space<vmem>>, vector<1x128x128xbf16>
    %18 = vector.shape_cast %17 : vector<1x128x128xbf16> to vector<128x128xbf16>
    %cst_12 = arith.constant dense<0.000000e+00> : vector<128x128xf32>
    %19 = tpu.matmul %16, %18, %cst_12 {dimension_numbers = #tpu.dot_dimension_numbers<[1], [0], [0], [1], [0, 0, 1, 1], [], []>} : vector<128x128xbf16>, vector<128x128xbf16>, vector<128x128xf32> -> vector<128x128xf32>
    %20 = arith.addf %11, %19 : vector<128x128xf32>
    %c0_i32_13 = arith.constant 0 : i32
    %21 = arith.addi %1, %c0_i32_13 : i32
    %c0_14 = arith.constant 0 : index
    %22 = arith.index_cast %21 : i32 to index
    %c2 = arith.constant 2 : index
    %c0_15 = arith.constant 0 : index
    %23 = vector.load %arg2[%c0_14, %22, %c2, %c0_15] : memref<1x18x18x128xbf16, #tpu.memory_space<vmem>>, vector<1x8x16x128xbf16>
    %24 = vector.shape_cast %23 : vector<1x8x16x128xbf16> to vector<8x16x128xbf16>
    %25 = vector.shape_cast %24 : vector<8x16x128xbf16> to vector<128x128xbf16>
    %c2_16 = arith.constant 2 : index
    %c0_17 = arith.constant 0 : index
    %c0_18 = arith.constant 0 : index
    %26 = vector.load %arg3[%c2_16, %c0_17, %c0_18] : memref<9x128x128xbf16, #tpu.memory_space<vmem>>, vector<1x128x128xbf16>
    %27 = vector.shape_cast %26 : vector<1x128x128xbf16> to vector<128x128xbf16>
    %cst_19 = arith.constant dense<0.000000e+00> : vector<128x128xf32>
    %28 = tpu.matmul %25, %27, %cst_19 {dimension_numbers = #tpu.dot_dimension_numbers<[1], [0], [0], [1], [0, 0, 1, 1], [], []>} : vector<128x128xbf16>, vector<128x128xbf16>, vector<128x128xf32> -> vector<128x128xf32>
    %29 = arith.addf %20, %28 : vector<128x128xf32>
    %c1_i32 = arith.constant 1 : i32
    %30 = arith.addi %1, %c1_i32 : i32
    %c0_20 = arith.constant 0 : index
    %31 = arith.index_cast %30 : i32 to index
    %c0_21 = arith.constant 0 : index
    %c0_22 = arith.constant 0 : index
    %32 = vector.load %arg2[%c0_20, %31, %c0_21, %c0_22] : memref<1x18x18x128xbf16, #tpu.memory_space<vmem>>, vector<1x8x16x128xbf16>
    %33 = vector.shape_cast %32 : vector<1x8x16x128xbf16> to vector<8x16x128xbf16>
    %34 = vector.shape_cast %33 : vector<8x16x128xbf16> to vector<128x128xbf16>
    %c3 = arith.constant 3 : index
    %c0_23 = arith.constant 0 : index
    %c0_24 = arith.constant 0 : index
    %35 = vector.load %arg3[%c3, %c0_23, %c0_24] : memref<9x128x128xbf16, #tpu.memory_space<vmem>>, vector<1x128x128xbf16>
    %36 = vector.shape_cast %35 : vector<1x128x128xbf16> to vector<128x128xbf16>
    %cst_25 = arith.constant dense<0.000000e+00> : vector<128x128xf32>
    %37 = tpu.matmul %34, %36, %cst_25 {dimension_numbers = #tpu.dot_dimension_numbers<[1], [0], [0], [1], [0, 0, 1, 1], [], []>} : vector<128x128xbf16>, vector<128x128xbf16>, vector<128x128xf32> -> vector<128x128xf32>
    %38 = arith.addf %29, %37 : vector<128x128xf32>
    %c1_i32_26 = arith.constant 1 : i32
    %39 = arith.addi %1, %c1_i32_26 : i32
    %c0_27 = arith.constant 0 : index
    %40 = arith.index_cast %39 : i32 to index
    %c1_28 = arith.constant 1 : index
    %c0_29 = arith.constant 0 : index
    %41 = vector.load %arg2[%c0_27, %40, %c1_28, %c0_29] : memref<1x18x18x128xbf16, #tpu.memory_space<vmem>>, vector<1x8x16x128xbf16>
    %42 = vector.shape_cast %41 : vector<1x8x16x128xbf16> to vector<8x16x128xbf16>
    %43 = vector.shape_cast %42 : vector<8x16x128xbf16> to vector<128x128xbf16>
    %c4 = arith.constant 4 : index
    %c0_30 = arith.constant 0 : index
    %c0_31 = arith.constant 0 : index
    %44 = vector.load %arg3[%c4, %c0_30, %c0_31] : memref<9x128x128xbf16, #tpu.memory_space<vmem>>, vector<1x128x128xbf16>
    %45 = vector.shape_cast %44 : vector<1x128x128xbf16> to vector<128x128xbf16>
    %cst_32 = arith.constant dense<0.000000e+00> : vector<128x128xf32>
    %46 = tpu.matmul %43, %45, %cst_32 {dimension_numbers = #tpu.dot_dimension_numbers<[1], [0], [0], [1], [0, 0, 1, 1], [], []>} : vector<128x128xbf16>, vector<128x128xbf16>, vector<128x128xf32> -> vector<128x128xf32>
    %47 = arith.addf %38, %46 : vector<128x128xf32>
    %c1_i32_33 = arith.constant 1 : i32
    %48 = arith.addi %1, %c1_i32_33 : i32
    %c0_34 = arith.constant 0 : index
    %49 = arith.index_cast %48 : i32 to index
    %c2_35 = arith.constant 2 : index
    %c0_36 = arith.constant 0 : index
    %50 = vector.load %arg2[%c0_34, %49, %c2_35, %c0_36] : memref<1x18x18x128xbf16, #tpu.memory_space<vmem>>, vector<1x8x16x128xbf16>
    %51 = vector.shape_cast %50 : vector<1x8x16x128xbf16> to vector<8x16x128xbf16>
    %52 = vector.shape_cast %51 : vector<8x16x128xbf16> to vector<128x128xbf16>
    %c5 = arith.constant 5 : index
    %c0_37 = arith.constant 0 : index
    %c0_38 = arith.constant 0 : index
    %53 = vector.load %arg3[%c5, %c0_37, %c0_38] : memref<9x128x128xbf16, #tpu.memory_space<vmem>>, vector<1x128x128xbf16>
    %54 = vector.shape_cast %53 : vector<1x128x128xbf16> to vector<128x128xbf16>
    %cst_39 = arith.constant dense<0.000000e+00> : vector<128x128xf32>
    %55 = tpu.matmul %52, %54, %cst_39 {dimension_numbers = #tpu.dot_dimension_numbers<[1], [0], [0], [1], [0, 0, 1, 1], [], []>} : vector<128x128xbf16>, vector<128x128xbf16>, vector<128x128xf32> -> vector<128x128xf32>
    %56 = arith.addf %47, %55 : vector<128x128xf32>
    %c2_i32 = arith.constant 2 : i32
    %57 = arith.addi %1, %c2_i32 : i32
    %c0_40 = arith.constant 0 : index
    %58 = arith.index_cast %57 : i32 to index
    %c0_41 = arith.constant 0 : index
    %c0_42 = arith.constant 0 : index
    %59 = vector.load %arg2[%c0_40, %58, %c0_41, %c0_42] : memref<1x18x18x128xbf16, #tpu.memory_space<vmem>>, vector<1x8x16x128xbf16>
    %60 = vector.shape_cast %59 : vector<1x8x16x128xbf16> to vector<8x16x128xbf16>
    %61 = vector.shape_cast %60 : vector<8x16x128xbf16> to vector<128x128xbf16>
    %c6 = arith.constant 6 : index
    %c0_43 = arith.constant 0 : index
    %c0_44 = arith.constant 0 : index
    %62 = vector.load %arg3[%c6, %c0_43, %c0_44] : memref<9x128x128xbf16, #tpu.memory_space<vmem>>, vector<1x128x128xbf16>
    %63 = vector.shape_cast %62 : vector<1x128x128xbf16> to vector<128x128xbf16>
    %cst_45 = arith.constant dense<0.000000e+00> : vector<128x128xf32>
    %64 = tpu.matmul %61, %63, %cst_45 {dimension_numbers = #tpu.dot_dimension_numbers<[1], [0], [0], [1], [0, 0, 1, 1], [], []>} : vector<128x128xbf16>, vector<128x128xbf16>, vector<128x128xf32> -> vector<128x128xf32>
    %65 = arith.addf %56, %64 : vector<128x128xf32>
    %c2_i32_46 = arith.constant 2 : i32
    %66 = arith.addi %1, %c2_i32_46 : i32
    %c0_47 = arith.constant 0 : index
    %67 = arith.index_cast %66 : i32 to index
    %c1_48 = arith.constant 1 : index
    %c0_49 = arith.constant 0 : index
    %68 = vector.load %arg2[%c0_47, %67, %c1_48, %c0_49] : memref<1x18x18x128xbf16, #tpu.memory_space<vmem>>, vector<1x8x16x128xbf16>
    %69 = vector.shape_cast %68 : vector<1x8x16x128xbf16> to vector<8x16x128xbf16>
    %70 = vector.shape_cast %69 : vector<8x16x128xbf16> to vector<128x128xbf16>
    %c7 = arith.constant 7 : index
    %c0_50 = arith.constant 0 : index
    %c0_51 = arith.constant 0 : index
    %71 = vector.load %arg3[%c7, %c0_50, %c0_51] : memref<9x128x128xbf16, #tpu.memory_space<vmem>>, vector<1x128x128xbf16>
    %72 = vector.shape_cast %71 : vector<1x128x128xbf16> to vector<128x128xbf16>
    %cst_52 = arith.constant dense<0.000000e+00> : vector<128x128xf32>
    %73 = tpu.matmul %70, %72, %cst_52 {dimension_numbers = #tpu.dot_dimension_numbers<[1], [0], [0], [1], [0, 0, 1, 1], [], []>} : vector<128x128xbf16>, vector<128x128xbf16>, vector<128x128xf32> -> vector<128x128xf32>
    %74 = arith.addf %65, %73 : vector<128x128xf32>
    %c2_i32_53 = arith.constant 2 : i32
    %75 = arith.addi %1, %c2_i32_53 : i32
    %c0_54 = arith.constant 0 : index
    %76 = arith.index_cast %75 : i32 to index
    %c2_55 = arith.constant 2 : index
    %c0_56 = arith.constant 0 : index
    %77 = vector.load %arg2[%c0_54, %76, %c2_55, %c0_56] : memref<1x18x18x128xbf16, #tpu.memory_space<vmem>>, vector<1x8x16x128xbf16>
    %78 = vector.shape_cast %77 : vector<1x8x16x128xbf16> to vector<8x16x128xbf16>
    %79 = vector.shape_cast %78 : vector<8x16x128xbf16> to vector<128x128xbf16>
    %c8 = arith.constant 8 : index
    %c0_57 = arith.constant 0 : index
    %c0_58 = arith.constant 0 : index
    %80 = vector.load %arg3[%c8, %c0_57, %c0_58] : memref<9x128x128xbf16, #tpu.memory_space<vmem>>, vector<1x128x128xbf16>
    %81 = vector.shape_cast %80 : vector<1x128x128xbf16> to vector<128x128xbf16>
    %cst_59 = arith.constant dense<0.000000e+00> : vector<128x128xf32>
    %82 = tpu.matmul %79, %81, %cst_59 {dimension_numbers = #tpu.dot_dimension_numbers<[1], [0], [0], [1], [0, 0, 1, 1], [], []>} : vector<128x128xbf16>, vector<128x128xbf16>, vector<128x128xf32> -> vector<128x128xf32>
    %83 = arith.addf %74, %82 : vector<128x128xf32>
    %c0_60 = arith.constant 0 : index
    %c0_61 = arith.constant 0 : index
    %84 = vector.load %arg4[%c0_60, %c0_61] : memref<1x128xf32, #tpu.memory_space<vmem>>, vector<1x128xf32>
    %85 = vector.broadcast %84 : vector<1x128xf32> to vector<128x128xf32>
    %86 = arith.addf %83, %85 : vector<128x128xf32>
    %cst_62 = arith.constant 0.000000e+00 : f32
    %87 = vector.broadcast %cst_62 : f32 to vector<128x128xf32>
    %88 = arith.maximumf %86, %87 : vector<128x128xf32>
    %89 = arith.truncf %88 : vector<128x128xf32> to vector<128x128xbf16>
    %c0_63 = arith.constant 0 : index
    %c0_64 = arith.constant 0 : index
    %90 = vector.load %arg5[%c0_63, %c0_64] : memref<128x128xbf16, #tpu.memory_space<vmem>>, vector<128x128xbf16>
    %cst_65 = arith.constant dense<0.000000e+00> : vector<128x128xf32>
    %91 = tpu.matmul %89, %90, %cst_65 {dimension_numbers = #tpu.dot_dimension_numbers<[1], [0], [0], [1], [0, 0, 1, 1], [], []>} : vector<128x128xbf16>, vector<128x128xbf16>, vector<128x128xf32> -> vector<128x128xf32>
    %c0_66 = arith.constant 0 : index
    %c0_67 = arith.constant 0 : index
    %92 = vector.load %arg6[%c0_66, %c0_67] : memref<1x128xf32, #tpu.memory_space<vmem>>, vector<1x128xf32>
    %93 = vector.broadcast %92 : vector<1x128xf32> to vector<128x128xf32>
    %94 = arith.addf %91, %93 : vector<128x128xf32>
    %c1_i32_68 = arith.constant 1 : i32
    %95 = arith.addi %1, %c1_i32_68 : i32
    %c0_69 = arith.constant 0 : index
    %96 = arith.index_cast %95 : i32 to index
    %c1_70 = arith.constant 1 : index
    %c0_71 = arith.constant 0 : index
    %97 = vector.load %arg2[%c0_69, %96, %c1_70, %c0_71] : memref<1x18x18x128xbf16, #tpu.memory_space<vmem>>, vector<1x8x16x128xbf16>
    %98 = vector.shape_cast %97 : vector<1x8x16x128xbf16> to vector<8x16x128xbf16>
    %99 = vector.shape_cast %98 : vector<8x16x128xbf16> to vector<128x128xbf16>
    %100 = arith.extf %99 : vector<128x128xbf16> to vector<128x128xf32>
    %101 = arith.addf %94, %100 : vector<128x128xf32>
    %cst_72 = arith.constant 0.000000e+00 : f32
    %102 = vector.broadcast %cst_72 : f32 to vector<128x128xf32>
    %103 = arith.maximumf %101, %102 : vector<128x128xf32>
    %104 = vector.shape_cast %103 : vector<128x128xf32> to vector<1x8x16x128xf32>
    %105 = arith.truncf %104 : vector<1x8x16x128xf32> to vector<1x8x16x128xbf16>
    %c0_73 = arith.constant 0 : index
    %c0_74 = arith.constant 0 : index
    %c0_75 = arith.constant 0 : index
    %c0_76 = arith.constant 0 : index
    %106 = vector.load %arg7[%c0_73, %c0_74, %c0_75, %c0_76] : memref<1x8x16x128xbf16, #tpu.memory_space<vmem>>, vector<1x8x16x128xbf16>
    tpu.vector_store %arg7[%c0_73, %c0_74, %c0_75, %c0_76], %105 {strides = array<i32>} : memref<1x8x16x128xbf16, #tpu.memory_space<vmem>>, vector<1x8x16x128xbf16>,
    return
  }
  func.func @transform_0(%arg0: i32, %arg1: i32) -> (i32, i32, i32, i32) {
    %c0_i32 = arith.constant 0 : i32
    %c0_i32_0 = arith.constant 0 : i32
    %c0_i32_1 = arith.constant 0 : i32
    %c0_i32_2 = arith.constant 0 : i32
    return %arg0, %c0_i32, %c0_i32_0, %c0_i32_1 : i32, i32, i32, i32
  }
  func.func @transform_1(%arg0: i32, %arg1: i32) -> (i32, i32, i32) {
    %c0_i32 = arith.constant 0 : i32
    %c0_i32_0 = arith.constant 0 : i32
    %c0_i32_1 = arith.constant 0 : i32
    %c0_i32_2 = arith.constant 0 : i32
    return %c0_i32, %c0_i32_0, %c0_i32_1 : i32, i32, i32
  }
  func.func @transform_2(%arg0: i32, %arg1: i32) -> (i32, i32) {
    %c0_i32 = arith.constant 0 : i32
    %c0_i32_0 = arith.constant 0 : i32
    %c0_i32_1 = arith.constant 0 : i32
    return %c0_i32, %c0_i32_0 : i32, i32
  }
  func.func @transform_3(%arg0: i32, %arg1: i32) -> (i32, i32) {
    %c0_i32 = arith.constant 0 : i32
    %c0_i32_0 = arith.constant 0 : i32
    %c0_i32_1 = arith.constant 0 : i32
    return %c0_i32, %c0_i32_0 : i32, i32
  }
  func.func @transform_4(%arg0: i32, %arg1: i32) -> (i32, i32) {
    %c0_i32 = arith.constant 0 : i32
    %c0_i32_0 = arith.constant 0 : i32
    %c0_i32_1 = arith.constant 0 : i32
    return %c0_i32, %c0_i32_0 : i32, i32
  }
  func.func @transform_5(%arg0: i32, %arg1: i32) -> (i32, i32, i32, i32) {
    %c0_i32 = arith.constant 0 : i32
    %c0_i32_0 = arith.constant 0 : i32
    %c0_i32_1 = arith.constant 0 : i32
    return %arg0, %arg1, %c0_i32, %c0_i32_0 : i32, i32, i32, i32
  }
}

module attributes {stable_mosaic.version = 11 : i64} {
  func.func @_resblock_kernel(%arg0: i32, %arg1: i32, %arg2: memref<1x9x9x128xbf16, #tpu.memory_space<vmem>>, %arg3: memref<1x9x9x128xbf16, #tpu.memory_space<vmem>>, %arg4: memref<1x9x9x128xbf16, #tpu.memory_space<vmem>>, %arg5: memref<1x9x9x128xbf16, #tpu.memory_space<vmem>>, %arg6: memref<9x128x128xbf16, #tpu.memory_space<vmem>>, %arg7: memref<1x128xf32, #tpu.memory_space<vmem>>, %arg8: memref<128x128xbf16, #tpu.memory_space<vmem>>, %arg9: memref<1x128xf32, #tpu.memory_space<vmem>>, %arg10: memref<128x128xbf16, #tpu.memory_space<vmem>>, %arg11: memref<1x128xf32, #tpu.memory_space<vmem>>, %arg12: memref<1x4x8x128xbf16, #tpu.memory_space<vmem>>) attributes {dimension_semantics = [#tpu.dimension_semantics<parallel>, #tpu.dimension_semantics<parallel>], iteration_bounds = array<i64: 2, 2>, scalar_prefetch = 0 : i64, scratch_operands = 0 : i64, tpu.core_type = #tpu.core_type<tc>, window_params = [{transform_indices = @transform_0, window_bounds = array<i64: 1, 9, 9, 128>}, {transform_indices = @transform_1, window_bounds = array<i64: 1, 9, 9, 128>}, {transform_indices = @transform_2, window_bounds = array<i64: 1, 9, 9, 128>}, {transform_indices = @transform_3, window_bounds = array<i64: 1, 9, 9, 128>}, {pipeline_mode = #tpu.pipeline_mode<synchronous>, transform_indices = @transform_4, window_bounds = array<i64: 9, 128, 128>}, {pipeline_mode = #tpu.pipeline_mode<synchronous>, transform_indices = @transform_5, window_bounds = array<i64: 1, 128>}, {pipeline_mode = #tpu.pipeline_mode<synchronous>, transform_indices = @transform_6, window_bounds = array<i64: 128, 128>}, {pipeline_mode = #tpu.pipeline_mode<synchronous>, transform_indices = @transform_7, window_bounds = array<i64: 1, 128>}, {pipeline_mode = #tpu.pipeline_mode<synchronous>, transform_indices = @transform_8, window_bounds = array<i64: 128, 128>}, {pipeline_mode = #tpu.pipeline_mode<synchronous>, transform_indices = @transform_9, window_bounds = array<i64: 1, 128>}, {transform_indices = @transform_10, window_bounds = array<i64: 1, 4, 8, 128>}]} {
    %c4_i32 = arith.constant 4 : i32
    %0 = arith.muli %arg1, %c4_i32 : i32
    %1 = tpu.assume_multiple %0, 4 : i32
    %cst = arith.constant 0.000000e+00 : f32
    %2 = vector.broadcast %cst : f32 to vector<32x128xf32>
    %c0_i32 = arith.constant 0 : i32
    %3 = arith.addi %1, %c0_i32 : i32
    %c0 = arith.constant 0 : index
    %4 = arith.index_cast %3 : i32 to index
    %c0_0 = arith.constant 0 : index
    %c0_1 = arith.constant 0 : index
    %5 = vector.load %arg2[%c0, %4, %c0_0, %c0_1] : memref<1x9x9x128xbf16, #tpu.memory_space<vmem>>, vector<1x4x8x128xbf16>
    %6 = vector.shape_cast %5 : vector<1x4x8x128xbf16> to vector<4x8x128xbf16>
    %7 = vector.shape_cast %6 : vector<4x8x128xbf16> to vector<32x128xbf16>
    %c0_2 = arith.constant 0 : index
    %c0_3 = arith.constant 0 : index
    %c0_4 = arith.constant 0 : index
    %8 = vector.load %arg6[%c0_2, %c0_3, %c0_4] : memref<9x128x128xbf16, #tpu.memory_space<vmem>>, vector<1x128x128xbf16>
    %9 = vector.shape_cast %8 : vector<1x128x128xbf16> to vector<128x128xbf16>
    %cst_5 = arith.constant dense<0.000000e+00> : vector<32x128xf32>
    %10 = tpu.matmul %7, %9, %cst_5 {dimension_numbers = #tpu.dot_dimension_numbers<[1], [0], [0], [1], [0, 0, 1, 1], [], []>} : vector<32x128xbf16>, vector<128x128xbf16>, vector<32x128xf32> -> vector<32x128xf32>
    %11 = arith.addf %2, %10 : vector<32x128xf32>
    %c0_i32_6 = arith.constant 0 : i32
    %12 = arith.addi %1, %c0_i32_6 : i32
    %c0_7 = arith.constant 0 : index
    %13 = arith.index_cast %12 : i32 to index
    %c0_8 = arith.constant 0 : index
    %c0_9 = arith.constant 0 : index
    %14 = vector.load %arg3[%c0_7, %13, %c0_8, %c0_9] : memref<1x9x9x128xbf16, #tpu.memory_space<vmem>>, vector<1x4x8x128xbf16>
    %15 = vector.shape_cast %14 : vector<1x4x8x128xbf16> to vector<4x8x128xbf16>
    %16 = vector.shape_cast %15 : vector<4x8x128xbf16> to vector<32x128xbf16>
    %c1 = arith.constant 1 : index
    %c0_10 = arith.constant 0 : index
    %c0_11 = arith.constant 0 : index
    %17 = vector.load %arg6[%c1, %c0_10, %c0_11] : memref<9x128x128xbf16, #tpu.memory_space<vmem>>, vector<1x128x128xbf16>
    %18 = vector.shape_cast %17 : vector<1x128x128xbf16> to vector<128x128xbf16>
    %cst_12 = arith.constant dense<0.000000e+00> : vector<32x128xf32>
    %19 = tpu.matmul %16, %18, %cst_12 {dimension_numbers = #tpu.dot_dimension_numbers<[1], [0], [0], [1], [0, 0, 1, 1], [], []>} : vector<32x128xbf16>, vector<128x128xbf16>, vector<32x128xf32> -> vector<32x128xf32>
    %20 = arith.addf %11, %19 : vector<32x128xf32>
    %c0_i32_13 = arith.constant 0 : i32
    %21 = arith.addi %1, %c0_i32_13 : i32
    %c0_14 = arith.constant 0 : index
    %22 = arith.index_cast %21 : i32 to index
    %c1_15 = arith.constant 1 : index
    %c0_16 = arith.constant 0 : index
    %23 = vector.load %arg2[%c0_14, %22, %c1_15, %c0_16] : memref<1x9x9x128xbf16, #tpu.memory_space<vmem>>, vector<1x4x8x128xbf16>
    %24 = vector.shape_cast %23 : vector<1x4x8x128xbf16> to vector<4x8x128xbf16>
    %25 = vector.shape_cast %24 : vector<4x8x128xbf16> to vector<32x128xbf16>
    %c2 = arith.constant 2 : index
    %c0_17 = arith.constant 0 : index
    %c0_18 = arith.constant 0 : index
    %26 = vector.load %arg6[%c2, %c0_17, %c0_18] : memref<9x128x128xbf16, #tpu.memory_space<vmem>>, vector<1x128x128xbf16>
    %27 = vector.shape_cast %26 : vector<1x128x128xbf16> to vector<128x128xbf16>
    %cst_19 = arith.constant dense<0.000000e+00> : vector<32x128xf32>
    %28 = tpu.matmul %25, %27, %cst_19 {dimension_numbers = #tpu.dot_dimension_numbers<[1], [0], [0], [1], [0, 0, 1, 1], [], []>} : vector<32x128xbf16>, vector<128x128xbf16>, vector<32x128xf32> -> vector<32x128xf32>
    %29 = arith.addf %20, %28 : vector<32x128xf32>
    %c0_i32_20 = arith.constant 0 : i32
    %30 = arith.addi %1, %c0_i32_20 : i32
    %c0_21 = arith.constant 0 : index
    %31 = arith.index_cast %30 : i32 to index
    %c0_22 = arith.constant 0 : index
    %c0_23 = arith.constant 0 : index
    %32 = vector.load %arg4[%c0_21, %31, %c0_22, %c0_23] : memref<1x9x9x128xbf16, #tpu.memory_space<vmem>>, vector<1x4x8x128xbf16>
    %33 = vector.shape_cast %32 : vector<1x4x8x128xbf16> to vector<4x8x128xbf16>
    %34 = vector.shape_cast %33 : vector<4x8x128xbf16> to vector<32x128xbf16>
    %c3 = arith.constant 3 : index
    %c0_24 = arith.constant 0 : index
    %c0_25 = arith.constant 0 : index
    %35 = vector.load %arg6[%c3, %c0_24, %c0_25] : memref<9x128x128xbf16, #tpu.memory_space<vmem>>, vector<1x128x128xbf16>
    %36 = vector.shape_cast %35 : vector<1x128x128xbf16> to vector<128x128xbf16>
    %cst_26 = arith.constant dense<0.000000e+00> : vector<32x128xf32>
    %37 = tpu.matmul %34, %36, %cst_26 {dimension_numbers = #tpu.dot_dimension_numbers<[1], [0], [0], [1], [0, 0, 1, 1], [], []>} : vector<32x128xbf16>, vector<128x128xbf16>, vector<32x128xf32> -> vector<32x128xf32>
    %38 = arith.addf %29, %37 : vector<32x128xf32>
    %c0_i32_27 = arith.constant 0 : i32
    %39 = arith.addi %1, %c0_i32_27 : i32
    %c0_28 = arith.constant 0 : index
    %40 = arith.index_cast %39 : i32 to index
    %c0_29 = arith.constant 0 : index
    %c0_30 = arith.constant 0 : index
    %41 = vector.load %arg5[%c0_28, %40, %c0_29, %c0_30] : memref<1x9x9x128xbf16, #tpu.memory_space<vmem>>, vector<1x4x8x128xbf16>
    %42 = vector.shape_cast %41 : vector<1x4x8x128xbf16> to vector<4x8x128xbf16>
    %43 = vector.shape_cast %42 : vector<4x8x128xbf16> to vector<32x128xbf16>
    %c4 = arith.constant 4 : index
    %c0_31 = arith.constant 0 : index
    %c0_32 = arith.constant 0 : index
    %44 = vector.load %arg6[%c4, %c0_31, %c0_32] : memref<9x128x128xbf16, #tpu.memory_space<vmem>>, vector<1x128x128xbf16>
    %45 = vector.shape_cast %44 : vector<1x128x128xbf16> to vector<128x128xbf16>
    %cst_33 = arith.constant dense<0.000000e+00> : vector<32x128xf32>
    %46 = tpu.matmul %43, %45, %cst_33 {dimension_numbers = #tpu.dot_dimension_numbers<[1], [0], [0], [1], [0, 0, 1, 1], [], []>} : vector<32x128xbf16>, vector<128x128xbf16>, vector<32x128xf32> -> vector<32x128xf32>
    %47 = arith.addf %38, %46 : vector<32x128xf32>
    %c0_i32_34 = arith.constant 0 : i32
    %48 = arith.addi %1, %c0_i32_34 : i32
    %c0_35 = arith.constant 0 : index
    %49 = arith.index_cast %48 : i32 to index
    %c1_36 = arith.constant 1 : index
    %c0_37 = arith.constant 0 : index
    %50 = vector.load %arg4[%c0_35, %49, %c1_36, %c0_37] : memref<1x9x9x128xbf16, #tpu.memory_space<vmem>>, vector<1x4x8x128xbf16>
    %51 = vector.shape_cast %50 : vector<1x4x8x128xbf16> to vector<4x8x128xbf16>
    %52 = vector.shape_cast %51 : vector<4x8x128xbf16> to vector<32x128xbf16>
    %c5 = arith.constant 5 : index
    %c0_38 = arith.constant 0 : index
    %c0_39 = arith.constant 0 : index
    %53 = vector.load %arg6[%c5, %c0_38, %c0_39] : memref<9x128x128xbf16, #tpu.memory_space<vmem>>, vector<1x128x128xbf16>
    %54 = vector.shape_cast %53 : vector<1x128x128xbf16> to vector<128x128xbf16>
    %cst_40 = arith.constant dense<0.000000e+00> : vector<32x128xf32>
    %55 = tpu.matmul %52, %54, %cst_40 {dimension_numbers = #tpu.dot_dimension_numbers<[1], [0], [0], [1], [0, 0, 1, 1], [], []>} : vector<32x128xbf16>, vector<128x128xbf16>, vector<32x128xf32> -> vector<32x128xf32>
    %56 = arith.addf %47, %55 : vector<32x128xf32>
    %c1_i32 = arith.constant 1 : i32
    %57 = arith.addi %1, %c1_i32 : i32
    %c0_41 = arith.constant 0 : index
    %58 = arith.index_cast %57 : i32 to index
    %c0_42 = arith.constant 0 : index
    %c0_43 = arith.constant 0 : index
    %59 = vector.load %arg2[%c0_41, %58, %c0_42, %c0_43] : memref<1x9x9x128xbf16, #tpu.memory_space<vmem>>, vector<1x4x8x128xbf16>
    %60 = vector.shape_cast %59 : vector<1x4x8x128xbf16> to vector<4x8x128xbf16>
    %61 = vector.shape_cast %60 : vector<4x8x128xbf16> to vector<32x128xbf16>
    %c6 = arith.constant 6 : index
    %c0_44 = arith.constant 0 : index
    %c0_45 = arith.constant 0 : index
    %62 = vector.load %arg6[%c6, %c0_44, %c0_45] : memref<9x128x128xbf16, #tpu.memory_space<vmem>>, vector<1x128x128xbf16>
    %63 = vector.shape_cast %62 : vector<1x128x128xbf16> to vector<128x128xbf16>
    %cst_46 = arith.constant dense<0.000000e+00> : vector<32x128xf32>
    %64 = tpu.matmul %61, %63, %cst_46 {dimension_numbers = #tpu.dot_dimension_numbers<[1], [0], [0], [1], [0, 0, 1, 1], [], []>} : vector<32x128xbf16>, vector<128x128xbf16>, vector<32x128xf32> -> vector<32x128xf32>
    %65 = arith.addf %56, %64 : vector<32x128xf32>
    %c1_i32_47 = arith.constant 1 : i32
    %66 = arith.addi %1, %c1_i32_47 : i32
    %c0_48 = arith.constant 0 : index
    %67 = arith.index_cast %66 : i32 to index
    %c0_49 = arith.constant 0 : index
    %c0_50 = arith.constant 0 : index
    %68 = vector.load %arg3[%c0_48, %67, %c0_49, %c0_50] : memref<1x9x9x128xbf16, #tpu.memory_space<vmem>>, vector<1x4x8x128xbf16>
    %69 = vector.shape_cast %68 : vector<1x4x8x128xbf16> to vector<4x8x128xbf16>
    %70 = vector.shape_cast %69 : vector<4x8x128xbf16> to vector<32x128xbf16>
    %c7 = arith.constant 7 : index
    %c0_51 = arith.constant 0 : index
    %c0_52 = arith.constant 0 : index
    %71 = vector.load %arg6[%c7, %c0_51, %c0_52] : memref<9x128x128xbf16, #tpu.memory_space<vmem>>, vector<1x128x128xbf16>
    %72 = vector.shape_cast %71 : vector<1x128x128xbf16> to vector<128x128xbf16>
    %cst_53 = arith.constant dense<0.000000e+00> : vector<32x128xf32>
    %73 = tpu.matmul %70, %72, %cst_53 {dimension_numbers = #tpu.dot_dimension_numbers<[1], [0], [0], [1], [0, 0, 1, 1], [], []>} : vector<32x128xbf16>, vector<128x128xbf16>, vector<32x128xf32> -> vector<32x128xf32>
    %74 = arith.addf %65, %73 : vector<32x128xf32>
    %c1_i32_54 = arith.constant 1 : i32
    %75 = arith.addi %1, %c1_i32_54 : i32
    %c0_55 = arith.constant 0 : index
    %76 = arith.index_cast %75 : i32 to index
    %c1_56 = arith.constant 1 : index
    %c0_57 = arith.constant 0 : index
    %77 = vector.load %arg2[%c0_55, %76, %c1_56, %c0_57] : memref<1x9x9x128xbf16, #tpu.memory_space<vmem>>, vector<1x4x8x128xbf16>
    %78 = vector.shape_cast %77 : vector<1x4x8x128xbf16> to vector<4x8x128xbf16>
    %79 = vector.shape_cast %78 : vector<4x8x128xbf16> to vector<32x128xbf16>
    %c8 = arith.constant 8 : index
    %c0_58 = arith.constant 0 : index
    %c0_59 = arith.constant 0 : index
    %80 = vector.load %arg6[%c8, %c0_58, %c0_59] : memref<9x128x128xbf16, #tpu.memory_space<vmem>>, vector<1x128x128xbf16>
    %81 = vector.shape_cast %80 : vector<1x128x128xbf16> to vector<128x128xbf16>
    %cst_60 = arith.constant dense<0.000000e+00> : vector<32x128xf32>
    %82 = tpu.matmul %79, %81, %cst_60 {dimension_numbers = #tpu.dot_dimension_numbers<[1], [0], [0], [1], [0, 0, 1, 1], [], []>} : vector<32x128xbf16>, vector<128x128xbf16>, vector<32x128xf32> -> vector<32x128xf32>
    %83 = arith.addf %74, %82 : vector<32x128xf32>
    %c0_61 = arith.constant 0 : index
    %c0_62 = arith.constant 0 : index
    %84 = vector.load %arg7[%c0_61, %c0_62] : memref<1x128xf32, #tpu.memory_space<vmem>>, vector<1x128xf32>
    %85 = vector.broadcast %84 : vector<1x128xf32> to vector<32x128xf32>
    %86 = arith.addf %83, %85 : vector<32x128xf32>
    %cst_63 = arith.constant 0.000000e+00 : f32
    %87 = vector.broadcast %cst_63 : f32 to vector<32x128xf32>
    %88 = arith.maximumf %86, %87 : vector<32x128xf32>
    %89 = arith.truncf %88 : vector<32x128xf32> to vector<32x128xbf16>
    %c0_64 = arith.constant 0 : index
    %c0_65 = arith.constant 0 : index
    %90 = vector.load %arg8[%c0_64, %c0_65] : memref<128x128xbf16, #tpu.memory_space<vmem>>, vector<128x128xbf16>
    %cst_66 = arith.constant dense<0.000000e+00> : vector<32x128xf32>
    %91 = tpu.matmul %89, %90, %cst_66 {dimension_numbers = #tpu.dot_dimension_numbers<[1], [0], [0], [1], [0, 0, 1, 1], [], []>} : vector<32x128xbf16>, vector<128x128xbf16>, vector<32x128xf32> -> vector<32x128xf32>
    %c0_67 = arith.constant 0 : index
    %c0_68 = arith.constant 0 : index
    %92 = vector.load %arg9[%c0_67, %c0_68] : memref<1x128xf32, #tpu.memory_space<vmem>>, vector<1x128xf32>
    %93 = vector.broadcast %92 : vector<1x128xf32> to vector<32x128xf32>
    %94 = arith.addf %91, %93 : vector<32x128xf32>
    %c0_i32_69 = arith.constant 0 : i32
    %95 = arith.addi %1, %c0_i32_69 : i32
    %c0_70 = arith.constant 0 : index
    %96 = arith.index_cast %95 : i32 to index
    %c0_71 = arith.constant 0 : index
    %c0_72 = arith.constant 0 : index
    %97 = vector.load %arg5[%c0_70, %96, %c0_71, %c0_72] : memref<1x9x9x128xbf16, #tpu.memory_space<vmem>>, vector<1x4x8x128xbf16>
    %98 = vector.shape_cast %97 : vector<1x4x8x128xbf16> to vector<4x8x128xbf16>
    %99 = vector.shape_cast %98 : vector<4x8x128xbf16> to vector<32x128xbf16>
    %c0_73 = arith.constant 0 : index
    %c0_74 = arith.constant 0 : index
    %100 = vector.load %arg10[%c0_73, %c0_74] : memref<128x128xbf16, #tpu.memory_space<vmem>>, vector<128x128xbf16>
    %cst_75 = arith.constant dense<0.000000e+00> : vector<32x128xf32>
    %101 = tpu.matmul %99, %100, %cst_75 {dimension_numbers = #tpu.dot_dimension_numbers<[1], [0], [0], [1], [0, 0, 1, 1], [], []>} : vector<32x128xbf16>, vector<128x128xbf16>, vector<32x128xf32> -> vector<32x128xf32>
    %102 = arith.addf %94, %101 : vector<32x128xf32>
    %c0_76 = arith.constant 0 : index
    %c0_77 = arith.constant 0 : index
    %103 = vector.load %arg11[%c0_76, %c0_77] : memref<1x128xf32, #tpu.memory_space<vmem>>, vector<1x128xf32>
    %104 = vector.broadcast %103 : vector<1x128xf32> to vector<32x128xf32>
    %105 = arith.addf %102, %104 : vector<32x128xf32>
    %cst_78 = arith.constant 0.000000e+00 : f32
    %106 = vector.broadcast %cst_78 : f32 to vector<32x128xf32>
    %107 = arith.maximumf %105, %106 : vector<32x128xf32>
    %108 = vector.shape_cast %107 : vector<32x128xf32> to vector<1x4x8x128xf32>
    %109 = arith.truncf %108 : vector<1x4x8x128xf32> to vector<1x4x8x128xbf16>
    %c0_79 = arith.constant 0 : index
    %c0_80 = arith.constant 0 : index
    %c0_81 = arith.constant 0 : index
    %c0_82 = arith.constant 0 : index
    %110 = vector.load %arg12[%c0_79, %c0_80, %c0_81, %c0_82] : memref<1x4x8x128xbf16, #tpu.memory_space<vmem>>, vector<1x4x8x128xbf16>
    tpu.vector_store %arg12[%c0_79, %c0_80, %c0_81, %c0_82], %109 {strides = array<i32>} : memref<1x4x8x128xbf16, #tpu.memory_space<vmem>>, vector<1x4x8x128xbf16>,
    return
  }
  func.func @transform_0(%arg0: i32, %arg1: i32) -> (i32, i32, i32, i32) {
    %c0_i32 = arith.constant 0 : i32
    %c0_i32_0 = arith.constant 0 : i32
    %c0_i32_1 = arith.constant 0 : i32
    %c0_i32_2 = arith.constant 0 : i32
    return %arg0, %c0_i32, %c0_i32_0, %c0_i32_1 : i32, i32, i32, i32
  }
  func.func @transform_1(%arg0: i32, %arg1: i32) -> (i32, i32, i32, i32) {
    %c0_i32 = arith.constant 0 : i32
    %c0_i32_0 = arith.constant 0 : i32
    %c0_i32_1 = arith.constant 0 : i32
    %c0_i32_2 = arith.constant 0 : i32
    return %arg0, %c0_i32, %c0_i32_0, %c0_i32_1 : i32, i32, i32, i32
  }
  func.func @transform_2(%arg0: i32, %arg1: i32) -> (i32, i32, i32, i32) {
    %c0_i32 = arith.constant 0 : i32
    %c0_i32_0 = arith.constant 0 : i32
    %c0_i32_1 = arith.constant 0 : i32
    %c0_i32_2 = arith.constant 0 : i32
    return %arg0, %c0_i32, %c0_i32_0, %c0_i32_1 : i32, i32, i32, i32
  }
  func.func @transform_3(%arg0: i32, %arg1: i32) -> (i32, i32, i32, i32) {
    %c0_i32 = arith.constant 0 : i32
    %c0_i32_0 = arith.constant 0 : i32
    %c0_i32_1 = arith.constant 0 : i32
    %c0_i32_2 = arith.constant 0 : i32
    return %arg0, %c0_i32, %c0_i32_0, %c0_i32_1 : i32, i32, i32, i32
  }
  func.func @transform_4(%arg0: i32, %arg1: i32) -> (i32, i32, i32) {
    %c0_i32 = arith.constant 0 : i32
    %c0_i32_0 = arith.constant 0 : i32
    %c0_i32_1 = arith.constant 0 : i32
    %c0_i32_2 = arith.constant 0 : i32
    return %c0_i32, %c0_i32_0, %c0_i32_1 : i32, i32, i32
  }
  func.func @transform_5(%arg0: i32, %arg1: i32) -> (i32, i32) {
    %c0_i32 = arith.constant 0 : i32
    %c0_i32_0 = arith.constant 0 : i32
    %c0_i32_1 = arith.constant 0 : i32
    return %c0_i32, %c0_i32_0 : i32, i32
  }
  func.func @transform_6(%arg0: i32, %arg1: i32) -> (i32, i32) {
    %c0_i32 = arith.constant 0 : i32
    %c0_i32_0 = arith.constant 0 : i32
    %c0_i32_1 = arith.constant 0 : i32
    return %c0_i32, %c0_i32_0 : i32, i32
  }
  func.func @transform_7(%arg0: i32, %arg1: i32) -> (i32, i32) {
    %c0_i32 = arith.constant 0 : i32
    %c0_i32_0 = arith.constant 0 : i32
    %c0_i32_1 = arith.constant 0 : i32
    return %c0_i32, %c0_i32_0 : i32, i32
  }
  func.func @transform_8(%arg0: i32, %arg1: i32) -> (i32, i32) {
    %c0_i32 = arith.constant 0 : i32
    %c0_i32_0 = arith.constant 0 : i32
    %c0_i32_1 = arith.constant 0 : i32
    return %c0_i32, %c0_i32_0 : i32, i32
  }
  func.func @transform_9(%arg0: i32, %arg1: i32) -> (i32, i32) {
    %c0_i32 = arith.constant 0 : i32
    %c0_i32_0 = arith.constant 0 : i32
    %c0_i32_1 = arith.constant 0 : i32
    return %c0_i32, %c0_i32_0 : i32, i32
  }
  func.func @transform_10(%arg0: i32, %arg1: i32) -> (i32, i32, i32, i32) {
    %c0_i32 = arith.constant 0 : i32
    %c0_i32_0 = arith.constant 0 : i32
    %c0_i32_1 = arith.constant 0 : i32
    return %arg0, %arg1, %c0_i32, %c0_i32_0 : i32, i32, i32, i32
  }
}

module attributes {stable_mosaic.version = 11 : i64} {
  func.func @_head_kernel(%arg0: memref<2x64x128xbf16, #tpu.memory_space<vmem>>, %arg1: memref<128x128xf32, #tpu.memory_space<vmem>>, %arg2: memref<1x128xf32, #tpu.memory_space<vmem>>, %arg3: memref<2x128xf32, #tpu.memory_space<vmem>>) attributes {dimension_semantics = [], scalar_prefetch = 0 : i64, scratch_operands = 0 : i64, tpu.core_type = #tpu.core_type<tc>} {
    %c0 = arith.constant 0 : index
    %c0_0 = arith.constant 0 : index
    %c0_1 = arith.constant 0 : index
    %0 = vector.load %arg0[%c0, %c0_0, %c0_1] : memref<2x64x128xbf16, #tpu.memory_space<vmem>>, vector<2x64x128xbf16>
    %1 = arith.extf %0 : vector<2x64x128xbf16> to vector<2x64x128xf32>
    %cst = arith.constant dense<0.000000e+00> : vector<2x128xf32>
    %2 = vector.multi_reduction <add>, %1, %cst [1] : vector<2x64x128xf32> to vector<2x128xf32>
    %cst_2 = arith.constant 6.400000e+01 : f32
    %3 = vector.broadcast %cst_2 : f32 to vector<2x128xf32>
    %4 = arith.divf %2, %3 : vector<2x128xf32>
    %c0_3 = arith.constant 0 : index
    %c0_4 = arith.constant 0 : index
    %5 = vector.load %arg1[%c0_3, %c0_4] : memref<128x128xf32, #tpu.memory_space<vmem>>, vector<128x128xf32>
    %cst_5 = arith.constant dense<0.000000e+00> : vector<2x128xf32>
    %6 = tpu.matmul %4, %5, %cst_5 {dimension_numbers = #tpu.dot_dimension_numbers<[1], [0], [0], [1], [0, 0, 1, 1], [], []>} : vector<2x128xf32>, vector<128x128xf32>, vector<2x128xf32> -> vector<2x128xf32>
    %c0_6 = arith.constant 0 : index
    %c0_7 = arith.constant 0 : index
    %7 = vector.load %arg2[%c0_6, %c0_7] : memref<1x128xf32, #tpu.memory_space<vmem>>, vector<1x128xf32>
    %8 = vector.broadcast %7 : vector<1x128xf32> to vector<2x128xf32>
    %9 = arith.addf %6, %8 : vector<2x128xf32>
    %c0_8 = arith.constant 0 : index
    %c0_9 = arith.constant 0 : index
    %10 = vector.load %arg3[%c0_8, %c0_9] : memref<2x128xf32, #tpu.memory_space<vmem>>, vector<2x128xf32>
    tpu.vector_store %arg3[%c0_8, %c0_9], %9 {strides = array<i32>} : memref<2x128xf32, #tpu.memory_space<vmem>>, vector<2x128xf32>,
    return
  }
}

</mosaic_0001>

<llo_original>
// kernel: _lambda_.4
$region0: #{_lambda_.4}
  #allocation0 [shape = 'u32[]', space=smem, size = 0x4, offset = 0x4, fixed_abs, tag = 'smem constant byte address 0x4 - core index']
  #allocation1 [shape = 'u32[144,128]{1,0:T(1,128)}', space=vmem, size = 0x12000, scoped, tag = 'internal scratch']
  %s0 = inlined_call_operand.vmem [shape: bf16[512,128], index: 0, kind: input, shape index: {}]
  %s1 = inlined_call_operand.vmem [shape: bf16[128,128], index: 1, kind: input, shape index: {}]
  %s2 = inlined_call_operand.vmem [shape: f32[1,128], index: 2, kind: input, shape index: {}]
  %s3 = inlined_call_operand.vmem [shape: bf16[512,128], index: 3, kind: output, shape index: {}]
  %s4 = sld [smem:[#allocation0]]
  $region45: #{_lambda_.4} parent=0
    _
  %s6 = ssub.s32 1, %s4
  %s7 = scalar_select 0, %s6, %s4
  loop: start=0, step=1, limit=6
  $region2: #{_lambda_.4} parent=0 // loop_pre_header
    _
  $region3: #{_lambda_.4} parent=0 // loop_header
    %s9 = sphi 0, %s13
    %p10 = scmp.ge.s32.totalorder %s9, 6
    %s19 = sphi 0, %s21
    %s22 = sphi 0, %s19
    %s23 = sphi 0, %s22
    %s39 = sphi 0, %s23
    %s43 = sphi 0, %s43
    %s45 = sphi 0, %s43
    %s46 = sphi 0, %s45
    %s60 = sphi 0, %s46
    %s64 = sphi 0, %s64
    %s66 = sphi 0, %s64
    %s67 = sphi 0, %s66
    %s81 = sphi 0, %s67
    %s87 = sphi 0, %s89
    %s90 = sphi 0, %s87
    %s91 = sphi 0, %s90
    %s107 = sphi 0, %s91
  $region4: #{_lambda_.4} parent=0 // loop_header_branch
    %12 = sbr.rel (%p10) target = $region8
  $region5: #{_lambda_.4} parent=0 // loop_body
    %s14 = ssub.s32 %s9, 1
    %s15 = ssub.s32 %s9, 2
    %s16 = sadd.s32 %s9, 1
    %s17 = ssub.s32 %s9, %s16
    %p18 = scmp.eq.s32.totalorder %s17, 0
    %s20 = sadd.s32 %s19, 1
    %s21 = scalar_select %p18, %s19, %s20
    %p24 = pneg %p18
    %p25 = scmp.eq.s32.totalorder %s9, 3
    %p26 = por %p24, %p25
    %p27 = scmp.ne.s32.totalorder %s19, %s22
    %p28 = scmp.eq.s32.totalorder %s9, 0
    %p29 = por %p27, %p28
    %p30 = scmp.ne.s32.totalorder %s19, %s22
    %p31 = scmp.eq.s32.totalorder %s14, 3
    %p32 = por %p30, %p31
    %p33 = scmp.ne.s32.totalorder %s22, %s23
    %p34 = scmp.eq.s32.totalorder %s14, 0
    %p35 = por %p33, %p34
    %p36 = scmp.ne.s32.totalorder %s22, %s23
    %p37 = scmp.eq.s32.totalorder %s15, 3
    %p38 = por %p36, %p37
    %p40 = scmp.ne.s32.totalorder %s23, %s39
    %p41 = scmp.eq.s32.totalorder %s15, 0
    %p42 = por %p40, %p41
    %s44 = sadd.s32 %s43, 1
    %p47 = scmp.eq.s32.totalorder %s9, 3
    %p48 = scmp.ne.s32.totalorder %s43, %s45
    %p49 = scmp.eq.s32.totalorder %s9, 0
    %p50 = por %p48, %p49
    %p51 = scmp.ne.s32.totalorder %s43, %s45
    %p52 = scmp.eq.s32.totalorder %s14, 3
    %p53 = por %p51, %p52
    %p54 = scmp.ne.s32.totalorder %s45, %s46
    %p55 = scmp.eq.s32.totalorder %s14, 0
    %p56 = por %p54, %p55
    %p57 = scmp.ne.s32.totalorder %s45, %s46
    %p58 = scmp.eq.s32.totalorder %s15, 3
    %p59 = por %p57, %p58
    %p61 = scmp.ne.s32.totalorder %s46, %s60
    %p62 = scmp.eq.s32.totalorder %s15, 0
    %p63 = por %p61, %p62
    %s65 = sadd.s32 %s64, 1
    %p68 = scmp.eq.s32.totalorder %s9, 3
    %p69 = scmp.ne.s32.totalorder %s64, %s66
    %p70 = scmp.eq.s32.totalorder %s9, 0
    %p71 = por %p69, %p70
    %p72 = scmp.ne.s32.totalorder %s64, %s66
    %p73 = scmp.eq.s32.totalorder %s14, 3
    %p74 = por %p72, %p73
    %p75 = scmp.ne.s32.totalorder %s66, %s67
    %p76 = scmp.eq.s32.totalorder %s14, 0
    %p77 = por %p75, %p76
    %p78 = scmp.ne.s32.totalorder %s66, %s67
    %p79 = scmp.eq.s32.totalorder %s15, 3
    %p80 = por %p78, %p79
    %p82 = scmp.ne.s32.totalorder %s67, %s81
    %p83 = scmp.eq.s32.totalorder %s15, 0
    %p84 = por %p82, %p83
    %s85 = ssub.s32 %s9, %s16
    %p86 = scmp.eq.s32.totalorder %s85, 0
    %s88 = sadd.s32 %s87, 1
    %s89 = scalar_select %p86, %s87, %s88
    %p92 = pneg %p86
    %p93 = scmp.eq.s32.totalorder %s9, 3
    %p94 = por %p92, %p93
    %p95 = scmp.ne.s32.totalorder %s87, %s90
    %p96 = scmp.eq.s32.totalorder %s9, 0
    %p97 = por %p95, %p96
    %p98 = scmp.ne.s32.totalorder %s87, %s90
    %p99 = scmp.eq.s32.totalorder %s14, 3
    %p100 = por %p98, %p99
    %p101 = scmp.ne.s32.totalorder %s90, %s91
    %p102 = scmp.eq.s32.totalorder %s14, 0
    %p103 = por %p101, %p102
    %p104 = scmp.ne.s32.totalorder %s90, %s91
    %p105 = scmp.eq.s32.totalorder %s15, 3
    %p106 = por %p104, %p105
    %p108 = scmp.ne.s32.totalorder %s91, %s107
    %p109 = scmp.eq.s32.totalorder %s15, 0
    %p110 = por %p108, %p109
    %p111 = scmp.le.s32.totalorder 1, %s9
    %p112 = scmp.lt.s32.totalorder %s9, 5
    %p113 = pnand %p111, %p112
    %p114 = pneg %p113
    // Predicated region
    $region9: #{_lambda_.4} parent=5 // pred_check
      _
    $region10: #{_lambda_.4} parent=5 // pred_check_branch
      %116 = sbr.rel (%p113) target = $region12
    $region11: #{_lambda_.4} parent=5 // pred_region
      %s117 = ssub.s32 %s9, 1
      // Predicated region
      $region13: #{_lambda_.4} parent=11 // pred_check
        %p118 = pneg %p56
      $region14: #{_lambda_.4} parent=11 // pred_check_branch
        %120 = sbr.rel (%p118) target = $region16
      $region15: #{_lambda_.4} parent=11 // pred_region
        _
      $region16: #{_lambda_.4} parent=11 // pred_fallthru
        _
      // Predicated region
      $region17: #{_lambda_.4} parent=11 // pred_check
        %p121 = pneg %p77
      $region18: #{_lambda_.4} parent=11 // pred_check_branch
        %123 = sbr.rel (%p121) target = $region20
      $region19: #{_lambda_.4} parent=11 // pred_region
        _
      $region20: #{_lambda_.4} parent=11 // pred_fallthru
        _
    $region12: #{_lambda_.4} parent=5 // pred_fallthru
      _
    %p124 = scmp.lt.s32.totalorder %s9, 4
    // Predicated region
    $region21: #{_lambda_.4} parent=5 // pred_check
      %p125 = pneg %p124
    $region22: #{_lambda_.4} parent=5 // pred_check_branch
      %127 = sbr.rel (%p125) target = $region24
    $region23: #{_lambda_.4} parent=5 // pred_region
      // Predicated region
      $region25: #{_lambda_.4} parent=23 // pred_check
        %p128 = pneg %p29
      $region26: #{_lambda_.4} parent=23 // pred_check_branch
        %130 = sbr.rel (%p128) target = $region28
      $region27: #{_lambda_.4} parent=23 // pred_region
        %s131 = smul.u32 16, %s9
        %p132 = scmp.lt.s32.totalorder %s131, 63
        %s133 = scalar_select %p132, %s131, 63
        %s134 = smul.addr %s133, 4
        %s135 = scalar_lea.vmem %s0, %s134
        %s136 = smul.u32 16, %s9
      $region28: #{_lambda_.4} parent=23 // pred_fallthru
        _
    $region24: #{_lambda_.4} parent=5 // pred_fallthru
      _
    %p137 = scmp.le.s32.totalorder 1, %s9
    %p138 = scmp.lt.s32.totalorder %s9, 5
    %p139 = pnand %p137, %p138
    %p140 = pneg %p139
    // Predicated region
    $region29: #{_lambda_.4} parent=5 // pred_check
      _
    $region30: #{_lambda_.4} parent=5 // pred_check_branch
      %142 = sbr.rel (%p139) target = $region32
    $region31: #{_lambda_.4} parent=5 // pred_region
      %s143 = ssub.s32 %s9, 1
      %s144 = smul.u32 16, %s14
      %p145 = scmp.lt.s32.totalorder %s144, 63
      %s146 = scalar_select %p145, %s144, 63
      %s147 = smul.addr %s146, 4
      %s148 = scalar_lea.vmem %s0, %s147
      %p149 = pneg %p35
      %p150 = pneg %p32
      %p151 = pneg %p56
      %p152 = pneg %p53
      %p153 = pneg %p77
      %p154 = pneg %p74
      %p155 = pneg %p103
      %p156 = pneg %p100
      %s157 = smul.u32 16, %s14
      %p158 = scmp.lt.s32.totalorder %s157, 63
      %s159 = scalar_select %p158, %s157, 63
      %s160 = smul.addr %s159, 4
      %s161 = scalar_lea.vmem %s3, %s160
      %s162 = smul.u32 16, %s14
      %p163 = scmp.lt.s32.totalorder %s162, 63
      %s164 = scalar_select %p163, %s162, 63
      %s165 = smul.addr %s164, 4
      %s166 = scalar_lea.vmem %s0, %s165
      %s167 = smul.u32 16, %s14
      %s168 = smul.u32 16, %s14
      %p169 = scmp.lt.s32.totalorder %s168, 63
      %s170 = scalar_select %p169, %s168, 63
      %s171 = smul.addr %s170, 4
      %s172 = scalar_lea.vmem %s3, %s171
      %s173 = smul.u32 16, %s14
      %v175 = vld [vmem:[%s166] sm:$0xf]
      %v176 = vld [vmem:[%s166 + $0x4] sm:$0xf]
      %v177 = vld [vmem:[%s166 + $0x8] sm:$0xf]
      %v178 = vld [vmem:[%s166 + $0xc] sm:$0xf]
      %v179 = vld [vmem:[%s166 + $0x10] sm:$0xf]
      %v180 = vld [vmem:[%s166 + $0x14] sm:$0xf]
      %v181 = vld [vmem:[%s166 + $0x18] sm:$0xf]
      %v182 = vld [vmem:[%s166 + $0x1c] sm:$0xf]
      %v183 = vld [vmem:[%s166 + $0x20] sm:$0xf]
      %v184 = vld [vmem:[%s166 + $0x24] sm:$0xf]
      %v185 = vld [vmem:[%s166 + $0x28] sm:$0xf]
      %v186 = vld [vmem:[%s166 + $0x2c] sm:$0xf]
      %v187 = vld [vmem:[%s166 + $0x30] sm:$0xf]
      %v188 = vld [vmem:[%s166 + $0x34] sm:$0xf]
      %v189 = vld [vmem:[%s166 + $0x38] sm:$0xf]
      %v190 = vld [vmem:[%s166 + $0x3c] sm:$0xf]
      %v191 = vld [vmem:[%s1] sm:$0xf]
      %v192 = vld [vmem:[%s1 + $0x4] sm:$0xf]
      %v193 = vld [vmem:[%s1 + $0x8] sm:$0xf]
      %v194 = vld [vmem:[%s1 + $0xc] sm:$0xf]
      %v195 = vld [vmem:[%s1 + $0x10] sm:$0xf]
      %v196 = vld [vmem:[%s1 + $0x14] sm:$0xf]
      %v197 = vld [vmem:[%s1 + $0x18] sm:$0xf]
      %v198 = vld [vmem:[%s1 + $0x1c] sm:$0xf]
      %v199 = vld [vmem:[%s1 + $0x20] sm:$0xf]
      %v200 = vld [vmem:[%s1 + $0x24] sm:$0xf]
      %v201 = vld [vmem:[%s1 + $0x28] sm:$0xf]
      %v202 = vld [vmem:[%s1 + $0x2c] sm:$0xf]
      %v203 = vld [vmem:[%s1 + $0x30] sm:$0xf]
      %v204 = vld [vmem:[%s1 + $0x34] sm:$0xf]
      %v205 = vld [vmem:[%s1 + $0x38] sm:$0xf]
      %v206 = vld [vmem:[%s1 + $0x3c] sm:$0xf]
      %v207 = vld [vmem:[%s2] sm:$0x1]
      %v209 = vlaneseq
      %v210 = vshrl.u32 %v209, 7
      %v211 = vsub.s32 0, %v210
      %v212 = vrot.slane %v207, %v211
      %v230 = vunpack.c.l.b16 %v175
      %v231 = vunpack.c.l.b16 %v176
      %v232 = vunpack.c.l.b16 %v177
      %v233 = vunpack.c.l.b16 %v178
      %v234 = vunpack.c.l.b16 %v179
      %v235 = vunpack.c.l.b16 %v180
      %v236 = vunpack.c.l.b16 %v181
      %v237 = vunpack.c.l.b16 %v182
      %v238 = vunpack.c.l.b16 %v183
      %v239 = vunpack.c.l.b16 %v184
      %v240 = vunpack.c.l.b16 %v185
      %v241 = vunpack.c.l.b16 %v186
      %v242 = vunpack.c.l.b16 %v187
      %v243 = vunpack.c.l.b16 %v188
      %v244 = vunpack.c.l.b16 %v189
      %v245 = vunpack.c.l.b16 %v190
      %v246 = vpack.c.b16 %v231, %v230
      %v247 = vpack.c.b16 %v233, %v232
      %v248 = vpack.c.b16 %v235, %v234
      %v249 = vpack.c.b16 %v237, %v236
      %v250 = vpack.c.b16 %v239, %v238
      %v251 = vpack.c.b16 %v241, %v240
      %v252 = vpack.c.b16 %v243, %v242
      %v253 = vpack.c.b16 %v245, %v244
      %v278 = vunpack.c.l.b16 %v191
      %v279 = vunpack.c.l.b16 %v192
      %v280 = vunpack.c.l.b16 %v193
      %v281 = vunpack.c.l.b16 %v194
      %v282 = vunpack.c.l.b16 %v195
      %v283 = vunpack.c.l.b16 %v196
      %v284 = vunpack.c.l.b16 %v197
      %v285 = vunpack.c.l.b16 %v198
      %v286 = vunpack.c.l.b16 %v199
      %v287 = vunpack.c.l.b16 %v200
      %v288 = vunpack.c.l.b16 %v201
      %v289 = vunpack.c.l.b16 %v202
      %v290 = vunpack.c.l.b16 %v203
      %v291 = vunpack.c.l.b16 %v204
      %v292 = vunpack.c.l.b16 %v205
      %v293 = vunpack.c.l.b16 %v206
      %v294 = vpack.c.b16 %v279, %v278
      %v295 = vpack.c.b16 %v281, %v280
      %v296 = vpack.c.b16 %v283, %v282
      %v297 = vpack.c.b16 %v285, %v284
      %v298 = vpack.c.b16 %v287, %v286
      %v299 = vpack.c.b16 %v289, %v288
      %v300 = vpack.c.b16 %v291, %v290
      %v301 = vpack.c.b16 %v293, %v292
      %310 = vmatprep.subr.bf16.mxu0 0
      %311 = vmatpush1.bf16.msra.mxu0 %v301
      %312 = vmatprep.subr.bf16.mxu0 0
      %313 = vmatpush1.bf16.msra.mxu0 %v300
      %314 = vmatprep.subr.bf16.mxu0 0
      %315 = vmatpush1.bf16.msra.mxu0 %v299
      %316 = vmatprep.subr.bf16.mxu0 0
      %317 = vmatpush1.bf16.msra.mxu0 %v298
      %318 = vmatprep.subr.bf16.mxu0 0
      %319 = vmatpush1.bf16.msra.mxu0 %v297
      %320 = vmatprep.subr.bf16.mxu0 0
      %321 = vmatpush1.bf16.msra.mxu0 %v296
      %322 = vmatprep.subr.bf16.mxu0 0
      %323 = vmatpush1.bf16.msra.mxu0 %v295
      %324 = vmatprep.subr.bf16.mxu0 0
      %325 = vmatpush1.bf16.msra.mxu0 %v294
      %326 = vmatprep.subr.bf16.mxu0 0
      %327 = vmatpush2.bf16.msra.mxu0 0
      %328 = vmatprep.subr.bf16.mxu0 0
      %329 = vmatpush2.bf16.msra.mxu0 0
      %330 = vmatprep.subr.bf16.mxu0 0
      %331 = vmatpush2.bf16.msra.mxu0 0
      %332 = vmatprep.subr.bf16.mxu0 0
      %333 = vmatpush2.bf16.msra.mxu0 0
      %334 = vmatprep.subr.bf16.mxu0 0
      %335 = vmatpush2.bf16.msra.mxu0 0
      %336 = vmatprep.subr.bf16.mxu0 0
      %337 = vmatpush2.bf16.msra.mxu0 0
      %338 = vmatprep.subr.bf16.mxu0 0
      %339 = vmatpush2.bf16.msra.mxu0 0
      %340 = vmatprep.subr.bf16.mxu0 0
      %341 = vmatpush2.bf16.msra.mxu0 0
      %342 = vmatprep.mubr.bf16.mxu0 0
      %343 = vmatmul.mubr.bf16.gmra.mxu0 %v246
      %v344 = vpop.f32.mrf.mxu0
      %v345 = vadd.f32 %v212, %v344
      %v346 = vpop.f32.mrf.mxu0
      %v347 = vpop.f32.mrf.mxu0
      %v348 = vadd.f32 %v212, %v347
      %v349 = vpop.f32.mrf.mxu0
      %350 = vmatprep.mubr.bf16.mxu0 0
      %351 = vmatmul.mubr.bf16.gmra.mxu0 %v247
      %v352 = vpop.f32.mrf.mxu0
      %v353 = vadd.f32 %v212, %v352
      %v354 = vpop.f32.mrf.mxu0
      %v355 = vpop.f32.mrf.mxu0
      %v356 = vadd.f32 %v212, %v355
      %v357 = vpop.f32.mrf.mxu0
      %358 = vmatprep.mubr.bf16.mxu0 0
      %359 = vmatmul.mubr.bf16.gmra.mxu0 %v248
      %v360 = vpop.f32.mrf.mxu0
      %v361 = vadd.f32 %v212, %v360
      %v362 = vpop.f32.mrf.mxu0
      %v363 = vpop.f32.mrf.mxu0
      %v364 = vadd.f32 %v212, %v363
      %v365 = vpop.f32.mrf.mxu0
      %366 = vmatprep.mubr.bf16.mxu0 0
      %367 = vmatmul.mubr.bf16.gmra.mxu0 %v249
      %v368 = vpop.f32.mrf.mxu0
      %v369 = vadd.f32 %v212, %v368
      %v370 = vpop.f32.mrf.mxu0
      %v371 = vpop.f32.mrf.mxu0
      %v372 = vadd.f32 %v212, %v371
      %v373 = vpop.f32.mrf.mxu0
      %374 = vmatprep.mubr.bf16.mxu0 0
      %375 = vmatmul.mubr.bf16.gmra.mxu0 %v250
      %v376 = vpop.f32.mrf.mxu0
      %v377 = vadd.f32 %v212, %v376
      %v378 = vpop.f32.mrf.mxu0
      %v379 = vpop.f32.mrf.mxu0
      %v380 = vadd.f32 %v212, %v379
      %v381 = vpop.f32.mrf.mxu0
      %382 = vmatprep.mubr.bf16.mxu0 0
      %383 = vmatmul.mubr.bf16.gmra.mxu0 %v251
      %v384 = vpop.f32.mrf.mxu0
      %v385 = vadd.f32 %v212, %v384
      %v386 = vpop.f32.mrf.mxu0
      %v387 = vpop.f32.mrf.mxu0
      %v388 = vadd.f32 %v212, %v387
      %v389 = vpop.f32.mrf.mxu0
      %390 = vmatprep.mubr.bf16.mxu0 0
      %391 = vmatmul.mubr.bf16.gmra.mxu0 %v252
      %v392 = vpop.f32.mrf.mxu0
      %v393 = vadd.f32 %v212, %v392
      %v394 = vpop.f32.mrf.mxu0
      %v395 = vpop.f32.mrf.mxu0
      %v396 = vadd.f32 %v212, %v395
      %v397 = vpop.f32.mrf.mxu0
      %398 = vmatprep.mubr.bf16.mxu0 0
      %399 = vmatmul.mubr.bf16.gmra.mxu0 %v253
      %v400 = vpop.f32.mrf.mxu0
      %v401 = vadd.f32 %v212, %v400
      %v402 = vpop.f32.mrf.mxu0
      %v403 = vpop.f32.mrf.mxu0
      %v404 = vadd.f32 %v212, %v403
      %v405 = vpop.f32.mrf.mxu0
      %406 = vdwg.mxu0
      %v407 = vpack.c.bf16 %v348, %v345
      %v408 = vpack.c.bf16 %v356, %v353
      %v409 = vpack.c.bf16 %v364, %v361
      %v410 = vpack.c.bf16 %v372, %v369
      %v411 = vpack.c.bf16 %v380, %v377
      %v412 = vpack.c.bf16 %v388, %v385
      %v413 = vpack.c.bf16 %v396, %v393
      %v414 = vpack.c.bf16 %v404, %v401
      %v423 = vunpack.c.l.b16 %v407
      %v424 = vunpack.c.h.b16 %v407
      %v425 = vunpack.c.l.b16 %v408
      %v426 = vunpack.c.h.b16 %v408
      %v427 = vunpack.c.l.b16 %v409
      %v428 = vunpack.c.h.b16 %v409
      %v429 = vunpack.c.l.b16 %v410
      %v430 = vunpack.c.h.b16 %v410
      %v431 = vunpack.c.l.b16 %v411
      %v432 = vunpack.c.h.b16 %v411
      %v433 = vunpack.c.l.b16 %v412
      %v434 = vunpack.c.h.b16 %v412
      %v435 = vunpack.c.l.b16 %v413
      %v436 = vunpack.c.h.b16 %v413
      %v437 = vunpack.c.l.b16 %v414
      %v438 = vunpack.c.h.b16 %v414
      %v439 = vpack.c.b16 %v423, %v423
      %v440 = vpack.c.b16 %v424, %v424
      %v441 = vpack.c.b16 %v425, %v425
      %v442 = vpack.c.b16 %v426, %v426
      %v443 = vpack.c.b16 %v427, %v427
      %v444 = vpack.c.b16 %v428, %v428
      %v445 = vpack.c.b16 %v429, %v429
      %v446 = vpack.c.b16 %v430, %v430
      %v447 = vpack.c.b16 %v431, %v431
      %v448 = vpack.c.b16 %v432, %v432
      %v449 = vpack.c.b16 %v433, %v433
      %v450 = vpack.c.b16 %v434, %v434
      %v451 = vpack.c.b16 %v435, %v435
      %v452 = vpack.c.b16 %v436, %v436
      %v453 = vpack.c.b16 %v437, %v437
      %v454 = vpack.c.b16 %v438, %v438
      %471 = vst [vmem:[%s172] sm:$0xf] %v439
      %472 = vst [vmem:[%s172 + $0x4] sm:$0xf] %v440
      %473 = vst [vmem:[%s172 + $0x8] sm:$0xf] %v441
      %474 = vst [vmem:[%s172 + $0xc] sm:$0xf] %v442
      %475 = vst [vmem:[%s172 + $0x10] sm:$0xf] %v443
      %476 = vst [vmem:[%s172 + $0x14] sm:$0xf] %v444
      %477 = vst [vmem:[%s172 + $0x18] sm:$0xf] %v445
      %478 = vst [vmem:[%s172 + $0x1c] sm:$0xf] %v446
      %479 = vst [vmem:[%s172 + $0x20] sm:$0xf] %v447
      %480 = vst [vmem:[%s172 + $0x24] sm:$0xf] %v448
      %481 = vst [vmem:[%s172 + $0x28] sm:$0xf] %v449
      %482 = vst [vmem:[%s172 + $0x2c] sm:$0xf] %v450
      %483 = vst [vmem:[%s172 + $0x30] sm:$0xf] %v451
      %484 = vst [vmem:[%s172 + $0x34] sm:$0xf] %v452
      %485 = vst [vmem:[%s172 + $0x38] sm:$0xf] %v453
      %486 = vst [vmem:[%s172 + $0x3c] sm:$0xf] %v454
      %s487 = smul.u32 16, %s14
      %p488 = scmp.lt.s32.totalorder %s487, 63
      %s489 = scalar_select %p488, %s487, 63
      %s490 = smul.addr %s489, 4
      %s491 = scalar_lea.vmem %s3, %s490
      // Predicated region
      $region33: #{_lambda_.4} parent=31 // pred_check
        %p492 = pneg %p100
      $region34: #{_lambda_.4} parent=31 // pred_check_branch
        %494 = sbr.rel (%p492) target = $region36
      $region35: #{_lambda_.4} parent=31 // pred_region
        %s495 = smul.u32 16, %s14
      $region36: #{_lambda_.4} parent=31 // pred_fallthru
        _
    $region32: #{_lambda_.4} parent=5 // pred_fallthru
      _
    %p496 = scmp.le.s32.totalorder 2, %s9
    // Predicated region
    $region37: #{_lambda_.4} parent=5 // pred_check
      %p497 = pneg %p496
    $region38: #{_lambda_.4} parent=5 // pred_check_branch
      %499 = sbr.rel (%p497) target = $region40
    $region39: #{_lambda_.4} parent=5 // pred_region
      %s500 = ssub.s32 %s9, 2
      // Predicated region
      $region41: #{_lambda_.4} parent=39 // pred_check
        %p501 = pneg %p106
      $region42: #{_lambda_.4} parent=39 // pred_check_branch
        %503 = sbr.rel (%p501) target = $region44
      $region43: #{_lambda_.4} parent=39 // pred_region
        %s504 = smul.u32 16, %s15
        %p505 = scmp.lt.s32.totalorder %s504, 63
        %s506 = scalar_select %p505, %s504, 63
        %s507 = smul.addr %s506, 4
        %s508 = scalar_lea.vmem %s3, %s507
      $region44: #{_lambda_.4} parent=39 // pred_fallthru
        _
    $region40: #{_lambda_.4} parent=5 // pred_fallthru
      _
  $region6: #{_lambda_.4} parent=0 // loop_footer
    %s13 = sadd.s32 1, %s9
  $region7: #{_lambda_.4} parent=0 // loop_footer_branch
    %8 = sbr.rel target = $region3
  $region8: #{_lambda_.4} parent=0 // loop_exit
    _

// kernel: _lambda_.7
$region0: #{_lambda_.7}
  #allocation0 [shape = 'u32[]', space=smem, size = 0x4, offset = 0x4, fixed_abs, tag = 'smem constant byte address 0x4 - core index']
  #allocation1 [shape = 'u32[144,128]{1,0:T(1,128)}', space=vmem, size = 0x12000, scoped, tag = 'internal scratch']
  %s0 = inlined_call_operand.vmem [shape: bf16[2,64,128], index: 0, kind: input, shape index: {}]
  %s1 = inlined_call_operand.vmem [shape: f32[128,128], index: 1, kind: input, shape index: {}]
  %s2 = inlined_call_operand.vmem [shape: f32[1,128], index: 2, kind: input, shape index: {}]
  %s3 = inlined_call_operand.hbm [shape: f32[2,128], index: 3, kind: output, shape index: {}]
  %s4 = sld [smem:[#allocation0]]
  $region22: #{_lambda_.7} parent=0
    _
  %s6 = ssub.s32 1, %s4
  %s7 = scalar_select 0, %s6, %s4
  $region1: #{_lambda_.7} parent=0
    #allocation2 [shape = 'u8[1024]{0}', space=vmem, size = 0x400, scoped, tag = 'output window, operand 0, single buffered']
    #allocation3 [shape = 's32[1]{0}', space=sflag, size = 0x4, scoped, tag = 'scoped memory for _lambda_.7']
    %8 = vsyncpa [#allocation3], 0
    // Predicated region
    $region2: #{_lambda_.7} parent=1 // pred_check
      _
    $region3: #{_lambda_.7} parent=1 // pred_check_branch
      %10 = sbr.rel (0) target = $region5
    $region4: #{_lambda_.7} parent=1 // pred_region
      _
    $region5: #{_lambda_.7} parent=1 // pred_fallthru
      _
    // Predicated region
    $region6: #{_lambda_.7} parent=1 // pred_check
      _
    $region7: #{_lambda_.7} parent=1 // pred_check_branch
      %12 = sbr.rel (0) target = $region9
    $region8: #{_lambda_.7} parent=1 // pred_region
      _
    $region9: #{_lambda_.7} parent=1 // pred_fallthru
      _
    // Predicated region
    $region10: #{_lambda_.7} parent=1 // pred_check
      _
    $region11: #{_lambda_.7} parent=1 // pred_check_branch
      %14 = sbr.rel (0) target = $region13
    $region12: #{_lambda_.7} parent=1 // pred_region
      _
    $region13: #{_lambda_.7} parent=1 // pred_fallthru
      _
    %v15 = vld [vmem:[%s0] sm:$0xf]
    %v16 = vld [vmem:[%s0 + $0x4] sm:$0xf]
    %v17 = vld [vmem:[%s0 + $0x8] sm:$0xf]
    %v18 = vld [vmem:[%s0 + $0xc] sm:$0xf]
    %v19 = vld [vmem:[%s0 + $0x10] sm:$0xf]
    %v20 = vld [vmem:[%s0 + $0x14] sm:$0xf]
    %v21 = vld [vmem:[%s0 + $0x18] sm:$0xf]
    %v22 = vld [vmem:[%s0 + $0x1c] sm:$0xf]
    %v23 = vld [vmem:[%s0 + $0x20] sm:$0xf]
    %v24 = vld [vmem:[%s0 + $0x24] sm:$0xf]
    %v25 = vld [vmem:[%s0 + $0x28] sm:$0xf]
    %v26 = vld [vmem:[%s0 + $0x2c] sm:$0xf]
    %v27 = vld [vmem:[%s0 + $0x30] sm:$0xf]
    %v28 = vld [vmem:[%s0 + $0x34] sm:$0xf]
    %v29 = vld [vmem:[%s0 + $0x38] sm:$0xf]
    %v30 = vld [vmem:[%s0 + $0x3c] sm:$0xf]
    %v31 = vunpack.c.l.bf16 %v15
    %v32 = vunpack.c.l.bf16 %v16
    %v33 = vunpack.c.l.bf16 %v17
    %v34 = vunpack.c.l.bf16 %v18
    %v35 = vunpack.c.l.bf16 %v19
    %v36 = vunpack.c.l.bf16 %v20
    %v37 = vunpack.c.l.bf16 %v21
    %v38 = vunpack.c.l.bf16 %v22
    %v39 = vunpack.c.l.bf16 %v23
    %v40 = vunpack.c.l.bf16 %v24
    %v41 = vunpack.c.l.bf16 %v25
    %v42 = vunpack.c.l.bf16 %v26
    %v43 = vunpack.c.l.bf16 %v27
    %v44 = vunpack.c.l.bf16 %v28
    %v45 = vunpack.c.l.bf16 %v29
    %v46 = vunpack.c.l.bf16 %v30
    %v47 = vadd.f32 %v31, %v32
    %v48 = vadd.f32 %v47, %v33
    %v49 = vadd.f32 %v48, %v34
    %v50 = vadd.f32 %v49, %v35
    %v51 = vadd.f32 %v50, %v36
    %v52 = vadd.f32 %v51, %v37
    %v53 = vadd.f32 %v52, %v38
    %v54 = vrot.slane %v53, 4
    %v55 = vadd.f32 %v53, %v54
    %v56 = vrot.slane %v55, 2
    %v57 = vadd.f32 %v55, %v56
    %v58 = vrot.slane %v57, 1
    %v59 = vadd.f32 %v57, %v58
    %v60 = vadd.f32 %v39, %v40
    %v61 = vadd.f32 %v60, %v41
    %v62 = vadd.f32 %v61, %v42
    %v63 = vadd.f32 %v62, %v43
    %v64 = vadd.f32 %v63, %v44
    %v65 = vadd.f32 %v64, %v45
    %v66 = vadd.f32 %v65, %v46
    %v67 = vrot.slane %v66, 4
    %v68 = vadd.f32 %v66, %v67
    %v69 = vrot.slane %v68, 2
    %v70 = vadd.f32 %v68, %v69
    %v71 = vrot.slane %v70, 1
    %v72 = vadd.f32 %v70, %v71
    %v73 = vrcp.pop 64.0
    %v74 = vmul.f32 %v59, %v73
    %v75 = vmul.f32 %v72, %v73
    %v76 = vld [vmem:[%s1] sm:$0xff]
    %v77 = vld [vmem:[%s1 + $0x8] sm:$0xff]
    %v78 = vld [vmem:[%s1 + $0x10] sm:$0xff]
    %v79 = vld [vmem:[%s1 + $0x18] sm:$0xff]
    %v80 = vld [vmem:[%s1 + $0x20] sm:$0xff]
    %v81 = vld [vmem:[%s1 + $0x28] sm:$0xff]
    %v82 = vld [vmem:[%s1 + $0x30] sm:$0xff]
    %v83 = vld [vmem:[%s1 + $0x38] sm:$0xff]
    %v84 = vld [vmem:[%s1 + $0x40] sm:$0xff]
    %v85 = vld [vmem:[%s1 + $0x48] sm:$0xff]
    %v86 = vld [vmem:[%s1 + $0x50] sm:$0xff]
    %v87 = vld [vmem:[%s1 + $0x58] sm:$0xff]
    %v88 = vld [vmem:[%s1 + $0x60] sm:$0xff]
    %v89 = vld [vmem:[%s1 + $0x68] sm:$0xff]
    %v90 = vld [vmem:[%s1 + $0x70] sm:$0xff]
    %v91 = vld [vmem:[%s1 + $0x78] sm:$0xff]
    %v92 = vld [vmem:[%s2] sm:$0x1]
    %v94 = vlaneseq
    %v95 = vshrl.u32 %v94, 7
    %v96 = vsub.s32 0, %v95
    %v97 = vrot.slane %v92, %v96
    %vm101 = vcmask 1041409
    %v102 = vsel %vm101, %v75, %v74
    %104 = vmatprep.subr.mxu0 0.0
    %105 = vmatpush1.msra.mxu0 %v91
    %106 = vmatprep.subr.mxu0 0.0
    %107 = vmatpush1.msra.mxu0 %v90
    %108 = vmatprep.subr.mxu0 0.0
    %109 = vmatpush1.msra.mxu0 %v89
    %110 = vmatprep.subr.mxu0 0.0
    %111 = vmatpush1.msra.mxu0 %v88
    %112 = vmatprep.subr.mxu0 0.0
    %113 = vmatpush1.msra.mxu0 %v87
    %114 = vmatprep.subr.mxu0 0.0
    %115 = vmatpush1.msra.mxu0 %v86
    %116 = vmatprep.subr.mxu0 0.0
    %117 = vmatpush1.msra.mxu0 %v85
    %118 = vmatprep.subr.mxu0 0.0
    %119 = vmatpush1.msra.mxu0 %v84
    %120 = vmatprep.subr.mxu0 0.0
    %121 = vmatpush1.msra.mxu0 %v83
    %122 = vmatprep.subr.mxu0 0.0
    %123 = vmatpush1.msra.mxu0 %v82
    %124 = vmatprep.subr.mxu0 0.0
    %125 = vmatpush1.msra.mxu0 %v81
    %126 = vmatprep.subr.mxu0 0.0
    %127 = vmatpush1.msra.mxu0 %v80
    %128 = vmatprep.subr.mxu0 0.0
    %129 = vmatpush1.msra.mxu0 %v79
    %130 = vmatprep.subr.mxu0 0.0
    %131 = vmatpush1.msra.mxu0 %v78
    %132 = vmatprep.subr.mxu0 0.0
    %133 = vmatpush1.msra.mxu0 %v77
    %134 = vmatprep.subr.mxu0 0.0
    %135 = vmatpush1.msra.mxu0 %v76
    %136 = vmatprep.subr.mxu0 0.0
    %137 = vmatpush2.msra.mxu0 0.0
    %138 = vmatprep.subr.mxu0 0.0
    %139 = vmatpush2.msra.mxu0 0.0
    %140 = vmatprep.subr.mxu0 0.0
    %141 = vmatpush2.msra.mxu0 0.0
    %142 = vmatprep.subr.mxu0 0.0
    %143 = vmatpush2.msra.mxu0 0.0
    %144 = vmatprep.subr.mxu0 0.0
    %145 = vmatpush2.msra.mxu0 0.0
    %146 = vmatprep.subr.mxu0 0.0
    %147 = vmatpush2.msra.mxu0 0.0
    %148 = vmatprep.subr.mxu0 0.0
    %149 = vmatpush2.msra.mxu0 0.0
    %150 = vmatprep.subr.mxu0 0.0
    %151 = vmatpush2.msra.mxu0 0.0
    %152 = vmatprep.subr.mxu0 0.0
    %153 = vmatpush2.msra.mxu0 0.0
    %154 = vmatprep.subr.mxu0 0.0
    %155 = vmatpush2.msra.mxu0 0.0
    %156 = vmatprep.subr.mxu0 0.0
    %157 = vmatpush2.msra.mxu0 0.0
    %158 = vmatprep.subr.mxu0 0.0
    %159 = vmatpush2.msra.mxu0 0.0
    %160 = vmatprep.subr.mxu0 0.0
    %161 = vmatpush2.msra.mxu0 0.0
    %162 = vmatprep.subr.mxu0 0.0
    %163 = vmatpush2.msra.mxu0 0.0
    %164 = vmatprep.subr.mxu0 0.0
    %165 = vmatpush2.msra.mxu0 0.0
    %166 = vmatprep.subr.mxu0 0.0
    %167 = vmatpush2.msra.mxu0 0.0
    %168 = vmatprep.mubr.f32.mxu0 0.0
    %169 = vmatmul.mubr.f32.gmra.mxu0 %v102
    %v170 = vpop.f32.mrf.mxu0
    %v171 = vadd.f32 %v97, %v170
    %v172 = vpop.f32.mrf.mxu0
    %173 = vdwg.mxu0
    %174 = vst [vmem:[#allocation2] sm:$0x3] %v171
    // Predicated region
    $region14: #{_lambda_.7} parent=1 // pred_check
      _
    $region15: #{_lambda_.7} parent=1 // pred_check_branch
      %176 = sbr.rel (0) target = $region17
    $region16: #{_lambda_.7} parent=1 // pred_region
      %s178 = ssub.s32 32, 32
      %179 = vsyncadd [#allocation3], %s178
      %s181 = sshll.u32 [#allocation2], 4
      %s182 = int_to_ptr.vmem [resolvable:$true] %s181
      %184 = dma.vmem_to_hbm [thread:$0]  %s182, 32, %s3, [#allocation3]
    $region17: #{_lambda_.7} parent=1 // pred_fallthru
      _
    // Predicated region
    $region18: #{_lambda_.7} parent=1 // pred_check
      _
    $region19: #{_lambda_.7} parent=1 // pred_check_branch
      %186 = sbr.rel (0) target = $region21
    $region20: #{_lambda_.7} parent=1 // pred_region
      %187 = dma.done [#allocation3], 32
    $region21: #{_lambda_.7} parent=1 // pred_fallthru
      _
    %188 = vsyncpa [#allocation3], 1

// kernel: _lambda_.6
$region0: #{_lambda_.6}
  #allocation0 [shape = 'u32[]', space=smem, size = 0x4, offset = 0x4, fixed_abs, tag = 'smem constant byte address 0x4 - core index']
  #allocation1 [shape = 'u32[144,128]{1,0:T(1,128)}', space=vmem, size = 0x12000, scoped, tag = 'internal scratch']
  %s0 = inlined_call_operand.vmem [shape: bf16[2,9,9,128], index: 0, kind: input, shape index: {}]
  %s1 = inlined_call_operand.vmem [shape: bf16[2,9,9,128], index: 1, kind: input, shape index: {}]
  %s2 = inlined_call_operand.vmem [shape: bf16[2,9,9,128], index: 2, kind: input, shape index: {}]
  %s3 = inlined_call_operand.vmem [shape: bf16[2,9,9,128], index: 3, kind: input, shape index: {}]
  %s4 = inlined_call_operand.vmem [shape: bf16[9,128,128], index: 4, kind: input, shape index: {}]
  %s5 = inlined_call_operand.vmem [shape: f32[1,128], index: 5, kind: input, shape index: {}]
  %s6 = inlined_call_operand.vmem [shape: bf16[128,128], index: 6, kind: input, shape index: {}]
  %s7 = inlined_call_operand.vmem [shape: f32[1,128], index: 7, kind: input, shape index: {}]
  %s8 = inlined_call_operand.vmem [shape: bf16[128,128], index: 8, kind: input, shape index: {}]
  %s9 = inlined_call_operand.vmem [shape: f32[1,128], index: 9, kind: input, shape index: {}]
  %s10 = inlined_call_operand.vmem [shape: bf16[2,8,8,128], index: 10, kind: output, shape index: {}]
  %s11 = sld [smem:[#allocation0]]
  $region73: #{_lambda_.6} parent=0
    _
  %s13 = ssub.s32 1, %s11
  %s14 = scalar_select 0, %s13, %s11
  loop: start=0, step=1, limit=6
  $region2: #{_lambda_.6} parent=0 // loop_pre_header
    _
  $region3: #{_lambda_.6} parent=0 // loop_header
    %s16 = sphi 0, %s20
    %p17 = scmp.ge.s32.totalorder %s16, 6
    %s23 = sphi 0, %s35
    %s24 = sphi 0, %s31
    %s25 = sphi 0, %s23
    %s26 = sphi 0, %s24
    %s27 = sphi 0, %s25
    %s28 = sphi 0, %s26
    %s38 = sphi 0, %s40
    %s41 = sphi 0, %s38
    %s42 = sphi 0, %s41
    %s58 = sphi 0, %s42
    %s64 = sphi 0, %s66
    %s67 = sphi 0, %s64
    %s68 = sphi 0, %s67
    %s84 = sphi 0, %s68
    %s90 = sphi 0, %s92
    %s93 = sphi 0, %s90
    %s94 = sphi 0, %s93
    %s110 = sphi 0, %s94
    %s116 = sphi 0, %s118
    %s119 = sphi 0, %s116
    %s120 = sphi 0, %s119
    %s136 = sphi 0, %s120
    %s140 = sphi 0, %s140
    %s142 = sphi 0, %s140
    %s143 = sphi 0, %s142
    %s157 = sphi 0, %s143
    %s161 = sphi 0, %s161
    %s163 = sphi 0, %s161
    %s164 = sphi 0, %s163
    %s178 = sphi 0, %s164
    %s182 = sphi 0, %s182
    %s184 = sphi 0, %s182
    %s185 = sphi 0, %s184
    %s199 = sphi 0, %s185
    %s203 = sphi 0, %s203
    %s205 = sphi 0, %s203
    %s206 = sphi 0, %s205
    %s220 = sphi 0, %s206
    %s224 = sphi 0, %s224
    %s226 = sphi 0, %s224
    %s227 = sphi 0, %s226
    %s241 = sphi 0, %s227
    %s245 = sphi 0, %s245
    %s247 = sphi 0, %s245
    %s248 = sphi 0, %s247
    %s262 = sphi 0, %s248
    %s270 = sphi 0, %s272
    %s273 = sphi 0, %s270
    %s274 = sphi 0, %s273
    %s290 = sphi 0, %s274
  $region4: #{_lambda_.6} parent=0 // loop_header_branch
    %19 = sbr.rel (%p17) target = $region8
  $region5: #{_lambda_.6} parent=0 // loop_body
    %s21 = ssub.s32 %s16, 1
    %s22 = ssub.s32 %s16, 2
    %s29 = sadd.s32 1, %s24
    %p30 = scmp.ge.s32.totalorder %s29, 2
    %s31 = scalar_select %p30, 0, %s29
    %s32 = sadd.s32 1, %s23
    %s33 = scalar_select %p30, %s32, %s23
    %p34 = scmp.ge.s32.totalorder %s33, 2
    %s35 = scalar_select %p34, 0, %s33
    %s36 = ssub.s32 %s23, %s35
    %p37 = scmp.eq.s32.totalorder %s36, 0
    %s39 = sadd.s32 %s38, 1
    %s40 = scalar_select %p37, %s38, %s39
    %p43 = pneg %p37
    %p44 = scmp.eq.s32.totalorder %s16, 3
    %p45 = por %p43, %p44
    %p46 = scmp.ne.s32.totalorder %s38, %s41
    %p47 = scmp.eq.s32.totalorder %s16, 0
    %p48 = por %p46, %p47
    %p49 = scmp.ne.s32.totalorder %s38, %s41
    %p50 = scmp.eq.s32.totalorder %s21, 3
    %p51 = por %p49, %p50
    %p52 = scmp.ne.s32.totalorder %s41, %s42
    %p53 = scmp.eq.s32.totalorder %s21, 0
    %p54 = por %p52, %p53
    %p55 = scmp.ne.s32.totalorder %s41, %s42
    %p56 = scmp.eq.s32.totalorder %s22, 3
    %p57 = por %p55, %p56
    %p59 = scmp.ne.s32.totalorder %s42, %s58
    %p60 = scmp.eq.s32.totalorder %s22, 0
    %p61 = por %p59, %p60
    %s62 = ssub.s32 %s23, %s35
    %p63 = scmp.eq.s32.totalorder %s62, 0
    %s65 = sadd.s32 %s64, 1
    %s66 = scalar_select %p63, %s64, %s65
    %p69 = pneg %p63
    %p70 = scmp.eq.s32.totalorder %s16, 3
    %p71 = por %p69, %p70
    %p72 = scmp.ne.s32.totalorder %s64, %s67
    %p73 = scmp.eq.s32.totalorder %s16, 0
    %p74 = por %p72, %p73
    %p75 = scmp.ne.s32.totalorder %s64, %s67
    %p76 = scmp.eq.s32.totalorder %s21, 3
    %p77 = por %p75, %p76
    %p78 = scmp.ne.s32.totalorder %s67, %s68
    %p79 = scmp.eq.s32.totalorder %s21, 0
    %p80 = por %p78, %p79
    %p81 = scmp.ne.s32.totalorder %s67, %s68
    %p82 = scmp.eq.s32.totalorder %s22, 3
    %p83 = por %p81, %p82
    %p85 = scmp.ne.s32.totalorder %s68, %s84
    %p86 = scmp.eq.s32.totalorder %s22, 0
    %p87 = por %p85, %p86
    %s88 = ssub.s32 %s23, %s35
    %p89 = scmp.eq.s32.totalorder %s88, 0
    %s91 = sadd.s32 %s90, 1
    %s92 = scalar_select %p89, %s90, %s91
    %p95 = pneg %p89
    %p96 = scmp.eq.s32.totalorder %s16, 3
    %p97 = por %p95, %p96
    %p98 = scmp.ne.s32.totalorder %s90, %s93
    %p99 = scmp.eq.s32.totalorder %s16, 0
    %p100 = por %p98, %p99
    %p101 = scmp.ne.s32.totalorder %s90, %s93
    %p102 = scmp.eq.s32.totalorder %s21, 3
    %p103 = por %p101, %p102
    %p104 = scmp.ne.s32.totalorder %s93, %s94
    %p105 = scmp.eq.s32.totalorder %s21, 0
    %p106 = por %p104, %p105
    %p107 = scmp.ne.s32.totalorder %s93, %s94
    %p108 = scmp.eq.s32.totalorder %s22, 3
    %p109 = por %p107, %p108
    %p111 = scmp.ne.s32.totalorder %s94, %s110
    %p112 = scmp.eq.s32.totalorder %s22, 0
    %p113 = por %p111, %p112
    %s114 = ssub.s32 %s23, %s35
    %p115 = scmp.eq.s32.totalorder %s114, 0
    %s117 = sadd.s32 %s116, 1
    %s118 = scalar_select %p115, %s116, %s117
    %p121 = pneg %p115
    %p122 = scmp.eq.s32.totalorder %s16, 3
    %p123 = por %p121, %p122
    %p124 = scmp.ne.s32.totalorder %s116, %s119
    %p125 = scmp.eq.s32.totalorder %s16, 0
    %p126 = por %p124, %p125
    %p127 = scmp.ne.s32.totalorder %s116, %s119
    %p128 = scmp.eq.s32.totalorder %s21, 3
    %p129 = por %p127, %p128
    %p130 = scmp.ne.s32.totalorder %s119, %s120
    %p131 = scmp.eq.s32.totalorder %s21, 0
    %p132 = por %p130, %p131
    %p133 = scmp.ne.s32.totalorder %s119, %s120
    %p134 = scmp.eq.s32.totalorder %s22, 3
    %p135 = por %p133, %p134
    %p137 = scmp.ne.s32.totalorder %s120, %s136
    %p138 = scmp.eq.s32.totalorder %s22, 0
    %p139 = por %p137, %p138
    %s141 = sadd.s32 %s140, 1
    %p144 = scmp.eq.s32.totalorder %s16, 3
    %p145 = scmp.ne.s32.totalorder %s140, %s142
    %p146 = scmp.eq.s32.totalorder %s16, 0
    %p147 = por %p145, %p146
    %p148 = scmp.ne.s32.totalorder %s140, %s142
    %p149 = scmp.eq.s32.totalorder %s21, 3
    %p150 = por %p148, %p149
    %p151 = scmp.ne.s32.totalorder %s142, %s143
    %p152 = scmp.eq.s32.totalorder %s21, 0
    %p153 = por %p151, %p152
    %p154 = scmp.ne.s32.totalorder %s142, %s143
    %p155 = scmp.eq.s32.totalorder %s22, 3
    %p156 = por %p154, %p155
    %p158 = scmp.ne.s32.totalorder %s143, %s157
    %p159 = scmp.eq.s32.totalorder %s22, 0
    %p160 = por %p158, %p159
    %s162 = sadd.s32 %s161, 1
    %p165 = scmp.eq.s32.totalorder %s16, 3
    %p166 = scmp.ne.s32.totalorder %s161, %s163
    %p167 = scmp.eq.s32.totalorder %s16, 0
    %p168 = por %p166, %p167
    %p169 = scmp.ne.s32.totalorder %s161, %s163
    %p170 = scmp.eq.s32.totalorder %s21, 3
    %p171 = por %p169, %p170
    %p172 = scmp.ne.s32.totalorder %s163, %s164
    %p173 = scmp.eq.s32.totalorder %s21, 0
    %p174 = por %p172, %p173
    %p175 = scmp.ne.s32.totalorder %s163, %s164
    %p176 = scmp.eq.s32.totalorder %s22, 3
    %p177 = por %p175, %p176
    %p179 = scmp.ne.s32.totalorder %s164, %s178
    %p180 = scmp.eq.s32.totalorder %s22, 0
    %p181 = por %p179, %p180
    %s183 = sadd.s32 %s182, 1
    %p186 = scmp.eq.s32.totalorder %s16, 3
    %p187 = scmp.ne.s32.totalorder %s182, %s184
    %p188 = scmp.eq.s32.totalorder %s16, 0
    %p189 = por %p187, %p188
    %p190 = scmp.ne.s32.totalorder %s182, %s184
    %p191 = scmp.eq.s32.totalorder %s21, 3
    %p192 = por %p190, %p191
    %p193 = scmp.ne.s32.totalorder %s184, %s185
    %p194 = scmp.eq.s32.totalorder %s21, 0
    %p195 = por %p193, %p194
    %p196 = scmp.ne.s32.totalorder %s184, %s185
    %p197 = scmp.eq.s32.totalorder %s22, 3
    %p198 = por %p196, %p197
    %p200 = scmp.ne.s32.totalorder %s185, %s199
    %p201 = scmp.eq.s32.totalorder %s22, 0
    %p202 = por %p200, %p201
    %s204 = sadd.s32 %s203, 1
    %p207 = scmp.eq.s32.totalorder %s16, 3
    %p208 = scmp.ne.s32.totalorder %s203, %s205
    %p209 = scmp.eq.s32.totalorder %s16, 0
    %p210 = por %p208, %p209
    %p211 = scmp.ne.s32.totalorder %s203, %s205
    %p212 = scmp.eq.s32.totalorder %s21, 3
    %p213 = por %p211, %p212
    %p214 = scmp.ne.s32.totalorder %s205, %s206
    %p215 = scmp.eq.s32.totalorder %s21, 0
    %p216 = por %p214, %p215
    %p217 = scmp.ne.s32.totalorder %s205, %s206
    %p218 = scmp.eq.s32.totalorder %s22, 3
    %p219 = por %p217, %p218
    %p221 = scmp.ne.s32.totalorder %s206, %s220
    %p222 = scmp.eq.s32.totalorder %s22, 0
    %p223 = por %p221, %p222
    %s225 = sadd.s32 %s224, 1
    %p228 = scmp.eq.s32.totalorder %s16, 3
    %p229 = scmp.ne.s32.totalorder %s224, %s226
    %p230 = scmp.eq.s32.totalorder %s16, 0
    %p231 = por %p229, %p230
    %p232 = scmp.ne.s32.totalorder %s224, %s226
    %p233 = scmp.eq.s32.totalorder %s21, 3
    %p234 = por %p232, %p233
    %p235 = scmp.ne.s32.totalorder %s226, %s227
    %p236 = scmp.eq.s32.totalorder %s21, 0
    %p237 = por %p235, %p236
    %p238 = scmp.ne.s32.totalorder %s226, %s227
    %p239 = scmp.eq.s32.totalorder %s22, 3
    %p240 = por %p238, %p239
    %p242 = scmp.ne.s32.totalorder %s227, %s241
    %p243 = scmp.eq.s32.totalorder %s22, 0
    %p244 = por %p242, %p243
    %s246 = sadd.s32 %s245, 1
    %p249 = scmp.eq.s32.totalorder %s16, 3
    %p250 = scmp.ne.s32.totalorder %s245, %s247
    %p251 = scmp.eq.s32.totalorder %s16, 0
    %p252 = por %p250, %p251
    %p253 = scmp.ne.s32.totalorder %s245, %s247
    %p254 = scmp.eq.s32.totalorder %s21, 3
    %p255 = por %p253, %p254
    %p256 = scmp.ne.s32.totalorder %s247, %s248
    %p257 = scmp.eq.s32.totalorder %s21, 0
    %p258 = por %p256, %p257
    %p259 = scmp.ne.s32.totalorder %s247, %s248
    %p260 = scmp.eq.s32.totalorder %s22, 3
    %p261 = por %p259, %p260
    %p263 = scmp.ne.s32.totalorder %s248, %s262
    %p264 = scmp.eq.s32.totalorder %s22, 0
    %p265 = por %p263, %p264
    %s266 = ssub.s32 %s23, %s35
    %s267 = ssub.s32 %s24, %s31
    %s268 = sor.u32 %s266, %s267
    %p269 = scmp.eq.s32.totalorder %s268, 0
    %s271 = sadd.s32 %s270, 1
    %s272 = scalar_select %p269, %s270, %s271
    %p275 = pneg %p269
    %p276 = scmp.eq.s32.totalorder %s16, 3
    %p277 = por %p275, %p276
    %p278 = scmp.ne.s32.totalorder %s270, %s273
    %p279 = scmp.eq.s32.totalorder %s16, 0
    %p280 = por %p278, %p279
    %p281 = scmp.ne.s32.totalorder %s270, %s273
    %p282 = scmp.eq.s32.totalorder %s21, 3
    %p283 = por %p281, %p282
    %p284 = scmp.ne.s32.totalorder %s273, %s274
    %p285 = scmp.eq.s32.totalorder %s21, 0
    %p286 = por %p284, %p285
    %p287 = scmp.ne.s32.totalorder %s273, %s274
    %p288 = scmp.eq.s32.totalorder %s22, 3
    %p289 = por %p287, %p288
    %p291 = scmp.ne.s32.totalorder %s274, %s290
    %p292 = scmp.eq.s32.totalorder %s22, 0
    %p293 = por %p291, %p292
    %p294 = scmp.le.s32.totalorder 1, %s16
    %p295 = scmp.lt.s32.totalorder %s16, 5
    %p296 = pnand %p294, %p295
    %p297 = pneg %p296
    // Predicated region
    $region9: #{_lambda_.6} parent=5 // pred_check
      _
    $region10: #{_lambda_.6} parent=5 // pred_check_branch
      %299 = sbr.rel (%p296) target = $region12
    $region11: #{_lambda_.6} parent=5 // pred_region
      %s300 = ssub.s32 %s16, 1
      // Predicated region
      $region13: #{_lambda_.6} parent=11 // pred_check
        %p301 = pneg %p153
      $region14: #{_lambda_.6} parent=11 // pred_check_branch
        %303 = sbr.rel (%p301) target = $region16
      $region15: #{_lambda_.6} parent=11 // pred_region
        _
      $region16: #{_lambda_.6} parent=11 // pred_fallthru
        _
      // Predicated region
      $region17: #{_lambda_.6} parent=11 // pred_check
        %p304 = pneg %p174
      $region18: #{_lambda_.6} parent=11 // pred_check_branch
        %306 = sbr.rel (%p304) target = $region20
      $region19: #{_lambda_.6} parent=11 // pred_region
        _
      $region20: #{_lambda_.6} parent=11 // pred_fallthru
        _
      // Predicated region
      $region21: #{_lambda_.6} parent=11 // pred_check
        %p307 = pneg %p195
      $region22: #{_lambda_.6} parent=11 // pred_check_branch
        %309 = sbr.rel (%p307) target = $region24
      $region23: #{_lambda_.6} parent=11 // pred_region
        _
      $region24: #{_lambda_.6} parent=11 // pred_fallthru
        _
      // Predicated region
      $region25: #{_lambda_.6} parent=11 // pred_check
        %p310 = pneg %p216
      $region26: #{_lambda_.6} parent=11 // pred_check_branch
        %312 = sbr.rel (%p310) target = $region28
      $region27: #{_lambda_.6} parent=11 // pred_region
        _
      $region28: #{_lambda_.6} parent=11 // pred_fallthru
        _
      // Predicated region
      $region29: #{_lambda_.6} parent=11 // pred_check
        %p313 = pneg %p237
      $region30: #{_lambda_.6} parent=11 // pred_check_branch
        %315 = sbr.rel (%p313) target = $region32
      $region31: #{_lambda_.6} parent=11 // pred_region
        _
      $region32: #{_lambda_.6} parent=11 // pred_fallthru
        _
      // Predicated region
      $region33: #{_lambda_.6} parent=11 // pred_check
        %p316 = pneg %p258
      $region34: #{_lambda_.6} parent=11 // pred_check_branch
        %318 = sbr.rel (%p316) target = $region36
      $region35: #{_lambda_.6} parent=11 // pred_region
        _
      $region36: #{_lambda_.6} parent=11 // pred_fallthru
        _
    $region12: #{_lambda_.6} parent=5 // pred_fallthru
      _
    %p319 = scmp.lt.s32.totalorder %s16, 4
    // Predicated region
    $region37: #{_lambda_.6} parent=5 // pred_check
      %p320 = pneg %p319
    $region38: #{_lambda_.6} parent=5 // pred_check_branch
      %322 = sbr.rel (%p320) target = $region40
    $region39: #{_lambda_.6} parent=5 // pred_region
      // Predicated region
      $region41: #{_lambda_.6} parent=39 // pred_check
        %p323 = pneg %p48
      $region42: #{_lambda_.6} parent=39 // pred_check_branch
        %325 = sbr.rel (%p323) target = $region44
      $region43: #{_lambda_.6} parent=39 // pred_region
        %p326 = scmp.lt.s32.totalorder %s23, 1
        %s327 = scalar_select %p326, %s23, 1
        %s328 = smul.addr %s327, 18
        %s329 = smul.addr %s328, 4
        %s330 = scalar_lea.vmem %s0, %s329
      $region44: #{_lambda_.6} parent=39 // pred_fallthru
        _
      // Predicated region
      $region45: #{_lambda_.6} parent=39 // pred_check
        %p331 = pneg %p74
      $region46: #{_lambda_.6} parent=39 // pred_check_branch
        %333 = sbr.rel (%p331) target = $region48
      $region47: #{_lambda_.6} parent=39 // pred_region
        %p334 = scmp.lt.s32.totalorder %s23, 1
        %s335 = scalar_select %p334, %s23, 1
        %s336 = smul.addr %s335, 18
        %s337 = smul.addr %s336, 4
        %s338 = scalar_lea.vmem %s1, %s337
      $region48: #{_lambda_.6} parent=39 // pred_fallthru
        _
      // Predicated region
      $region49: #{_lambda_.6} parent=39 // pred_check
        %p339 = pneg %p100
      $region50: #{_lambda_.6} parent=39 // pred_check_branch
        %341 = sbr.rel (%p339) target = $region52
      $region51: #{_lambda_.6} parent=39 // pred_region
        %p342 = scmp.lt.s32.totalorder %s23, 1
        %s343 = scalar_select %p342, %s23, 1
        %s344 = smul.addr %s343, 18
        %s345 = smul.addr %s344, 4
        %s346 = scalar_lea.vmem %s2, %s345
      $region52: #{_lambda_.6} parent=39 // pred_fallthru
        _
      // Predicated region
      $region53: #{_lambda_.6} parent=39 // pred_check
        %p347 = pneg %p126
      $region54: #{_lambda_.6} parent=39 // pred_check_branch
        %349 = sbr.rel (%p347) target = $region56
      $region55: #{_lambda_.6} parent=39 // pred_region
        %p350 = scmp.lt.s32.totalorder %s23, 1
        %s351 = scalar_select %p350, %s23, 1
        %s352 = smul.addr %s351, 18
        %s353 = smul.addr %s352, 4
        %s354 = scalar_lea.vmem %s3, %s353
      $region56: #{_lambda_.6} parent=39 // pred_fallthru
        _
    $region40: #{_lambda_.6} parent=5 // pred_fallthru
      _
    %p355 = scmp.le.s32.totalorder 1, %s16
    %p356 = scmp.lt.s32.totalorder %s16, 5
    %p357 = pnand %p355, %p356
    %p358 = pneg %p357
    // Predicated region
    $region57: #{_lambda_.6} parent=5 // pred_check
      _
    $region58: #{_lambda_.6} parent=5 // pred_check_branch
      %360 = sbr.rel (%p357) target = $region60
    $region59: #{_lambda_.6} parent=5 // pred_region
      %s361 = ssub.s32 %s16, 1
      %p362 = scmp.lt.s32.totalorder %s25, 1
      %s363 = scalar_select %p362, %s25, 1
      %s364 = smul.addr %s363, 18
      %s365 = smul.addr %s364, 4
      %s366 = scalar_lea.vmem %s0, %s365
      %p367 = pneg %p54
      %p368 = pneg %p51
      %p369 = scmp.lt.s32.totalorder %s25, 1
      %s370 = scalar_select %p369, %s25, 1
      %s371 = smul.addr %s370, 18
      %s372 = smul.addr %s371, 4
      %s373 = scalar_lea.vmem %s1, %s372
      %p374 = pneg %p80
      %p375 = pneg %p77
      %p376 = scmp.lt.s32.totalorder %s25, 1
      %s377 = scalar_select %p376, %s25, 1
      %s378 = smul.addr %s377, 18
      %s379 = smul.addr %s378, 4
      %s380 = scalar_lea.vmem %s2, %s379
      %p381 = pneg %p106
      %p382 = pneg %p103
      %p383 = scmp.lt.s32.totalorder %s25, 1
      %s384 = scalar_select %p383, %s25, 1
      %s385 = smul.addr %s384, 18
      %s386 = smul.addr %s385, 4
      %s387 = scalar_lea.vmem %s3, %s386
      %p388 = pneg %p132
      %p389 = pneg %p129
      %p390 = pneg %p153
      %p391 = pneg %p150
      %p392 = pneg %p174
      %p393 = pneg %p171
      %p394 = pneg %p195
      %p395 = pneg %p192
      %p396 = pneg %p216
      %p397 = pneg %p213
      %p398 = pneg %p237
      %p399 = pneg %p234
      %p400 = pneg %p258
      %p401 = pneg %p255
      %p402 = pneg %p286
      %p403 = pneg %p283
      %s404 = smul.u32 4, %s26
      %p405 = scmp.lt.s32.totalorder %s25, 1
      %s406 = scalar_select %p405, %s25, 1
      %p407 = scmp.lt.s32.totalorder %s404, 7
      %s408 = scalar_select %p407, %s404, 7
      %s409 = smul.addr %s406, 8
      %s410 = sadd.s32 %s408, %s409
      %s411 = smul.addr %s410, 4
      %s412 = scalar_lea.vmem %s10, %s411
      %p413 = scmp.lt.s32.totalorder %s25, 1
      %s414 = scalar_select %p413, %s25, 1
      %s415 = smul.addr %s414, 18
      %s416 = smul.addr %s415, 4
      %s417 = scalar_lea.vmem %s0, %s416
      %p418 = scmp.lt.s32.totalorder %s25, 1
      %s419 = scalar_select %p418, %s25, 1
      %s420 = smul.addr %s419, 18
      %s421 = smul.addr %s420, 4
      %s422 = scalar_lea.vmem %s1, %s421
      %p423 = scmp.lt.s32.totalorder %s25, 1
      %s424 = scalar_select %p423, %s25, 1
      %s425 = smul.addr %s424, 18
      %s426 = smul.addr %s425, 4
      %s427 = scalar_lea.vmem %s2, %s426
      %p428 = scmp.lt.s32.totalorder %s25, 1
      %s429 = scalar_select %p428, %s25, 1
      %s430 = smul.addr %s429, 18
      %s431 = smul.addr %s430, 4
      %s432 = scalar_lea.vmem %s3, %s431
      %s433 = smul.u32 4, %s26
      %p434 = scmp.lt.s32.totalorder %s25, 1
      %s435 = scalar_select %p434, %s25, 1
      %p436 = scmp.lt.s32.totalorder %s433, 7
      %s437 = scalar_select %p436, %s433, 7
      %s438 = smul.addr %s435, 8
      %s439 = sadd.s32 %s437, %s438
      %s440 = smul.addr %s439, 4
      %s441 = scalar_lea.vmem %s10, %s440
      %s442 = smul.u32 4, %s26
      %s444 = smul.u32 %s26, 4
      %s445 = smul.u32 %s444, 2
      %s446 = smul.addr %s445, 4
      %s447 = scalar_lea.vmem %s417, %s446
      %v448 = vld [vmem:[%s447] sm:$0xf]
      %v449 = vld [vmem:[%s447 + $0x8] sm:$0xf]
      %v450 = vld [vmem:[%s447 + $0x10] sm:$0xf]
      %v451 = vld [vmem:[%s447 + $0x18] sm:$0xf]
      %v452 = vld [vmem:[%s4] sm:$0xf]
      %v453 = vld [vmem:[%s4 + $0x4] sm:$0xf]
      %v454 = vld [vmem:[%s4 + $0x8] sm:$0xf]
      %v455 = vld [vmem:[%s4 + $0xc] sm:$0xf]
      %v456 = vld [vmem:[%s4 + $0x10] sm:$0xf]
      %v457 = vld [vmem:[%s4 + $0x14] sm:$0xf]
      %v458 = vld [vmem:[%s4 + $0x18] sm:$0xf]
      %v459 = vld [vmem:[%s4 + $0x1c] sm:$0xf]
      %v460 = vld [vmem:[%s4 + $0x20] sm:$0xf]
      %v461 = vld [vmem:[%s4 + $0x24] sm:$0xf]
      %v462 = vld [vmem:[%s4 + $0x28] sm:$0xf]
      %v463 = vld [vmem:[%s4 + $0x2c] sm:$0xf]
      %v464 = vld [vmem:[%s4 + $0x30] sm:$0xf]
      %v465 = vld [vmem:[%s4 + $0x34] sm:$0xf]
      %v466 = vld [vmem:[%s4 + $0x38] sm:$0xf]
      %v467 = vld [vmem:[%s4 + $0x3c] sm:$0xf]
      %s468 = smul.addr %s445, 4
      %s469 = scalar_lea.vmem %s422, %s468
      %v470 = vld [vmem:[%s469] sm:$0xf]
      %v471 = vld [vmem:[%s469 + $0x8] sm:$0xf]
      %v472 = vld [vmem:[%s469 + $0x10] sm:$0xf]
      %v473 = vld [vmem:[%s469 + $0x18] sm:$0xf]
      %s474 = scalar_lea.vmem %s4, 64
      %v475 = vld [vmem:[%s474] sm:$0xf]
      %v476 = vld [vmem:[%s474 + $0x4] sm:$0xf]
      %v477 = vld [vmem:[%s474 + $0x8] sm:$0xf]
      %v478 = vld [vmem:[%s474 + $0xc] sm:$0xf]
      %v479 = vld [vmem:[%s474 + $0x10] sm:$0xf]
      %v480 = vld [vmem:[%s474 + $0x14] sm:$0xf]
      %v481 = vld [vmem:[%s474 + $0x18] sm:$0xf]
      %v482 = vld [vmem:[%s474 + $0x1c] sm:$0xf]
      %v483 = vld [vmem:[%s474 + $0x20] sm:$0xf]
      %v484 = vld [vmem:[%s474 + $0x24] sm:$0xf]
      %v485 = vld [vmem:[%s474 + $0x28] sm:$0xf]
      %v486 = vld [vmem:[%s474 + $0x2c] sm:$0xf]
      %v487 = vld [vmem:[%s474 + $0x30] sm:$0xf]
      %v488 = vld [vmem:[%s474 + $0x34] sm:$0xf]
      %v489 = vld [vmem:[%s474 + $0x38] sm:$0xf]
      %v490 = vld [vmem:[%s474 + $0x3c] sm:$0xf]
      %v495 = vunpack.c.l.b16 %v470
      %v496 = vunpack.c.l.b16 %v471
      %v497 = vunpack.c.l.b16 %v472
      %v498 = vunpack.c.l.b16 %v473
      %v499 = vpack.c.b16 %v496, %v495
      %v500 = vpack.c.b16 %v498, %v497
      %v519 = vunpack.c.l.b16 %v475
      %v520 = vunpack.c.l.b16 %v476
      %v521 = vunpack.c.l.b16 %v477
      %v522 = vunpack.c.l.b16 %v478
      %v523 = vunpack.c.l.b16 %v479
      %v524 = vunpack.c.l.b16 %v480
      %v525 = vunpack.c.l.b16 %v481
      %v526 = vunpack.c.l.b16 %v482
      %v527 = vunpack.c.l.b16 %v483
      %v528 = vunpack.c.l.b16 %v484
      %v529 = vunpack.c.l.b16 %v485
      %v530 = vunpack.c.l.b16 %v486
      %v531 = vunpack.c.l.b16 %v487
      %v532 = vunpack.c.l.b16 %v488
      %v533 = vunpack.c.l.b16 %v489
      %v534 = vunpack.c.l.b16 %v490
      %v535 = vpack.c.b16 %v520, %v519
      %v536 = vpack.c.b16 %v522, %v521
      %v537 = vpack.c.b16 %v524, %v523
      %v538 = vpack.c.b16 %v526, %v525
      %v539 = vpack.c.b16 %v528, %v527
      %v540 = vpack.c.b16 %v530, %v529
      %v541 = vpack.c.b16 %v532, %v531
      %v542 = vpack.c.b16 %v534, %v533
      %551 = vmatprep.subr.bf16.mxu0 0
      %552 = vmatpush1.bf16.msra.mxu0 %v542
      %553 = vmatprep.subr.bf16.mxu0 0
      %554 = vmatpush1.bf16.msra.mxu0 %v541
      %555 = vmatprep.subr.bf16.mxu0 0
      %556 = vmatpush1.bf16.msra.mxu0 %v540
      %557 = vmatprep.subr.bf16.mxu0 0
      %558 = vmatpush1.bf16.msra.mxu0 %v539
      %559 = vmatprep.subr.bf16.mxu0 0
      %560 = vmatpush1.bf16.msra.mxu0 %v538
      %561 = vmatprep.subr.bf16.mxu0 0
      %562 = vmatpush1.bf16.msra.mxu0 %v537
      %563 = vmatprep.subr.bf16.mxu0 0
      %564 = vmatpush1.bf16.msra.mxu0 %v536
      %565 = vmatprep.subr.bf16.mxu0 0
      %566 = vmatpush1.bf16.msra.mxu0 %v535
      %567 = vmatprep.subr.bf16.mxu0 0
      %568 = vmatpush2.bf16.msra.mxu0 0
      %569 = vmatprep.subr.bf16.mxu0 0
      %570 = vmatpush2.bf16.msra.mxu0 0
      %571 = vmatprep.subr.bf16.mxu0 0
      %572 = vmatpush2.bf16.msra.mxu0 0
      %573 = vmatprep.subr.bf16.mxu0 0
      %574 = vmatpush2.bf16.msra.mxu0 0
      %575 = vmatprep.subr.bf16.mxu0 0
      %576 = vmatpush2.bf16.msra.mxu0 0
      %577 = vmatprep.subr.bf16.mxu0 0
      %578 = vmatpush2.bf16.msra.mxu0 0
      %579 = vmatprep.subr.bf16.mxu0 0
      %580 = vmatpush2.bf16.msra.mxu0 0
      %581 = vmatprep.subr.bf16.mxu0 0
      %582 = vmatpush2.bf16.msra.mxu0 0
      %583 = vmatprep.mubr.bf16.mxu0 0
      %584 = vmatmul.mubr.bf16.gmra.mxu0 %v499
      %v585 = vpop.f32.mrf.mxu0
      %v586 = vadd.f32 0.0, %v585
      %v587 = vpop.f32.mrf.mxu0
      %v588 = vpop.f32.mrf.mxu0
      %v589 = vadd.f32 0.0, %v588
      %v590 = vpop.f32.mrf.mxu0
      %591 = vmatprep.mubr.bf16.mxu0 0
      %592 = vmatmul.mubr.bf16.gmra.mxu0 %v500
      %v593 = vpop.f32.mrf.mxu0
      %v594 = vadd.f32 0.0, %v593
      %v595 = vpop.f32.mrf.mxu0
      %v596 = vpop.f32.mrf.mxu0
      %v597 = vadd.f32 0.0, %v596
      %v598 = vpop.f32.mrf.mxu0
      %599 = vdwg.mxu0
      %v604 = vunpack.c.l.b16 %v448
      %v605 = vunpack.c.l.b16 %v449
      %v606 = vunpack.c.l.b16 %v450
      %v607 = vunpack.c.l.b16 %v451
      %v608 = vpack.c.b16 %v605, %v604
      %v609 = vpack.c.b16 %v607, %v606
      %v628 = vunpack.c.l.b16 %v452
      %v629 = vunpack.c.l.b16 %v453
      %v630 = vunpack.c.l.b16 %v454
      %v631 = vunpack.c.l.b16 %v455
      %v632 = vunpack.c.l.b16 %v456
      %v633 = vunpack.c.l.b16 %v457
      %v634 = vunpack.c.l.b16 %v458
      %v635 = vunpack.c.l.b16 %v459
      %v636 = vunpack.c.l.b16 %v460
      %v637 = vunpack.c.l.b16 %v461
      %v638 = vunpack.c.l.b16 %v462
      %v639 = vunpack.c.l.b16 %v463
      %v640 = vunpack.c.l.b16 %v464
      %v641 = vunpack.c.l.b16 %v465
      %v642 = vunpack.c.l.b16 %v466
      %v643 = vunpack.c.l.b16 %v467
      %v644 = vpack.c.b16 %v629, %v628
      %v645 = vpack.c.b16 %v631, %v630
      %v646 = vpack.c.b16 %v633, %v632
      %v647 = vpack.c.b16 %v635, %v634
      %v648 = vpack.c.b16 %v637, %v636
      %v649 = vpack.c.b16 %v639, %v638
      %v650 = vpack.c.b16 %v641, %v640
      %v651 = vpack.c.b16 %v643, %v642
      %660 = vmatprep.subr.bf16.mxu0 0
      %661 = vmatpush1.bf16.msra.mxu0 %v651
      %662 = vmatprep.subr.bf16.mxu0 0
      %663 = vmatpush1.bf16.msra.mxu0 %v650
      %664 = vmatprep.subr.bf16.mxu0 0
      %665 = vmatpush1.bf16.msra.mxu0 %v649
      %666 = vmatprep.subr.bf16.mxu0 0
      %667 = vmatpush1.bf16.msra.mxu0 %v648
      %668 = vmatprep.subr.bf16.mxu0 0
      %669 = vmatpush1.bf16.msra.mxu0 %v647
      %670 = vmatprep.subr.bf16.mxu0 0
      %671 = vmatpush1.bf16.msra.mxu0 %v646
      %672 = vmatprep.subr.bf16.mxu0 0
      %673 = vmatpush1.bf16.msra.mxu0 %v645
      %674 = vmatprep.subr.bf16.mxu0 0
      %675 = vmatpush1.bf16.msra.mxu0 %v644
      %676 = vmatprep.subr.bf16.mxu0 0
      %677 = vmatpush2.bf16.msra.mxu0 0
      %678 = vmatprep.subr.bf16.mxu0 0
      %679 = vmatpush2.bf16.msra.mxu0 0
      %680 = vmatprep.subr.bf16.mxu0 0
      %681 = vmatpush2.bf16.msra.mxu0 0
      %682 = vmatprep.subr.bf16.mxu0 0
      %683 = vmatpush2.bf16.msra.mxu0 0
      %684 = vmatprep.subr.bf16.mxu0 0
      %685 = vmatpush2.bf16.msra.mxu0 0
      %686 = vmatprep.subr.bf16.mxu0 0
      %687 = vmatpush2.bf16.msra.mxu0 0
      %688 = vmatprep.subr.bf16.mxu0 0
      %689 = vmatpush2.bf16.msra.mxu0 0
      %690 = vmatprep.subr.bf16.mxu0 0
      %691 = vmatpush2.bf16.msra.mxu0 0
      %692 = vmatprep.mubr.bf16.mxu0 0
      %693 = vmatmul.mubr.bf16.gmra.mxu0 %v608
      %v694 = vpop.f32.mrf.mxu0
      %v695 = vadd.f32 %v586, %v694
      %v696 = vpop.f32.mrf.mxu0
      %v697 = vpop.f32.mrf.mxu0
      %v698 = vadd.f32 %v589, %v697
      %v699 = vpop.f32.mrf.mxu0
      %700 = vmatprep.mubr.bf16.mxu0 0
      %701 = vmatmul.mubr.bf16.gmra.mxu0 %v609
      %v702 = vpop.f32.mrf.mxu0
      %v703 = vadd.f32 %v594, %v702
      %v704 = vpop.f32.mrf.mxu0
      %v705 = vpop.f32.mrf.mxu0
      %v706 = vadd.f32 %v597, %v705
      %v707 = vpop.f32.mrf.mxu0
      %708 = vdwg.mxu0
      %v709 = vld [vmem:[%s447] sm:$0xf]
      %v710 = vld [vmem:[%s447 + $0x4] sm:$0x1]
      %v711 = vld [vmem:[%s447 + $0x8] sm:$0xf]
      %v712 = vld [vmem:[%s447 + $0xc] sm:$0x1]
      %v713 = vld [vmem:[%s447 + $0x10] sm:$0xf]
      %v714 = vld [vmem:[%s447 + $0x14] sm:$0x1]
      %v715 = vld [vmem:[%s447 + $0x18] sm:$0xf]
      %v716 = vld [vmem:[%s447 + $0x1c] sm:$0x1]
      %vm717 = vsmask.f32 3328
      %vm718 = vsmask.f32 7440
      %vm719 = vmor %vm717, %vm718
      %v721 = vshrl.u32 %v709, 16
      %v723 = vrot.slane %v721, 4
      %v724 = vshll.u32 %v709, 16
      %v726 = vrot.slane %v724, 5
      %v727 = vor.u32 %v723, %v726
      %v728 = vrot.slane %v727, 4
      %v730 = vshll.u32 %v710, 16
      %v732 = vrot.slane %v730, 5
      %v733 = vsel %vm719, %v728, %v732
      %v735 = vshrl.u32 %v711, 16
      %v737 = vrot.slane %v735, 4
      %v738 = vshll.u32 %v711, 16
      %v740 = vrot.slane %v738, 5
      %v741 = vor.u32 %v737, %v740
      %v742 = vrot.slane %v741, 4
      %v744 = vshll.u32 %v712, 16
      %v746 = vrot.slane %v744, 5
      %v747 = vsel %vm719, %v742, %v746
      %v749 = vshrl.u32 %v713, 16
      %v751 = vrot.slane %v749, 4
      %v752 = vshll.u32 %v713, 16
      %v754 = vrot.slane %v752, 5
      %v755 = vor.u32 %v751, %v754
      %v756 = vrot.slane %v755, 4
      %v758 = vshll.u32 %v714, 16
      %v760 = vrot.slane %v758, 5
      %v761 = vsel %vm719, %v756, %v760
      %v763 = vshrl.u32 %v715, 16
      %v765 = vrot.slane %v763, 4
      %v766 = vshll.u32 %v715, 16
      %v768 = vrot.slane %v766, 5
      %v769 = vor.u32 %v765, %v768
      %v770 = vrot.slane %v769, 4
      %v772 = vshll.u32 %v716, 16
      %v774 = vrot.slane %v772, 5
      %v775 = vsel %vm719, %v770, %v774
      %s776 = scalar_lea.vmem %s4, 128
      %v777 = vld [vmem:[%s776] sm:$0xf]
      %v778 = vld [vmem:[%s776 + $0x4] sm:$0xf]
      %v779 = vld [vmem:[%s776 + $0x8] sm:$0xf]
      %v780 = vld [vmem:[%s776 + $0xc] sm:$0xf]
      %v781 = vld [vmem:[%s776 + $0x10] sm:$0xf]
      %v782 = vld [vmem:[%s776 + $0x14] sm:$0xf]
      %v783 = vld [vmem:[%s776 + $0x18] sm:$0xf]
      %v784 = vld [vmem:[%s776 + $0x1c] sm:$0xf]
      %v785 = vld [vmem:[%s776 + $0x20] sm:$0xf]
      %v786 = vld [vmem:[%s776 + $0x24] sm:$0xf]
      %v787 = vld [vmem:[%s776 + $0x28] sm:$0xf]
      %v788 = vld [vmem:[%s776 + $0x2c] sm:$0xf]
      %v789 = vld [vmem:[%s776 + $0x30] sm:$0xf]
      %v790 = vld [vmem:[%s776 + $0x34] sm:$0xf]
      %v791 = vld [vmem:[%s776 + $0x38] sm:$0xf]
      %v792 = vld [vmem:[%s776 + $0x3c] sm:$0xf]
      %v793 = vunpack.c.l.b16 %v733
      %v794 = vunpack.c.l.b16 %v747
      %v795 = vunpack.c.l.b16 %v761
      %v796 = vunpack.c.l.b16 %v775
      %v797 = vpack.c.b16 %v794, %v793
      %v798 = vpack.c.b16 %v796, %v795
      %v817 = vunpack.c.l.b16 %v777
      %v818 = vunpack.c.l.b16 %v778
      %v819 = vunpack.c.l.b16 %v779
      %v820 = vunpack.c.l.b16 %v780
      %v821 = vunpack.c.l.b16 %v781
      %v822 = vunpack.c.l.b16 %v782
      %v823 = vunpack.c.l.b16 %v783
      %v824 = vunpack.c.l.b16 %v784
      %v825 = vunpack.c.l.b16 %v785
      %v826 = vunpack.c.l.b16 %v786
      %v827 = vunpack.c.l.b16 %v787
      %v828 = vunpack.c.l.b16 %v788
      %v829 = vunpack.c.l.b16 %v789
      %v830 = vunpack.c.l.b16 %v790
      %v831 = vunpack.c.l.b16 %v791
      %v832 = vunpack.c.l.b16 %v792
      %v833 = vpack.c.b16 %v818, %v817
      %v834 = vpack.c.b16 %v820, %v819
      %v835 = vpack.c.b16 %v822, %v821
      %v836 = vpack.c.b16 %v824, %v823
      %v837 = vpack.c.b16 %v826, %v825
      %v838 = vpack.c.b16 %v828, %v827
      %v839 = vpack.c.b16 %v830, %v829
      %v840 = vpack.c.b16 %v832, %v831
      %849 = vmatprep.subr.bf16.mxu0 0
      %850 = vmatpush1.bf16.msra.mxu0 %v840
      %851 = vmatprep.subr.bf16.mxu0 0
      %852 = vmatpush1.bf16.msra.mxu0 %v839
      %853 = vmatprep.subr.bf16.mxu0 0
      %854 = vmatpush1.bf16.msra.mxu0 %v838
      %855 = vmatprep.subr.bf16.mxu0 0
      %856 = vmatpush1.bf16.msra.mxu0 %v837
      %857 = vmatprep.subr.bf16.mxu0 0
      %858 = vmatpush1.bf16.msra.mxu0 %v836
      %859 = vmatprep.subr.bf16.mxu0 0
      %860 = vmatpush1.bf16.msra.mxu0 %v835
      %861 = vmatprep.subr.bf16.mxu0 0
      %862 = vmatpush1.bf16.msra.mxu0 %v834
      %863 = vmatprep.subr.bf16.mxu0 0
      %864 = vmatpush1.bf16.msra.mxu0 %v833
      %865 = vmatprep.subr.bf16.mxu0 0
      %866 = vmatpush2.bf16.msra.mxu0 0
      %867 = vmatprep.subr.bf16.mxu0 0
      %868 = vmatpush2.bf16.msra.mxu0 0
      %869 = vmatprep.subr.bf16.mxu0 0
      %870 = vmatpush2.bf16.msra.mxu0 0
      %871 = vmatprep.subr.bf16.mxu0 0
      %872 = vmatpush2.bf16.msra.mxu0 0
      %873 = vmatprep.subr.bf16.mxu0 0
      %874 = vmatpush2.bf16.msra.mxu0 0
      %875 = vmatprep.subr.bf16.mxu0 0
      %876 = vmatpush2.bf16.msra.mxu0 0
      %877 = vmatprep.subr.bf16.mxu0 0
      %878 = vmatpush2.bf16.msra.mxu0 0
      %879 = vmatprep.subr.bf16.mxu0 0
      %880 = vmatpush2.bf16.msra.mxu0 0
      %881 = vmatprep.mubr.bf16.mxu0 0
      %882 = vmatmul.mubr.bf16.gmra.mxu0 %v797
      %v883 = vpop.f32.mrf.mxu0
      %v884 = vadd.f32 0.0, %v883
      %v885 = vpop.f32.mrf.mxu0
      %v886 = vpop.f32.mrf.mxu0
      %v887 = vadd.f32 0.0, %v886
      %v888 = vpop.f32.mrf.mxu0
      %889 = vmatprep.mubr.bf16.mxu0 0
      %890 = vmatmul.mubr.bf16.gmra.mxu0 %v798
      %v891 = vpop.f32.mrf.mxu0
      %v892 = vadd.f32 0.0, %v891
      %v893 = vpop.f32.mrf.mxu0
      %v894 = vpop.f32.mrf.mxu0
      %v895 = vadd.f32 0.0, %v894
      %v896 = vpop.f32.mrf.mxu0
      %897 = vdwg.mxu0
      %v898 = vadd.f32 %v695, %v884
      %v899 = vadd.f32 %v698, %v887
      %v900 = vadd.f32 %v703, %v892
      %v901 = vadd.f32 %v706, %v895
      %s902 = smul.addr %s445, 4
      %s903 = scalar_lea.vmem %s427, %s902
      %v904 = vld [vmem:[%s903] sm:$0xf]
      %v905 = vld [vmem:[%s903 + $0x8] sm:$0xf]
      %v906 = vld [vmem:[%s903 + $0x10] sm:$0xf]
      %v907 = vld [vmem:[%s903 + $0x18] sm:$0xf]
      %s908 = scalar_lea.vmem %s4, 192
      %v909 = vld [vmem:[%s908] sm:$0xf]
      %v910 = vld [vmem:[%s908 + $0x4] sm:$0xf]
      %v911 = vld [vmem:[%s908 + $0x8] sm:$0xf]
      %v912 = vld [vmem:[%s908 + $0xc] sm:$0xf]
      %v913 = vld [vmem:[%s908 + $0x10] sm:$0xf]
      %v914 = vld [vmem:[%s908 + $0x14] sm:$0xf]
      %v915 = vld [vmem:[%s908 + $0x18] sm:$0xf]
      %v916 = vld [vmem:[%s908 + $0x1c] sm:$0xf]
      %v917 = vld [vmem:[%s908 + $0x20] sm:$0xf]
      %v918 = vld [vmem:[%s908 + $0x24] sm:$0xf]
      %v919 = vld [vmem:[%s908 + $0x28] sm:$0xf]
      %v920 = vld [vmem:[%s908 + $0x2c] sm:$0xf]
      %v921 = vld [vmem:[%s908 + $0x30] sm:$0xf]
      %v922 = vld [vmem:[%s908 + $0x34] sm:$0xf]
      %v923 = vld [vmem:[%s908 + $0x38] sm:$0xf]
      %v924 = vld [vmem:[%s908 + $0x3c] sm:$0xf]
      %v929 = vunpack.c.l.b16 %v904
      %v930 = vunpack.c.l.b16 %v905
      %v931 = vunpack.c.l.b16 %v906
      %v932 = vunpack.c.l.b16 %v907
      %v933 = vpack.c.b16 %v930, %v929
      %v934 = vpack.c.b16 %v932, %v931
      %v953 = vunpack.c.l.b16 %v909
      %v954 = vunpack.c.l.b16 %v910
      %v955 = vunpack.c.l.b16 %v911
      %v956 = vunpack.c.l.b16 %v912
      %v957 = vunpack.c.l.b16 %v913
      %v958 = vunpack.c.l.b16 %v914
      %v959 = vunpack.c.l.b16 %v915
      %v960 = vunpack.c.l.b16 %v916
      %v961 = vunpack.c.l.b16 %v917
      %v962 = vunpack.c.l.b16 %v918
      %v963 = vunpack.c.l.b16 %v919
      %v964 = vunpack.c.l.b16 %v920
      %v965 = vunpack.c.l.b16 %v921
      %v966 = vunpack.c.l.b16 %v922
      %v967 = vunpack.c.l.b16 %v923
      %v968 = vunpack.c.l.b16 %v924
      %v969 = vpack.c.b16 %v954, %v953
      %v970 = vpack.c.b16 %v956, %v955
      %v971 = vpack.c.b16 %v958, %v957
      %v972 = vpack.c.b16 %v960, %v959
      %v973 = vpack.c.b16 %v962, %v961
      %v974 = vpack.c.b16 %v964, %v963
      %v975 = vpack.c.b16 %v966, %v965
      %v976 = vpack.c.b16 %v968, %v967
      %985 = vmatprep.subr.bf16.mxu0 0
      %986 = vmatpush1.bf16.msra.mxu0 %v976
      %987 = vmatprep.subr.bf16.mxu0 0
      %988 = vmatpush1.bf16.msra.mxu0 %v975
      %989 = vmatprep.subr.bf16.mxu0 0
      %990 = vmatpush1.bf16.msra.mxu0 %v974
      %991 = vmatprep.subr.bf16.mxu0 0
      %992 = vmatpush1.bf16.msra.mxu0 %v973
      %993 = vmatprep.subr.bf16.mxu0 0
      %994 = vmatpush1.bf16.msra.mxu0 %v972
      %995 = vmatprep.subr.bf16.mxu0 0
      %996 = vmatpush1.bf16.msra.mxu0 %v971
      %997 = vmatprep.subr.bf16.mxu0 0
      %998 = vmatpush1.bf16.msra.mxu0 %v970
      %999 = vmatprep.subr.bf16.mxu0 0
      %1000 = vmatpush1.bf16.msra.mxu0 %v969
      %1001 = vmatprep.subr.bf16.mxu0 0
      %1002 = vmatpush2.bf16.msra.mxu0 0
      %1003 = vmatprep.subr.bf16.mxu0 0
      %1004 = vmatpush2.bf16.msra.mxu0 0
      %1005 = vmatprep.subr.bf16.mxu0 0
      %1006 = vmatpush2.bf16.msra.mxu0 0
      %1007 = vmatprep.subr.bf16.mxu0 0
      %1008 = vmatpush2.bf16.msra.mxu0 0
      %1009 = vmatprep.subr.bf16.mxu0 0
      %1010 = vmatpush2.bf16.msra.mxu0 0
      %1011 = vmatprep.subr.bf16.mxu0 0
      %1012 = vmatpush2.bf16.msra.mxu0 0
      %1013 = vmatprep.subr.bf16.mxu0 0
      %1014 = vmatpush2.bf16.msra.mxu0 0
      %1015 = vmatprep.subr.bf16.mxu0 0
      %1016 = vmatpush2.bf16.msra.mxu0 0
      %1017 = vmatprep.mubr.bf16.mxu0 0
      %1018 = vmatmul.mubr.bf16.gmra.mxu0 %v933
      %v1019 = vpop.f32.mrf.mxu0
      %v1020 = vadd.f32 0.0, %v1019
      %v1021 = vpop.f32.mrf.mxu0
      %v1022 = vpop.f32.mrf.mxu0
      %v1023 = vadd.f32 0.0, %v1022
      %v1024 = vpop.f32.mrf.mxu0
      %1025 = vmatprep.mubr.bf16.mxu0 0
      %1026 = vmatmul.mubr.bf16.gmra.mxu0 %v934
      %v1027 = vpop.f32.mrf.mxu0
      %v1028 = vadd.f32 0.0, %v1027
      %v1029 = vpop.f32.mrf.mxu0
      %v1030 = vpop.f32.mrf.mxu0
      %v1031 = vadd.f32 0.0, %v1030
      %v1032 = vpop.f32.mrf.mxu0
      %1033 = vdwg.mxu0
      %v1034 = vadd.f32 %v898, %v1020
      %v1035 = vadd.f32 %v899, %v1023
      %v1036 = vadd.f32 %v900, %v1028
      %v1037 = vadd.f32 %v901, %v1031
      %s1038 = smul.addr %s445, 4
      %s1039 = scalar_lea.vmem %s432, %s1038
      %v1040 = vld [vmem:[%s1039] sm:$0xf]
      %v1041 = vld [vmem:[%s1039 + $0x8] sm:$0xf]
      %v1042 = vld [vmem:[%s1039 + $0x10] sm:$0xf]
      %v1043 = vld [vmem:[%s1039 + $0x18] sm:$0xf]
      %s1044 = scalar_lea.vmem %s4, 256
      %v1045 = vld [vmem:[%s1044] sm:$0xf]
      %v1046 = vld [vmem:[%s1044 + $0x4] sm:$0xf]
      %v1047 = vld [vmem:[%s1044 + $0x8] sm:$0xf]
      %v1048 = vld [vmem:[%s1044 + $0xc] sm:$0xf]
      %v1049 = vld [vmem:[%s1044 + $0x10] sm:$0xf]
      %v1050 = vld [vmem:[%s1044 + $0x14] sm:$0xf]
      %v1051 = vld [vmem:[%s1044 + $0x18] sm:$0xf]
      %v1052 = vld [vmem:[%s1044 + $0x1c] sm:$0xf]
      %v1053 = vld [vmem:[%s1044 + $0x20] sm:$0xf]
      %v1054 = vld [vmem:[%s1044 + $0x24] sm:$0xf]
      %v1055 = vld [vmem:[%s1044 + $0x28] sm:$0xf]
      %v1056 = vld [vmem:[%s1044 + $0x2c] sm:$0xf]
      %v1057 = vld [vmem:[%s1044 + $0x30] sm:$0xf]
      %v1058 = vld [vmem:[%s1044 + $0x34] sm:$0xf]
      %v1059 = vld [vmem:[%s1044 + $0x38] sm:$0xf]
      %v1060 = vld [vmem:[%s1044 + $0x3c] sm:$0xf]
      %v1065 = vunpack.c.l.b16 %v1040
      %v1066 = vunpack.c.l.b16 %v1041
      %v1067 = vunpack.c.l.b16 %v1042
      %v1068 = vunpack.c.l.b16 %v1043
      %v1069 = vpack.c.b16 %v1066, %v1065
      %v1070 = vpack.c.b16 %v1068, %v1067
      %v1089 = vunpack.c.l.b16 %v1045
      %v1090 = vunpack.c.l.b16 %v1046
      %v1091 = vunpack.c.l.b16 %v1047
      %v1092 = vunpack.c.l.b16 %v1048
      %v1093 = vunpack.c.l.b16 %v1049
      %v1094 = vunpack.c.l.b16 %v1050
      %v1095 = vunpack.c.l.b16 %v1051
      %v1096 = vunpack.c.l.b16 %v1052
      %v1097 = vunpack.c.l.b16 %v1053
      %v1098 = vunpack.c.l.b16 %v1054
      %v1099 = vunpack.c.l.b16 %v1055
      %v1100 = vunpack.c.l.b16 %v1056
      %v1101 = vunpack.c.l.b16 %v1057
      %v1102 = vunpack.c.l.b16 %v1058
      %v1103 = vunpack.c.l.b16 %v1059
      %v1104 = vunpack.c.l.b16 %v1060
      %v1105 = vpack.c.b16 %v1090, %v1089
      %v1106 = vpack.c.b16 %v1092, %v1091
      %v1107 = vpack.c.b16 %v1094, %v1093
      %v1108 = vpack.c.b16 %v1096, %v1095
      %v1109 = vpack.c.b16 %v1098, %v1097
      %v1110 = vpack.c.b16 %v1100, %v1099
      %v1111 = vpack.c.b16 %v1102, %v1101
      %v1112 = vpack.c.b16 %v1104, %v1103
      %1121 = vmatprep.subr.bf16.mxu0 0
      %1122 = vmatpush1.bf16.msra.mxu0 %v1112
      %1123 = vmatprep.subr.bf16.mxu0 0
      %1124 = vmatpush1.bf16.msra.mxu0 %v1111
      %1125 = vmatprep.subr.bf16.mxu0 0
      %1126 = vmatpush1.bf16.msra.mxu0 %v1110
      %1127 = vmatprep.subr.bf16.mxu0 0
      %1128 = vmatpush1.bf16.msra.mxu0 %v1109
      %1129 = vmatprep.subr.bf16.mxu0 0
      %1130 = vmatpush1.bf16.msra.mxu0 %v1108
      %1131 = vmatprep.subr.bf16.mxu0 0
      %1132 = vmatpush1.bf16.msra.mxu0 %v1107
      %1133 = vmatprep.subr.bf16.mxu0 0
      %1134 = vmatpush1.bf16.msra.mxu0 %v1106
      %1135 = vmatprep.subr.bf16.mxu0 0
      %1136 = vmatpush1.bf16.msra.mxu0 %v1105
      %1137 = vmatprep.subr.bf16.mxu0 0
      %1138 = vmatpush2.bf16.msra.mxu0 0
      %1139 = vmatprep.subr.bf16.mxu0 0
      %1140 = vmatpush2.bf16.msra.mxu0 0
      %1141 = vmatprep.subr.bf16.mxu0 0
      %1142 = vmatpush2.bf16.msra.mxu0 0
      %1143 = vmatprep.subr.bf16.mxu0 0
      %1144 = vmatpush2.bf16.msra.mxu0 0
      %1145 = vmatprep.subr.bf16.mxu0 0
      %1146 = vmatpush2.bf16.msra.mxu0 0
      %1147 = vmatprep.subr.bf16.mxu0 0
      %1148 = vmatpush2.bf16.msra.mxu0 0
      %1149 = vmatprep.subr.bf16.mxu0 0
      %1150 = vmatpush2.bf16.msra.mxu0 0
      %1151 = vmatprep.subr.bf16.mxu0 0
      %1152 = vmatpush2.bf16.msra.mxu0 0
      %1153 = vmatprep.mubr.bf16.mxu0 0
      %1154 = vmatmul.mubr.bf16.gmra.mxu0 %v1069
      %v1155 = vpop.f32.mrf.mxu0
      %v1156 = vadd.f32 0.0, %v1155
      %v1157 = vpop.f32.mrf.mxu0
      %v1158 = vpop.f32.mrf.mxu0
      %v1159 = vadd.f32 0.0, %v1158
      %v1160 = vpop.f32.mrf.mxu0
      %1161 = vmatprep.mubr.bf16.mxu0 0
      %1162 = vmatmul.mubr.bf16.gmra.mxu0 %v1070
      %v1163 = vpop.f32.mrf.mxu0
      %v1164 = vadd.f32 0.0, %v1163
      %v1165 = vpop.f32.mrf.mxu0
      %v1166 = vpop.f32.mrf.mxu0
      %v1167 = vadd.f32 0.0, %v1166
      %v1168 = vpop.f32.mrf.mxu0
      %1169 = vdwg.mxu0
      %v1170 = vadd.f32 %v1034, %v1156
      %v1171 = vadd.f32 %v1035, %v1159
      %v1172 = vadd.f32 %v1036, %v1164
      %v1173 = vadd.f32 %v1037, %v1167
      %v1174 = vld [vmem:[%s903] sm:$0xf]
      %v1175 = vld [vmem:[%s903 + $0x4] sm:$0x1]
      %v1176 = vld [vmem:[%s903 + $0x8] sm:$0xf]
      %v1177 = vld [vmem:[%s903 + $0xc] sm:$0x1]
      %v1178 = vld [vmem:[%s903 + $0x10] sm:$0xf]
      %v1179 = vld [vmem:[%s903 + $0x14] sm:$0x1]
      %v1180 = vld [vmem:[%s903 + $0x18] sm:$0xf]
      %v1181 = vld [vmem:[%s903 + $0x1c] sm:$0x1]
      %v1183 = vshrl.u32 %v1174, 16
      %v1185 = vrot.slane %v1183, 4
      %v1186 = vshll.u32 %v1174, 16
      %v1188 = vrot.slane %v1186, 5
      %v1189 = vor.u32 %v1185, %v1188
      %v1190 = vrot.slane %v1189, 4
      %v1192 = vshll.u32 %v1175, 16
      %v1194 = vrot.slane %v1192, 5
      %v1195 = vsel %vm719, %v1190, %v1194
      %v1197 = vshrl.u32 %v1176, 16
      %v1199 = vrot.slane %v1197, 4
      %v1200 = vshll.u32 %v1176, 16
      %v1202 = vrot.slane %v1200, 5
      %v1203 = vor.u32 %v1199, %v1202
      %v1204 = vrot.slane %v1203, 4
      %v1206 = vshll.u32 %v1177, 16
      %v1208 = vrot.slane %v1206, 5
      %v1209 = vsel %vm719, %v1204, %v1208
      %v1211 = vshrl.u32 %v1178, 16
      %v1213 = vrot.slane %v1211, 4
      %v1214 = vshll.u32 %v1178, 16
      %v1216 = vrot.slane %v1214, 5
      %v1217 = vor.u32 %v1213, %v1216
      %v1218 = vrot.slane %v1217, 4
      %v1220 = vshll.u32 %v1179, 16
      %v1222 = vrot.slane %v1220, 5
      %v1223 = vsel %vm719, %v1218, %v1222
      %v1225 = vshrl.u32 %v1180, 16
      %v1227 = vrot.slane %v1225, 4
      %v1228 = vshll.u32 %v1180, 16
      %v1230 = vrot.slane %v1228, 5
      %v1231 = vor.u32 %v1227, %v1230
      %v1232 = vrot.slane %v1231, 4
      %v1234 = vshll.u32 %v1181, 16
      %v1236 = vrot.slane %v1234, 5
      %v1237 = vsel %vm719, %v1232, %v1236
      %s1238 = scalar_lea.vmem %s4, 320
      %v1239 = vld [vmem:[%s1238] sm:$0xf]
      %v1240 = vld [vmem:[%s1238 + $0x4] sm:$0xf]
      %v1241 = vld [vmem:[%s1238 + $0x8] sm:$0xf]
      %v1242 = vld [vmem:[%s1238 + $0xc] sm:$0xf]
      %v1243 = vld [vmem:[%s1238 + $0x10] sm:$0xf]
      %v1244 = vld [vmem:[%s1238 + $0x14] sm:$0xf]
      %v1245 = vld [vmem:[%s1238 + $0x18] sm:$0xf]
      %v1246 = vld [vmem:[%s1238 + $0x1c] sm:$0xf]
      %v1247 = vld [vmem:[%s1238 + $0x20] sm:$0xf]
      %v1248 = vld [vmem:[%s1238 + $0x24] sm:$0xf]
      %v1249 = vld [vmem:[%s1238 + $0x28] sm:$0xf]
      %v1250 = vld [vmem:[%s1238 + $0x2c] sm:$0xf]
      %v1251 = vld [vmem:[%s1238 + $0x30] sm:$0xf]
      %v1252 = vld [vmem:[%s1238 + $0x34] sm:$0xf]
      %v1253 = vld [vmem:[%s1238 + $0x38] sm:$0xf]
      %v1254 = vld [vmem:[%s1238 + $0x3c] sm:$0xf]
      %v1255 = vunpack.c.l.b16 %v1195
      %v1256 = vunpack.c.l.b16 %v1209
      %v1257 = vunpack.c.l.b16 %v1223
      %v1258 = vunpack.c.l.b16 %v1237
      %v1259 = vpack.c.b16 %v1256, %v1255
      %v1260 = vpack.c.b16 %v1258, %v1257
      %v1279 = vunpack.c.l.b16 %v1239
      %v1280 = vunpack.c.l.b16 %v1240
      %v1281 = vunpack.c.l.b16 %v1241
      %v1282 = vunpack.c.l.b16 %v1242
      %v1283 = vunpack.c.l.b16 %v1243
      %v1284 = vunpack.c.l.b16 %v1244
      %v1285 = vunpack.c.l.b16 %v1245
      %v1286 = vunpack.c.l.b16 %v1246
      %v1287 = vunpack.c.l.b16 %v1247
      %v1288 = vunpack.c.l.b16 %v1248
      %v1289 = vunpack.c.l.b16 %v1249
      %v1290 = vunpack.c.l.b16 %v1250
      %v1291 = vunpack.c.l.b16 %v1251
      %v1292 = vunpack.c.l.b16 %v1252
      %v1293 = vunpack.c.l.b16 %v1253
      %v1294 = vunpack.c.l.b16 %v1254
      %v1295 = vpack.c.b16 %v1280, %v1279
      %v1296 = vpack.c.b16 %v1282, %v1281
      %v1297 = vpack.c.b16 %v1284, %v1283
      %v1298 = vpack.c.b16 %v1286, %v1285
      %v1299 = vpack.c.b16 %v1288, %v1287
      %v1300 = vpack.c.b16 %v1290, %v1289
      %v1301 = vpack.c.b16 %v1292, %v1291
      %v1302 = vpack.c.b16 %v1294, %v1293
      %1311 = vmatprep.subr.bf16.mxu0 0
      %1312 = vmatpush1.bf16.msra.mxu0 %v1302
      %1313 = vmatprep.subr.bf16.mxu0 0
      %1314 = vmatpush1.bf16.msra.mxu0 %v1301
      %1315 = vmatprep.subr.bf16.mxu0 0
      %1316 = vmatpush1.bf16.msra.mxu0 %v1300
      %1317 = vmatprep.subr.bf16.mxu0 0
      %1318 = vmatpush1.bf16.msra.mxu0 %v1299
      %1319 = vmatprep.subr.bf16.mxu0 0
      %1320 = vmatpush1.bf16.msra.mxu0 %v1298
      %1321 = vmatprep.subr.bf16.mxu0 0
      %1322 = vmatpush1.bf16.msra.mxu0 %v1297
      %1323 = vmatprep.subr.bf16.mxu0 0
      %1324 = vmatpush1.bf16.msra.mxu0 %v1296
      %1325 = vmatprep.subr.bf16.mxu0 0
      %1326 = vmatpush1.bf16.msra.mxu0 %v1295
      %1327 = vmatprep.subr.bf16.mxu0 0
      %1328 = vmatpush2.bf16.msra.mxu0 0
      %1329 = vmatprep.subr.bf16.mxu0 0
      %1330 = vmatpush2.bf16.msra.mxu0 0
      %1331 = vmatprep.subr.bf16.mxu0 0
      %1332 = vmatpush2.bf16.msra.mxu0 0
      %1333 = vmatprep.subr.bf16.mxu0 0
      %1334 = vmatpush2.bf16.msra.mxu0 0
      %1335 = vmatprep.subr.bf16.mxu0 0
      %1336 = vmatpush2.bf16.msra.mxu0 0
      %1337 = vmatprep.subr.bf16.mxu0 0
      %1338 = vmatpush2.bf16.msra.mxu0 0
      %1339 = vmatprep.subr.bf16.mxu0 0
      %1340 = vmatpush2.bf16.msra.mxu0 0
      %1341 = vmatprep.subr.bf16.mxu0 0
      %1342 = vmatpush2.bf16.msra.mxu0 0
      %1343 = vmatprep.mubr.bf16.mxu0 0
      %1344 = vmatmul.mubr.bf16.gmra.mxu0 %v1259
      %v1345 = vpop.f32.mrf.mxu0
      %v1346 = vadd.f32 0.0, %v1345
      %v1347 = vpop.f32.mrf.mxu0
      %v1348 = vpop.f32.mrf.mxu0
      %v1349 = vadd.f32 0.0, %v1348
      %v1350 = vpop.f32.mrf.mxu0
      %1351 = vmatprep.mubr.bf16.mxu0 0
      %1352 = vmatmul.mubr.bf16.gmra.mxu0 %v1260
      %v1353 = vpop.f32.mrf.mxu0
      %v1354 = vadd.f32 0.0, %v1353
      %v1355 = vpop.f32.mrf.mxu0
      %v1356 = vpop.f32.mrf.mxu0
      %v1357 = vadd.f32 0.0, %v1356
      %v1358 = vpop.f32.mrf.mxu0
      %1359 = vdwg.mxu0
      %v1360 = vadd.f32 %v1170, %v1346
      %v1361 = vadd.f32 %v1171, %v1349
      %v1362 = vadd.f32 %v1172, %v1354
      %v1363 = vadd.f32 %v1173, %v1357
      %s1364 = sadd.s32 %s444, 1
      %s1365 = smul.u32 %s1364, 2
      %s1366 = smul.addr %s1365, 4
      %s1367 = scalar_lea.vmem %s417, %s1366
      %v1368 = vld [vmem:[%s1367] sm:$0xf]
      %v1369 = vld [vmem:[%s1367 + $0x8] sm:$0xf]
      %v1370 = vld [vmem:[%s1367 + $0x10] sm:$0xf]
      %v1371 = vld [vmem:[%s1367 + $0x18] sm:$0xf]
      %s1372 = scalar_lea.vmem %s4, 384
      %v1373 = vld [vmem:[%s1372] sm:$0xf]
      %v1374 = vld [vmem:[%s1372 + $0x4] sm:$0xf]
      %v1375 = vld [vmem:[%s1372 + $0x8] sm:$0xf]
      %v1376 = vld [vmem:[%s1372 + $0xc] sm:$0xf]
      %v1377 = vld [vmem:[%s1372 + $0x10] sm:$0xf]
      %v1378 = vld [vmem:[%s1372 + $0x14] sm:$0xf]
      %v1379 = vld [vmem:[%s1372 + $0x18] sm:$0xf]
      %v1380 = vld [vmem:[%s1372 + $0x1c] sm:$0xf]
      %v1381 = vld [vmem:[%s1372 + $0x20] sm:$0xf]
      %v1382 = vld [vmem:[%s1372 + $0x24] sm:$0xf]
      %v1383 = vld [vmem:[%s1372 + $0x28] sm:$0xf]
      %v1384 = vld [vmem:[%s1372 + $0x2c] sm:$0xf]
      %v1385 = vld [vmem:[%s1372 + $0x30] sm:$0xf]
      %v1386 = vld [vmem:[%s1372 + $0x34] sm:$0xf]
      %v1387 = vld [vmem:[%s1372 + $0x38] sm:$0xf]
      %v1388 = vld [vmem:[%s1372 + $0x3c] sm:$0xf]
      %v1393 = vunpack.c.l.b16 %v1368
      %v1394 = vunpack.c.l.b16 %v1369
      %v1395 = vunpack.c.l.b16 %v1370
      %v1396 = vunpack.c.l.b16 %v1371
      %v1397 = vpack.c.b16 %v1394, %v1393
      %v1398 = vpack.c.b16 %v1396, %v1395
      %v1417 = vunpack.c.l.b16 %v1373
      %v1418 = vunpack.c.l.b16 %v1374
      %v1419 = vunpack.c.l.b16 %v1375
      %v1420 = vunpack.c.l.b16 %v1376
      %v1421 = vunpack.c.l.b16 %v1377
      %v1422 = vunpack.c.l.b16 %v1378
      %v1423 = vunpack.c.l.b16 %v1379
      %v1424 = vunpack.c.l.b16 %v1380
      %v1425 = vunpack.c.l.b16 %v1381
      %v1426 = vunpack.c.l.b16 %v1382
      %v1427 = vunpack.c.l.b16 %v1383
      %v1428 = vunpack.c.l.b16 %v1384
      %v1429 = vunpack.c.l.b16 %v1385
      %v1430 = vunpack.c.l.b16 %v1386
      %v1431 = vunpack.c.l.b16 %v1387
      %v1432 = vunpack.c.l.b16 %v1388
      %v1433 = vpack.c.b16 %v1418, %v1417
      %v1434 = vpack.c.b16 %v1420, %v1419
      %v1435 = vpack.c.b16 %v1422, %v1421
      %v1436 = vpack.c.b16 %v1424, %v1423
      %v1437 = vpack.c.b16 %v1426, %v1425
      %v1438 = vpack.c.b16 %v1428, %v1427
      %v1439 = vpack.c.b16 %v1430, %v1429
      %v1440 = vpack.c.b16 %v1432, %v1431
      %1449 = vmatprep.subr.bf16.mxu0 0
      %1450 = vmatpush1.bf16.msra.mxu0 %v1440
      %1451 = vmatprep.subr.bf16.mxu0 0
      %1452 = vmatpush1.bf16.msra.mxu0 %v1439
      %1453 = vmatprep.subr.bf16.mxu0 0
      %1454 = vmatpush1.bf16.msra.mxu0 %v1438
      %1455 = vmatprep.subr.bf16.mxu0 0
      %1456 = vmatpush1.bf16.msra.mxu0 %v1437
      %1457 = vmatprep.subr.bf16.mxu0 0
      %1458 = vmatpush1.bf16.msra.mxu0 %v1436
      %1459 = vmatprep.subr.bf16.mxu0 0
      %1460 = vmatpush1.bf16.msra.mxu0 %v1435
      %1461 = vmatprep.subr.bf16.mxu0 0
      %1462 = vmatpush1.bf16.msra.mxu0 %v1434
      %1463 = vmatprep.subr.bf16.mxu0 0
      %1464 = vmatpush1.bf16.msra.mxu0 %v1433
      %1465 = vmatprep.subr.bf16.mxu0 0
      %1466 = vmatpush2.bf16.msra.mxu0 0
      %1467 = vmatprep.subr.bf16.mxu0 0
      %1468 = vmatpush2.bf16.msra.mxu0 0
      %1469 = vmatprep.subr.bf16.mxu0 0
      %1470 = vmatpush2.bf16.msra.mxu0 0
      %1471 = vmatprep.subr.bf16.mxu0 0
      %1472 = vmatpush2.bf16.msra.mxu0 0
      %1473 = vmatprep.subr.bf16.mxu0 0
      %1474 = vmatpush2.bf16.msra.mxu0 0
      %1475 = vmatprep.subr.bf16.mxu0 0
      %1476 = vmatpush2.bf16.msra.mxu0 0
      %1477 = vmatprep.subr.bf16.mxu0 0
      %1478 = vmatpush2.bf16.msra.mxu0 0
      %1479 = vmatprep.subr.bf16.mxu0 0
      %1480 = vmatpush2.bf16.msra.mxu0 0
      %1481 = vmatprep.mubr.bf16.mxu0 0
      %1482 = vmatmul.mubr.bf16.gmra.mxu0 %v1397
      %v1483 = vpop.f32.mrf.mxu0
      %v1484 = vadd.f32 0.0, %v1483
      %v1485 = vpop.f32.mrf.mxu0
      %v1486 = vpop.f32.mrf.mxu0
      %v1487 = vadd.f32 0.0, %v1486
      %v1488 = vpop.f32.mrf.mxu0
      %1489 = vmatprep.mubr.bf16.mxu0 0
      %1490 = vmatmul.mubr.bf16.gmra.mxu0 %v1398
      %v1491 = vpop.f32.mrf.mxu0
      %v1492 = vadd.f32 0.0, %v1491
      %v1493 = vpop.f32.mrf.mxu0
      %v1494 = vpop.f32.mrf.mxu0
      %v1495 = vadd.f32 0.0, %v1494
      %v1496 = vpop.f32.mrf.mxu0
      %1497 = vdwg.mxu0
      %v1498 = vadd.f32 %v1360, %v1484
      %v1499 = vadd.f32 %v1361, %v1487
      %v1500 = vadd.f32 %v1362, %v1492
      %v1501 = vadd.f32 %v1363, %v1495
      %s1502 = smul.addr %s1365, 4
      %s1503 = scalar_lea.vmem %s422, %s1502
      %v1504 = vld [vmem:[%s1503] sm:$0xf]
      %v1505 = vld [vmem:[%s1503 + $0x8] sm:$0xf]
      %v1506 = vld [vmem:[%s1503 + $0x10] sm:$0xf]
      %v1507 = vld [vmem:[%s1503 + $0x18] sm:$0xf]
      %s1508 = scalar_lea.vmem %s4, 448
      %v1509 = vld [vmem:[%s1508] sm:$0xf]
      %v1510 = vld [vmem:[%s1508 + $0x4] sm:$0xf]
      %v1511 = vld [vmem:[%s1508 + $0x8] sm:$0xf]
      %v1512 = vld [vmem:[%s1508 + $0xc] sm:$0xf]
      %v1513 = vld [vmem:[%s1508 + $0x10] sm:$0xf]
      %v1514 = vld [vmem:[%s1508 + $0x14] sm:$0xf]
      %v1515 = vld [vmem:[%s1508 + $0x18] sm:$0xf]
      %v1516 = vld [vmem:[%s1508 + $0x1c] sm:$0xf]
      %v1517 = vld [vmem:[%s1508 + $0x20] sm:$0xf]
      %v1518 = vld [vmem:[%s1508 + $0x24] sm:$0xf]
      %v1519 = vld [vmem:[%s1508 + $0x28] sm:$0xf]
      %v1520 = vld [vmem:[%s1508 + $0x2c] sm:$0xf]
      %v1521 = vld [vmem:[%s1508 + $0x30] sm:$0xf]
      %v1522 = vld [vmem:[%s1508 + $0x34] sm:$0xf]
      %v1523 = vld [vmem:[%s1508 + $0x38] sm:$0xf]
      %v1524 = vld [vmem:[%s1508 + $0x3c] sm:$0xf]
      %v1529 = vunpack.c.l.b16 %v1504
      %v1530 = vunpack.c.l.b16 %v1505
      %v1531 = vunpack.c.l.b16 %v1506
      %v1532 = vunpack.c.l.b16 %v1507
      %v1533 = vpack.c.b16 %v1530, %v1529
      %v1534 = vpack.c.b16 %v1532, %v1531
      %v1553 = vunpack.c.l.b16 %v1509
      %v1554 = vunpack.c.l.b16 %v1510
      %v1555 = vunpack.c.l.b16 %v1511
      %v1556 = vunpack.c.l.b16 %v1512
      %v1557 = vunpack.c.l.b16 %v1513
      %v1558 = vunpack.c.l.b16 %v1514
      %v1559 = vunpack.c.l.b16 %v1515
      %v1560 = vunpack.c.l.b16 %v1516
      %v1561 = vunpack.c.l.b16 %v1517
      %v1562 = vunpack.c.l.b16 %v1518
      %v1563 = vunpack.c.l.b16 %v1519
      %v1564 = vunpack.c.l.b16 %v1520
      %v1565 = vunpack.c.l.b16 %v1521
      %v1566 = vunpack.c.l.b16 %v1522
      %v1567 = vunpack.c.l.b16 %v1523
      %v1568 = vunpack.c.l.b16 %v1524
      %v1569 = vpack.c.b16 %v1554, %v1553
      %v1570 = vpack.c.b16 %v1556, %v1555
      %v1571 = vpack.c.b16 %v1558, %v1557
      %v1572 = vpack.c.b16 %v1560, %v1559
      %v1573 = vpack.c.b16 %v1562, %v1561
      %v1574 = vpack.c.b16 %v1564, %v1563
      %v1575 = vpack.c.b16 %v1566, %v1565
      %v1576 = vpack.c.b16 %v1568, %v1567
      %1585 = vmatprep.subr.bf16.mxu0 0
      %1586 = vmatpush1.bf16.msra.mxu0 %v1576
      %1587 = vmatprep.subr.bf16.mxu0 0
      %1588 = vmatpush1.bf16.msra.mxu0 %v1575
      %1589 = vmatprep.subr.bf16.mxu0 0
      %1590 = vmatpush1.bf16.msra.mxu0 %v1574
      %1591 = vmatprep.subr.bf16.mxu0 0
      %1592 = vmatpush1.bf16.msra.mxu0 %v1573
      %1593 = vmatprep.subr.bf16.mxu0 0
      %1594 = vmatpush1.bf16.msra.mxu0 %v1572
      %1595 = vmatprep.subr.bf16.mxu0 0
      %1596 = vmatpush1.bf16.msra.mxu0 %v1571
      %1597 = vmatprep.subr.bf16.mxu0 0
      %1598 = vmatpush1.bf16.msra.mxu0 %v1570
      %1599 = vmatprep.subr.bf16.mxu0 0
      %1600 = vmatpush1.bf16.msra.mxu0 %v1569
      %1601 = vmatprep.subr.bf16.mxu0 0
      %1602 = vmatpush2.bf16.msra.mxu0 0
      %1603 = vmatprep.subr.bf16.mxu0 0
      %1604 = vmatpush2.bf16.msra.mxu0 0
      %1605 = vmatprep.subr.bf16.mxu0 0
      %1606 = vmatpush2.bf16.msra.mxu0 0
      %1607 = vmatprep.subr.bf16.mxu0 0
      %1608 = vmatpush2.bf16.msra.mxu0 0
      %1609 = vmatprep.subr.bf16.mxu0 0
      %1610 = vmatpush2.bf16.msra.mxu0 0
      %1611 = vmatprep.subr.bf16.mxu0 0
      %1612 = vmatpush2.bf16.msra.mxu0 0
      %1613 = vmatprep.subr.bf16.mxu0 0
      %1614 = vmatpush2.bf16.msra.mxu0 0
      %1615 = vmatprep.subr.bf16.mxu0 0
      %1616 = vmatpush2.bf16.msra.mxu0 0
      %1617 = vmatprep.mubr.bf16.mxu0 0
      %1618 = vmatmul.mubr.bf16.gmra.mxu0 %v1533
      %v1619 = vpop.f32.mrf.mxu0
      %v1620 = vadd.f32 0.0, %v1619
      %v1621 = vpop.f32.mrf.mxu0
      %v1622 = vpop.f32.mrf.mxu0
      %v1623 = vadd.f32 0.0, %v1622
      %v1624 = vpop.f32.mrf.mxu0
      %1625 = vmatprep.mubr.bf16.mxu0 0
      %1626 = vmatmul.mubr.bf16.gmra.mxu0 %v1534
      %v1627 = vpop.f32.mrf.mxu0
      %v1628 = vadd.f32 0.0, %v1627
      %v1629 = vpop.f32.mrf.mxu0
      %v1630 = vpop.f32.mrf.mxu0
      %v1631 = vadd.f32 0.0, %v1630
      %v1632 = vpop.f32.mrf.mxu0
      %1633 = vdwg.mxu0
      %v1634 = vadd.f32 %v1498, %v1620
      %v1635 = vadd.f32 %v1499, %v1623
      %v1636 = vadd.f32 %v1500, %v1628
      %v1637 = vadd.f32 %v1501, %v1631
      %v1638 = vld [vmem:[%s1367] sm:$0xf]
      %v1639 = vld [vmem:[%s1367 + $0x4] sm:$0x1]
      %v1640 = vld [vmem:[%s1367 + $0x8] sm:$0xf]
      %v1641 = vld [vmem:[%s1367 + $0xc] sm:$0x1]
      %v1642 = vld [vmem:[%s1367 + $0x10] sm:$0xf]
      %v1643 = vld [vmem:[%s1367 + $0x14] sm:$0x1]
      %v1644 = vld [vmem:[%s1367 + $0x18] sm:$0xf]
      %v1645 = vld [vmem:[%s1367 + $0x1c] sm:$0x1]
      %v1647 = vshrl.u32 %v1638, 16
      %v1649 = vrot.slane %v1647, 4
      %v1650 = vshll.u32 %v1638, 16
      %v1652 = vrot.slane %v1650, 5
      %v1653 = vor.u32 %v1649, %v1652
      %v1654 = vrot.slane %v1653, 4
      %v1656 = vshll.u32 %v1639, 16
      %v1658 = vrot.slane %v1656, 5
      %v1659 = vsel %vm719, %v1654, %v1658
      %v1661 = vshrl.u32 %v1640, 16
      %v1663 = vrot.slane %v1661, 4
      %v1664 = vshll.u32 %v1640, 16
      %v1666 = vrot.slane %v1664, 5
      %v1667 = vor.u32 %v1663, %v1666
      %v1668 = vrot.slane %v1667, 4
      %v1670 = vshll.u32 %v1641, 16
      %v1672 = vrot.slane %v1670, 5
      %v1673 = vsel %vm719, %v1668, %v1672
      %v1675 = vshrl.u32 %v1642, 16
      %v1677 = vrot.slane %v1675, 4
      %v1678 = vshll.u32 %v1642, 16
      %v1680 = vrot.slane %v1678, 5
      %v1681 = vor.u32 %v1677, %v1680
      %v1682 = vrot.slane %v1681, 4
      %v1684 = vshll.u32 %v1643, 16
      %v1686 = vrot.slane %v1684, 5
      %v1687 = vsel %vm719, %v1682, %v1686
      %v1689 = vshrl.u32 %v1644, 16
      %v1691 = vrot.slane %v1689, 4
      %v1692 = vshll.u32 %v1644, 16
      %v1694 = vrot.slane %v1692, 5
      %v1695 = vor.u32 %v1691, %v1694
      %v1696 = vrot.slane %v1695, 4
      %v1698 = vshll.u32 %v1645, 16
      %v1700 = vrot.slane %v1698, 5
      %v1701 = vsel %vm719, %v1696, %v1700
      %s1702 = scalar_lea.vmem %s4, 512
      %v1703 = vld [vmem:[%s1702] sm:$0xf]
      %v1704 = vld [vmem:[%s1702 + $0x4] sm:$0xf]
      %v1705 = vld [vmem:[%s1702 + $0x8] sm:$0xf]
      %v1706 = vld [vmem:[%s1702 + $0xc] sm:$0xf]
      %v1707 = vld [vmem:[%s1702 + $0x10] sm:$0xf]
      %v1708 = vld [vmem:[%s1702 + $0x14] sm:$0xf]
      %v1709 = vld [vmem:[%s1702 + $0x18] sm:$0xf]
      %v1710 = vld [vmem:[%s1702 + $0x1c] sm:$0xf]
      %v1711 = vld [vmem:[%s1702 + $0x20] sm:$0xf]
      %v1712 = vld [vmem:[%s1702 + $0x24] sm:$0xf]
      %v1713 = vld [vmem:[%s1702 + $0x28] sm:$0xf]
      %v1714 = vld [vmem:[%s1702 + $0x2c] sm:$0xf]
      %v1715 = vld [vmem:[%s1702 + $0x30] sm:$0xf]
      %v1716 = vld [vmem:[%s1702 + $0x34] sm:$0xf]
      %v1717 = vld [vmem:[%s1702 + $0x38] sm:$0xf]
      %v1718 = vld [vmem:[%s1702 + $0x3c] sm:$0xf]
      %v1719 = vunpack.c.l.b16 %v1659
      %v1720 = vunpack.c.l.b16 %v1673
      %v1721 = vunpack.c.l.b16 %v1687
      %v1722 = vunpack.c.l.b16 %v1701
      %v1723 = vpack.c.b16 %v1720, %v1719
      %v1724 = vpack.c.b16 %v1722, %v1721
      %v1743 = vunpack.c.l.b16 %v1703
      %v1744 = vunpack.c.l.b16 %v1704
      %v1745 = vunpack.c.l.b16 %v1705
      %v1746 = vunpack.c.l.b16 %v1706
      %v1747 = vunpack.c.l.b16 %v1707
      %v1748 = vunpack.c.l.b16 %v1708
      %v1749 = vunpack.c.l.b16 %v1709
      %v1750 = vunpack.c.l.b16 %v1710
      %v1751 = vunpack.c.l.b16 %v1711
      %v1752 = vunpack.c.l.b16 %v1712
      %v1753 = vunpack.c.l.b16 %v1713
      %v1754 = vunpack.c.l.b16 %v1714
      %v1755 = vunpack.c.l.b16 %v1715
      %v1756 = vunpack.c.l.b16 %v1716
      %v1757 = vunpack.c.l.b16 %v1717
      %v1758 = vunpack.c.l.b16 %v1718
      %v1759 = vpack.c.b16 %v1744, %v1743
      %v1760 = vpack.c.b16 %v1746, %v1745
      %v1761 = vpack.c.b16 %v1748, %v1747
      %v1762 = vpack.c.b16 %v1750, %v1749
      %v1763 = vpack.c.b16 %v1752, %v1751
      %v1764 = vpack.c.b16 %v1754, %v1753
      %v1765 = vpack.c.b16 %v1756, %v1755
      %v1766 = vpack.c.b16 %v1758, %v1757
      %1775 = vmatprep.subr.bf16.mxu0 0
      %1776 = vmatpush1.bf16.msra.mxu0 %v1766
      %1777 = vmatprep.subr.bf16.mxu0 0
      %1778 = vmatpush1.bf16.msra.mxu0 %v1765
      %1779 = vmatprep.subr.bf16.mxu0 0
      %1780 = vmatpush1.bf16.msra.mxu0 %v1764
      %1781 = vmatprep.subr.bf16.mxu0 0
      %1782 = vmatpush1.bf16.msra.mxu0 %v1763
      %1783 = vmatprep.subr.bf16.mxu0 0
      %1784 = vmatpush1.bf16.msra.mxu0 %v1762
      %1785 = vmatprep.subr.bf16.mxu0 0
      %1786 = vmatpush1.bf16.msra.mxu0 %v1761
      %1787 = vmatprep.subr.bf16.mxu0 0
      %1788 = vmatpush1.bf16.msra.mxu0 %v1760
      %1789 = vmatprep.subr.bf16.mxu0 0
      %1790 = vmatpush1.bf16.msra.mxu0 %v1759
      %1791 = vmatprep.subr.bf16.mxu0 0
      %1792 = vmatpush2.bf16.msra.mxu0 0
      %1793 = vmatprep.subr.bf16.mxu0 0
      %1794 = vmatpush2.bf16.msra.mxu0 0
      %1795 = vmatprep.subr.bf16.mxu0 0
      %1796 = vmatpush2.bf16.msra.mxu0 0
      %1797 = vmatprep.subr.bf16.mxu0 0
      %1798 = vmatpush2.bf16.msra.mxu0 0
      %1799 = vmatprep.subr.bf16.mxu0 0
      %1800 = vmatpush2.bf16.msra.mxu0 0
      %1801 = vmatprep.subr.bf16.mxu0 0
      %1802 = vmatpush2.bf16.msra.mxu0 0
      %1803 = vmatprep.subr.bf16.mxu0 0
      %1804 = vmatpush2.bf16.msra.mxu0 0
      %1805 = vmatprep.subr.bf16.mxu0 0
      %1806 = vmatpush2.bf16.msra.mxu0 0
      %1807 = vmatprep.mubr.bf16.mxu0 0
      %1808 = vmatmul.mubr.bf16.gmra.mxu0 %v1723
      %v1809 = vpop.f32.mrf.mxu0
      %v1810 = vadd.f32 0.0, %v1809
      %v1811 = vpop.f32.mrf.mxu0
      %v1812 = vpop.f32.mrf.mxu0
      %v1813 = vadd.f32 0.0, %v1812
      %v1814 = vpop.f32.mrf.mxu0
      %1815 = vmatprep.mubr.bf16.mxu0 0
      %1816 = vmatmul.mubr.bf16.gmra.mxu0 %v1724
      %v1817 = vpop.f32.mrf.mxu0
      %v1818 = vadd.f32 0.0, %v1817
      %v1819 = vpop.f32.mrf.mxu0
      %v1820 = vpop.f32.mrf.mxu0
      %v1821 = vadd.f32 0.0, %v1820
      %v1822 = vpop.f32.mrf.mxu0
      %1823 = vdwg.mxu0
      %v1824 = vadd.f32 %v1634, %v1810
      %v1825 = vadd.f32 %v1635, %v1813
      %v1826 = vadd.f32 %v1636, %v1818
      %v1827 = vadd.f32 %v1637, %v1821
      %v1828 = vld [vmem:[%s5] sm:$0x1]
      %v1830 = vlaneseq
      %v1831 = vshrl.u32 %v1830, 7
      %v1832 = vsub.s32 0, %v1831
      %v1833 = vrot.slane %v1828, %v1832
      %v1835 = vadd.f32 %v1824, %v1833
      %v1836 = vadd.f32 %v1825, %v1833
      %v1837 = vadd.f32 %v1826, %v1833
      %v1838 = vadd.f32 %v1827, %v1833
      %v1839 = vmax.f32 %v1835, 0.0
      %v1840 = vmax.f32 %v1836, 0.0
      %v1841 = vmax.f32 %v1837, 0.0
      %v1842 = vmax.f32 %v1838, 0.0
      %v1843 = vpack.c.bf16 %v1840, %v1839
      %v1844 = vpack.c.bf16 %v1842, %v1841
      %v1845 = vld [vmem:[%s6] sm:$0xf]
      %v1846 = vld [vmem:[%s6 + $0x4] sm:$0xf]
      %v1847 = vld [vmem:[%s6 + $0x8] sm:$0xf]
      %v1848 = vld [vmem:[%s6 + $0xc] sm:$0xf]
      %v1849 = vld [vmem:[%s6 + $0x10] sm:$0xf]
      %v1850 = vld [vmem:[%s6 + $0x14] sm:$0xf]
      %v1851 = vld [vmem:[%s6 + $0x18] sm:$0xf]
      %v1852 = vld [vmem:[%s6 + $0x1c] sm:$0xf]
      %v1853 = vld [vmem:[%s6 + $0x20] sm:$0xf]
      %v1854 = vld [vmem:[%s6 + $0x24] sm:$0xf]
      %v1855 = vld [vmem:[%s6 + $0x28] sm:$0xf]
      %v1856 = vld [vmem:[%s6 + $0x2c] sm:$0xf]
      %v1857 = vld [vmem:[%s6 + $0x30] sm:$0xf]
      %v1858 = vld [vmem:[%s6 + $0x34] sm:$0xf]
      %v1859 = vld [vmem:[%s6 + $0x38] sm:$0xf]
      %v1860 = vld [vmem:[%s6 + $0x3c] sm:$0xf]
      %v1861 = vld [vmem:[%s7] sm:$0x1]
      %v1863 = vlaneseq
      %v1864 = vshrl.u32 %v1863, 7
      %v1865 = vsub.s32 0, %v1864
      %v1866 = vrot.slane %v1861, %v1865
      %v1884 = vunpack.c.l.b16 %v1845
      %v1885 = vunpack.c.l.b16 %v1846
      %v1886 = vunpack.c.l.b16 %v1847
      %v1887 = vunpack.c.l.b16 %v1848
      %v1888 = vunpack.c.l.b16 %v1849
      %v1889 = vunpack.c.l.b16 %v1850
      %v1890 = vunpack.c.l.b16 %v1851
      %v1891 = vunpack.c.l.b16 %v1852
      %v1892 = vunpack.c.l.b16 %v1853
      %v1893 = vunpack.c.l.b16 %v1854
      %v1894 = vunpack.c.l.b16 %v1855
      %v1895 = vunpack.c.l.b16 %v1856
      %v1896 = vunpack.c.l.b16 %v1857
      %v1897 = vunpack.c.l.b16 %v1858
      %v1898 = vunpack.c.l.b16 %v1859
      %v1899 = vunpack.c.l.b16 %v1860
      %v1900 = vpack.c.b16 %v1885, %v1884
      %v1901 = vpack.c.b16 %v1887, %v1886
      %v1902 = vpack.c.b16 %v1889, %v1888
      %v1903 = vpack.c.b16 %v1891, %v1890
      %v1904 = vpack.c.b16 %v1893, %v1892
      %v1905 = vpack.c.b16 %v1895, %v1894
      %v1906 = vpack.c.b16 %v1897, %v1896
      %v1907 = vpack.c.b16 %v1899, %v1898
      %1916 = vmatprep.subr.bf16.mxu0 0
      %1917 = vmatpush1.bf16.msra.mxu0 %v1907
      %1918 = vmatprep.subr.bf16.mxu0 0
      %1919 = vmatpush1.bf16.msra.mxu0 %v1906
      %1920 = vmatprep.subr.bf16.mxu0 0
      %1921 = vmatpush1.bf16.msra.mxu0 %v1905
      %1922 = vmatprep.subr.bf16.mxu0 0
      %1923 = vmatpush1.bf16.msra.mxu0 %v1904
      %1924 = vmatprep.subr.bf16.mxu0 0
      %1925 = vmatpush1.bf16.msra.mxu0 %v1903
      %1926 = vmatprep.subr.bf16.mxu0 0
      %1927 = vmatpush1.bf16.msra.mxu0 %v1902
      %1928 = vmatprep.subr.bf16.mxu0 0
      %1929 = vmatpush1.bf16.msra.mxu0 %v1901
      %1930 = vmatprep.subr.bf16.mxu0 0
      %1931 = vmatpush1.bf16.msra.mxu0 %v1900
      %1932 = vmatprep.subr.bf16.mxu0 0
      %1933 = vmatpush2.bf16.msra.mxu0 0
      %1934 = vmatprep.subr.bf16.mxu0 0
      %1935 = vmatpush2.bf16.msra.mxu0 0
      %1936 = vmatprep.subr.bf16.mxu0 0
      %1937 = vmatpush2.bf16.msra.mxu0 0
      %1938 = vmatprep.subr.bf16.mxu0 0
      %1939 = vmatpush2.bf16.msra.mxu0 0
      %1940 = vmatprep.subr.bf16.mxu0 0
      %1941 = vmatpush2.bf16.msra.mxu0 0
      %1942 = vmatprep.subr.bf16.mxu0 0
      %1943 = vmatpush2.bf16.msra.mxu0 0
      %1944 = vmatprep.subr.bf16.mxu0 0
      %1945 = vmatpush2.bf16.msra.mxu0 0
      %1946 = vmatprep.subr.bf16.mxu0 0
      %1947 = vmatpush2.bf16.msra.mxu0 0
      %1948 = vmatprep.mubr.bf16.mxu0 0
      %1949 = vmatmul.mubr.bf16.gmra.mxu0 %v1843
      %v1950 = vpop.f32.mrf.mxu0
      %v1951 = vadd.f32 %v1866, %v1950
      %v1952 = vpop.f32.mrf.mxu0
      %v1953 = vpop.f32.mrf.mxu0
      %v1954 = vadd.f32 %v1866, %v1953
      %v1955 = vpop.f32.mrf.mxu0
      %1956 = vmatprep.mubr.bf16.mxu0 0
      %1957 = vmatmul.mubr.bf16.gmra.mxu0 %v1844
      %v1958 = vpop.f32.mrf.mxu0
      %v1959 = vadd.f32 %v1866, %v1958
      %v1960 = vpop.f32.mrf.mxu0
      %v1961 = vpop.f32.mrf.mxu0
      %v1962 = vadd.f32 %v1866, %v1961
      %v1963 = vpop.f32.mrf.mxu0
      %1964 = vdwg.mxu0
      %v1965 = vld [vmem:[%s8] sm:$0xf]
      %v1966 = vld [vmem:[%s8 + $0x4] sm:$0xf]
      %v1967 = vld [vmem:[%s8 + $0x8] sm:$0xf]
      %v1968 = vld [vmem:[%s8 + $0xc] sm:$0xf]
      %v1969 = vld [vmem:[%s8 + $0x10] sm:$0xf]
      %v1970 = vld [vmem:[%s8 + $0x14] sm:$0xf]
      %v1971 = vld [vmem:[%s8 + $0x18] sm:$0xf]
      %v1972 = vld [vmem:[%s8 + $0x1c] sm:$0xf]
      %v1973 = vld [vmem:[%s8 + $0x20] sm:$0xf]
      %v1974 = vld [vmem:[%s8 + $0x24] sm:$0xf]
      %v1975 = vld [vmem:[%s8 + $0x28] sm:$0xf]
      %v1976 = vld [vmem:[%s8 + $0x2c] sm:$0xf]
      %v1977 = vld [vmem:[%s8 + $0x30] sm:$0xf]
      %v1978 = vld [vmem:[%s8 + $0x34] sm:$0xf]
      %v1979 = vld [vmem:[%s8 + $0x38] sm:$0xf]
      %v1980 = vld [vmem:[%s8 + $0x3c] sm:$0xf]
      %v1997 = vunpack.c.l.b16 %v1965
      %v1998 = vunpack.c.l.b16 %v1966
      %v1999 = vunpack.c.l.b16 %v1967
      %v2000 = vunpack.c.l.b16 %v1968
      %v2001 = vunpack.c.l.b16 %v1969
      %v2002 = vunpack.c.l.b16 %v1970
      %v2003 = vunpack.c.l.b16 %v1971
      %v2004 = vunpack.c.l.b16 %v1972
      %v2005 = vunpack.c.l.b16 %v1973
      %v2006 = vunpack.c.l.b16 %v1974
      %v2007 = vunpack.c.l.b16 %v1975
      %v2008 = vunpack.c.l.b16 %v1976
      %v2009 = vunpack.c.l.b16 %v1977
      %v2010 = vunpack.c.l.b16 %v1978
      %v2011 = vunpack.c.l.b16 %v1979
      %v2012 = vunpack.c.l.b16 %v1980
      %v2013 = vpack.c.b16 %v1998, %v1997
      %v2014 = vpack.c.b16 %v2000, %v1999
      %v2015 = vpack.c.b16 %v2002, %v2001
      %v2016 = vpack.c.b16 %v2004, %v2003
      %v2017 = vpack.c.b16 %v2006, %v2005
      %v2018 = vpack.c.b16 %v2008, %v2007
      %v2019 = vpack.c.b16 %v2010, %v2009
      %v2020 = vpack.c.b16 %v2012, %v2011
      %2029 = vmatprep.subr.bf16.mxu0 0
      %2030 = vmatpush1.bf16.msra.mxu0 %v2020
      %2031 = vmatprep.subr.bf16.mxu0 0
      %2032 = vmatpush1.bf16.msra.mxu0 %v2019
      %2033 = vmatprep.subr.bf16.mxu0 0
      %2034 = vmatpush1.bf16.msra.mxu0 %v2018
      %2035 = vmatprep.subr.bf16.mxu0 0
      %2036 = vmatpush1.bf16.msra.mxu0 %v2017
      %2037 = vmatprep.subr.bf16.mxu0 0
      %2038 = vmatpush1.bf16.msra.mxu0 %v2016
      %2039 = vmatprep.subr.bf16.mxu0 0
      %2040 = vmatpush1.bf16.msra.mxu0 %v2015
      %2041 = vmatprep.subr.bf16.mxu0 0
      %2042 = vmatpush1.bf16.msra.mxu0 %v2014
      %2043 = vmatprep.subr.bf16.mxu0 0
      %2044 = vmatpush1.bf16.msra.mxu0 %v2013
      %2045 = vmatprep.subr.bf16.mxu0 0
      %2046 = vmatpush2.bf16.msra.mxu0 0
      %2047 = vmatprep.subr.bf16.mxu0 0
      %2048 = vmatpush2.bf16.msra.mxu0 0
      %2049 = vmatprep.subr.bf16.mxu0 0
      %2050 = vmatpush2.bf16.msra.mxu0 0
      %2051 = vmatprep.subr.bf16.mxu0 0
      %2052 = vmatpush2.bf16.msra.mxu0 0
      %2053 = vmatprep.subr.bf16.mxu0 0
      %2054 = vmatpush2.bf16.msra.mxu0 0
      %2055 = vmatprep.subr.bf16.mxu0 0
      %2056 = vmatpush2.bf16.msra.mxu0 0
      %2057 = vmatprep.subr.bf16.mxu0 0
      %2058 = vmatpush2.bf16.msra.mxu0 0
      %2059 = vmatprep.subr.bf16.mxu0 0
      %2060 = vmatpush2.bf16.msra.mxu0 0
      %2061 = vmatprep.mubr.bf16.mxu0 0
      %2062 = vmatmul.mubr.bf16.gmra.mxu0 %v1069
      %v2063 = vpop.f32.mrf.mxu0
      %v2064 = vadd.f32 0.0, %v2063
      %v2065 = vpop.f32.mrf.mxu0
      %v2066 = vpop.f32.mrf.mxu0
      %v2067 = vadd.f32 0.0, %v2066
      %v2068 = vpop.f32.mrf.mxu0
      %2069 = vmatprep.mubr.bf16.mxu0 0
      %2070 = vmatmul.mubr.bf16.gmra.mxu0 %v1070
      %v2071 = vpop.f32.mrf.mxu0
      %v2072 = vadd.f32 0.0, %v2071
      %v2073 = vpop.f32.mrf.mxu0
      %v2074 = vpop.f32.mrf.mxu0
      %v2075 = vadd.f32 0.0, %v2074
      %v2076 = vpop.f32.mrf.mxu0
      %2077 = vdwg.mxu0
      %v2078 = vadd.f32 %v1951, %v2064
      %v2079 = vadd.f32 %v1954, %v2067
      %v2080 = vadd.f32 %v1959, %v2072
      %v2081 = vadd.f32 %v1962, %v2075
      %v2082 = vld [vmem:[%s9] sm:$0x1]
      %v2084 = vlaneseq
      %v2085 = vshrl.u32 %v2084, 7
      %v2086 = vsub.s32 0, %v2085
      %v2087 = vrot.slane %v2082, %v2086
      %v2089 = vadd.f32 %v2078, %v2087
      %v2090 = vadd.f32 %v2079, %v2087
      %v2091 = vadd.f32 %v2080, %v2087
      %v2092 = vadd.f32 %v2081, %v2087
      %v2093 = vmax.f32 %v2089, 0.0
      %v2094 = vmax.f32 %v2090, 0.0
      %v2095 = vmax.f32 %v2091, 0.0
      %v2096 = vmax.f32 %v2092, 0.0
      %v2097 = vpack.c.bf16 %v2093, %v2093
      %v2098 = vpack.c.bf16 %v2094, %v2094
      %v2099 = vpack.c.bf16 %v2095, %v2095
      %v2100 = vpack.c.bf16 %v2096, %v2096
      %2101 = vst [vmem:[%s441] sm:$0xf] %v2097
      %2102 = vst [vmem:[%s441 + $0x4] sm:$0xf] %v2098
      %2103 = vst [vmem:[%s441 + $0x8] sm:$0xf] %v2099
      %2104 = vst [vmem:[%s441 + $0xc] sm:$0xf] %v2100
      %s2105 = smul.u32 4, %s26
      %p2106 = scmp.lt.s32.totalorder %s25, 1
      %s2107 = scalar_select %p2106, %s25, 1
      %p2108 = scmp.lt.s32.totalorder %s2105, 7
      %s2109 = scalar_select %p2108, %s2105, 7
      %s2110 = smul.addr %s2107, 8
      %s2111 = sadd.s32 %s2109, %s2110
      %s2112 = smul.addr %s2111, 4
      %s2113 = scalar_lea.vmem %s10, %s2112
      // Predicated region
      $region61: #{_lambda_.6} parent=59 // pred_check
        %p2114 = pneg %p283
      $region62: #{_lambda_.6} parent=59 // pred_check_branch
        %2116 = sbr.rel (%p2114) target = $region64
      $region63: #{_lambda_.6} parent=59 // pred_region
        %s2117 = smul.u32 4, %s26
      $region64: #{_lambda_.6} parent=59 // pred_fallthru
        _
    $region60: #{_lambda_.6} parent=5 // pred_fallthru
      _
    %p2118 = scmp.le.s32.totalorder 2, %s16
    // Predicated region
    $region65: #{_lambda_.6} parent=5 // pred_check
      %p2119 = pneg %p2118
    $region66: #{_lambda_.6} parent=5 // pred_check_branch
      %2121 = sbr.rel (%p2119) target = $region68
    $region67: #{_lambda_.6} parent=5 // pred_region
      %s2122 = ssub.s32 %s16, 2
      // Predicated region
      $region69: #{_lambda_.6} parent=67 // pred_check
        %p2123 = pneg %p289
      $region70: #{_lambda_.6} parent=67 // pred_check_branch
        %2125 = sbr.rel (%p2123) target = $region72
      $region71: #{_lambda_.6} parent=67 // pred_region
        %s2126 = smul.u32 4, %s28
        %p2127 = scmp.lt.s32.totalorder %s27, 1
        %s2128 = scalar_select %p2127, %s27, 1
        %p2129 = scmp.lt.s32.totalorder %s2126, 7
        %s2130 = scalar_select %p2129, %s2126, 7
        %s2131 = smul.addr %s2128, 8
        %s2132 = sadd.s32 %s2130, %s2131
        %s2133 = smul.addr %s2132, 4
        %s2134 = scalar_lea.vmem %s10, %s2133
      $region72: #{_lambda_.6} parent=67 // pred_fallthru
        _
    $region68: #{_lambda_.6} parent=5 // pred_fallthru
      _
  $region6: #{_lambda_.6} parent=0 // loop_footer
    %s20 = sadd.s32 1, %s16
  $region7: #{_lambda_.6} parent=0 // loop_footer_branch
    %15 = sbr.rel target = $region3
  $region8: #{_lambda_.6} parent=0 // loop_exit
    _

// kernel: _lambda_.5
$region0: #{_lambda_.5}
  #allocation0 [shape = 'u32[]', space=smem, size = 0x4, offset = 0x4, fixed_abs, tag = 'smem constant byte address 0x4 - core index']
  #allocation1 [shape = 'u32[144,128]{1,0:T(1,128)}', space=vmem, size = 0x12000, scoped, tag = 'internal scratch']
  %s0 = inlined_call_operand.vmem [shape: bf16[2,18,18,128], index: 0, kind: input, shape index: {}]
  %s1 = inlined_call_operand.vmem [shape: bf16[9,128,128], index: 1, kind: input, shape index: {}]
  %s2 = inlined_call_operand.vmem [shape: f32[1,128], index: 2, kind: input, shape index: {}]
  %s3 = inlined_call_operand.vmem [shape: bf16[128,128], index: 3, kind: input, shape index: {}]
  %s4 = inlined_call_operand.vmem [shape: f32[1,128], index: 4, kind: input, shape index: {}]
  %s5 = inlined_call_operand.vmem [shape: bf16[2,16,16,128], index: 5, kind: output, shape index: {}]
  %s6 = sld [smem:[#allocation0]]
  $region53: #{_lambda_.5} parent=0
    _
  %s8 = ssub.s32 1, %s6
  %s9 = scalar_select 0, %s8, %s6
  loop: start=0, step=1, limit=6
  $region2: #{_lambda_.5} parent=0 // loop_pre_header
    _
  $region3: #{_lambda_.5} parent=0 // loop_header
    %s11 = sphi 0, %s15
    %p12 = scmp.ge.s32.totalorder %s11, 6
    %s18 = sphi 0, %s30
    %s19 = sphi 0, %s26
    %s20 = sphi 0, %s18
    %s21 = sphi 0, %s19
    %s22 = sphi 0, %s20
    %s23 = sphi 0, %s21
    %s33 = sphi 0, %s35
    %s36 = sphi 0, %s33
    %s37 = sphi 0, %s36
    %s53 = sphi 0, %s37
    %s57 = sphi 0, %s57
    %s59 = sphi 0, %s57
    %s60 = sphi 0, %s59
    %s74 = sphi 0, %s60
    %s78 = sphi 0, %s78
    %s80 = sphi 0, %s78
    %s81 = sphi 0, %s80
    %s95 = sphi 0, %s81
    %s99 = sphi 0, %s99
    %s101 = sphi 0, %s99
    %s102 = sphi 0, %s101
    %s116 = sphi 0, %s102
    %s120 = sphi 0, %s120
    %s122 = sphi 0, %s120
    %s123 = sphi 0, %s122
    %s137 = sphi 0, %s123
    %s145 = sphi 0, %s147
    %s148 = sphi 0, %s145
    %s149 = sphi 0, %s148
    %s165 = sphi 0, %s149
  $region4: #{_lambda_.5} parent=0 // loop_header_branch
    %14 = sbr.rel (%p12) target = $region8
  $region5: #{_lambda_.5} parent=0 // loop_body
    %s16 = ssub.s32 %s11, 1
    %s17 = ssub.s32 %s11, 2
    %s24 = sadd.s32 1, %s19
    %p25 = scmp.ge.s32.totalorder %s24, 2
    %s26 = scalar_select %p25, 0, %s24
    %s27 = sadd.s32 1, %s18
    %s28 = scalar_select %p25, %s27, %s18
    %p29 = scmp.ge.s32.totalorder %s28, 2
    %s30 = scalar_select %p29, 0, %s28
    %s31 = ssub.s32 %s18, %s30
    %p32 = scmp.eq.s32.totalorder %s31, 0
    %s34 = sadd.s32 %s33, 1
    %s35 = scalar_select %p32, %s33, %s34
    %p38 = pneg %p32
    %p39 = scmp.eq.s32.totalorder %s11, 3
    %p40 = por %p38, %p39
    %p41 = scmp.ne.s32.totalorder %s33, %s36
    %p42 = scmp.eq.s32.totalorder %s11, 0
    %p43 = por %p41, %p42
    %p44 = scmp.ne.s32.totalorder %s33, %s36
    %p45 = scmp.eq.s32.totalorder %s16, 3
    %p46 = por %p44, %p45
    %p47 = scmp.ne.s32.totalorder %s36, %s37
    %p48 = scmp.eq.s32.totalorder %s16, 0
    %p49 = por %p47, %p48
    %p50 = scmp.ne.s32.totalorder %s36, %s37
    %p51 = scmp.eq.s32.totalorder %s17, 3
    %p52 = por %p50, %p51
    %p54 = scmp.ne.s32.totalorder %s37, %s53
    %p55 = scmp.eq.s32.totalorder %s17, 0
    %p56 = por %p54, %p55
    %s58 = sadd.s32 %s57, 1
    %p61 = scmp.eq.s32.totalorder %s11, 3
    %p62 = scmp.ne.s32.totalorder %s57, %s59
    %p63 = scmp.eq.s32.totalorder %s11, 0
    %p64 = por %p62, %p63
    %p65 = scmp.ne.s32.totalorder %s57, %s59
    %p66 = scmp.eq.s32.totalorder %s16, 3
    %p67 = por %p65, %p66
    %p68 = scmp.ne.s32.totalorder %s59, %s60
    %p69 = scmp.eq.s32.totalorder %s16, 0
    %p70 = por %p68, %p69
    %p71 = scmp.ne.s32.totalorder %s59, %s60
    %p72 = scmp.eq.s32.totalorder %s17, 3
    %p73 = por %p71, %p72
    %p75 = scmp.ne.s32.totalorder %s60, %s74
    %p76 = scmp.eq.s32.totalorder %s17, 0
    %p77 = por %p75, %p76
    %s79 = sadd.s32 %s78, 1
    %p82 = scmp.eq.s32.totalorder %s11, 3
    %p83 = scmp.ne.s32.totalorder %s78, %s80
    %p84 = scmp.eq.s32.totalorder %s11, 0
    %p85 = por %p83, %p84
    %p86 = scmp.ne.s32.totalorder %s78, %s80
    %p87 = scmp.eq.s32.totalorder %s16, 3
    %p88 = por %p86, %p87
    %p89 = scmp.ne.s32.totalorder %s80, %s81
    %p90 = scmp.eq.s32.totalorder %s16, 0
    %p91 = por %p89, %p90
    %p92 = scmp.ne.s32.totalorder %s80, %s81
    %p93 = scmp.eq.s32.totalorder %s17, 3
    %p94 = por %p92, %p93
    %p96 = scmp.ne.s32.totalorder %s81, %s95
    %p97 = scmp.eq.s32.totalorder %s17, 0
    %p98 = por %p96, %p97
    %s100 = sadd.s32 %s99, 1
    %p103 = scmp.eq.s32.totalorder %s11, 3
    %p104 = scmp.ne.s32.totalorder %s99, %s101
    %p105 = scmp.eq.s32.totalorder %s11, 0
    %p106 = por %p104, %p105
    %p107 = scmp.ne.s32.totalorder %s99, %s101
    %p108 = scmp.eq.s32.totalorder %s16, 3
    %p109 = por %p107, %p108
    %p110 = scmp.ne.s32.totalorder %s101, %s102
    %p111 = scmp.eq.s32.totalorder %s16, 0
    %p112 = por %p110, %p111
    %p113 = scmp.ne.s32.totalorder %s101, %s102
    %p114 = scmp.eq.s32.totalorder %s17, 3
    %p115 = por %p113, %p114
    %p117 = scmp.ne.s32.totalorder %s102, %s116
    %p118 = scmp.eq.s32.totalorder %s17, 0
    %p119 = por %p117, %p118
    %s121 = sadd.s32 %s120, 1
    %p124 = scmp.eq.s32.totalorder %s11, 3
    %p125 = scmp.ne.s32.totalorder %s120, %s122
    %p126 = scmp.eq.s32.totalorder %s11, 0
    %p127 = por %p125, %p126
    %p128 = scmp.ne.s32.totalorder %s120, %s122
    %p129 = scmp.eq.s32.totalorder %s16, 3
    %p130 = por %p128, %p129
    %p131 = scmp.ne.s32.totalorder %s122, %s123
    %p132 = scmp.eq.s32.totalorder %s16, 0
    %p133 = por %p131, %p132
    %p134 = scmp.ne.s32.totalorder %s122, %s123
    %p135 = scmp.eq.s32.totalorder %s17, 3
    %p136 = por %p134, %p135
    %p138 = scmp.ne.s32.totalorder %s123, %s137
    %p139 = scmp.eq.s32.totalorder %s17, 0
    %p140 = por %p138, %p139
    %s141 = ssub.s32 %s18, %s30
    %s142 = ssub.s32 %s19, %s26
    %s143 = sor.u32 %s141, %s142
    %p144 = scmp.eq.s32.totalorder %s143, 0
    %s146 = sadd.s32 %s145, 1
    %s147 = scalar_select %p144, %s145, %s146
    %p150 = pneg %p144
    %p151 = scmp.eq.s32.totalorder %s11, 3
    %p152 = por %p150, %p151
    %p153 = scmp.ne.s32.totalorder %s145, %s148
    %p154 = scmp.eq.s32.totalorder %s11, 0
    %p155 = por %p153, %p154
    %p156 = scmp.ne.s32.totalorder %s145, %s148
    %p157 = scmp.eq.s32.totalorder %s16, 3
    %p158 = por %p156, %p157
    %p159 = scmp.ne.s32.totalorder %s148, %s149
    %p160 = scmp.eq.s32.totalorder %s16, 0
    %p161 = por %p159, %p160
    %p162 = scmp.ne.s32.totalorder %s148, %s149
    %p163 = scmp.eq.s32.totalorder %s17, 3
    %p164 = por %p162, %p163
    %p166 = scmp.ne.s32.totalorder %s149, %s165
    %p167 = scmp.eq.s32.totalorder %s17, 0
    %p168 = por %p166, %p167
    %p169 = scmp.le.s32.totalorder 1, %s11
    %p170 = scmp.lt.s32.totalorder %s11, 5
    %p171 = pnand %p169, %p170
    %p172 = pneg %p171
    // Predicated region
    $region9: #{_lambda_.5} parent=5 // pred_check
      _
    $region10: #{_lambda_.5} parent=5 // pred_check_branch
      %174 = sbr.rel (%p171) target = $region12
    $region11: #{_lambda_.5} parent=5 // pred_region
      %s175 = ssub.s32 %s11, 1
      // Predicated region
      $region13: #{_lambda_.5} parent=11 // pred_check
        %p176 = pneg %p70
      $region14: #{_lambda_.5} parent=11 // pred_check_branch
        %178 = sbr.rel (%p176) target = $region16
      $region15: #{_lambda_.5} parent=11 // pred_region
        _
      $region16: #{_lambda_.5} parent=11 // pred_fallthru
        _
      // Predicated region
      $region17: #{_lambda_.5} parent=11 // pred_check
        %p179 = pneg %p91
      $region18: #{_lambda_.5} parent=11 // pred_check_branch
        %181 = sbr.rel (%p179) target = $region20
      $region19: #{_lambda_.5} parent=11 // pred_region
        _
      $region20: #{_lambda_.5} parent=11 // pred_fallthru
        _
      // Predicated region
      $region21: #{_lambda_.5} parent=11 // pred_check
        %p182 = pneg %p112
      $region22: #{_lambda_.5} parent=11 // pred_check_branch
        %184 = sbr.rel (%p182) target = $region24
      $region23: #{_lambda_.5} parent=11 // pred_region
        _
      $region24: #{_lambda_.5} parent=11 // pred_fallthru
        _
      // Predicated region
      $region25: #{_lambda_.5} parent=11 // pred_check
        %p185 = pneg %p133
      $region26: #{_lambda_.5} parent=11 // pred_check_branch
        %187 = sbr.rel (%p185) target = $region28
      $region27: #{_lambda_.5} parent=11 // pred_region
        _
      $region28: #{_lambda_.5} parent=11 // pred_fallthru
        _
    $region12: #{_lambda_.5} parent=5 // pred_fallthru
      _
    %p188 = scmp.lt.s32.totalorder %s11, 4
    // Predicated region
    $region29: #{_lambda_.5} parent=5 // pred_check
      %p189 = pneg %p188
    $region30: #{_lambda_.5} parent=5 // pred_check_branch
      %191 = sbr.rel (%p189) target = $region32
    $region31: #{_lambda_.5} parent=5 // pred_region
      // Predicated region
      $region33: #{_lambda_.5} parent=31 // pred_check
        %p192 = pneg %p43
      $region34: #{_lambda_.5} parent=31 // pred_check_branch
        %194 = sbr.rel (%p192) target = $region36
      $region35: #{_lambda_.5} parent=31 // pred_region
        %p195 = scmp.lt.s32.totalorder %s18, 1
        %s196 = scalar_select %p195, %s18, 1
        %s197 = smul.addr %s196, 54
        %s198 = smul.addr %s197, 4
        %s199 = scalar_lea.vmem %s0, %s198
      $region36: #{_lambda_.5} parent=31 // pred_fallthru
        _
    $region32: #{_lambda_.5} parent=5 // pred_fallthru
      _
    %p200 = scmp.le.s32.totalorder 1, %s11
    %p201 = scmp.lt.s32.totalorder %s11, 5
    %p202 = pnand %p200, %p201
    %p203 = pneg %p202
    // Predicated region
    $region37: #{_lambda_.5} parent=5 // pred_check
      _
    $region38: #{_lambda_.5} parent=5 // pred_check_branch
      %205 = sbr.rel (%p202) target = $region40
    $region39: #{_lambda_.5} parent=5 // pred_region
      %s206 = ssub.s32 %s11, 1
      %p207 = scmp.lt.s32.totalorder %s20, 1
      %s208 = scalar_select %p207, %s20, 1
      %s209 = smul.addr %s208, 54
      %s210 = smul.addr %s209, 4
      %s211 = scalar_lea.vmem %s0, %s210
      %p212 = pneg %p49
      %p213 = pneg %p46
      %p214 = pneg %p70
      %p215 = pneg %p67
      %p216 = pneg %p91
      %p217 = pneg %p88
      %p218 = pneg %p112
      %p219 = pneg %p109
      %p220 = pneg %p133
      %p221 = pneg %p130
      %p222 = pneg %p161
      %p223 = pneg %p158
      %s224 = smul.u32 8, %s21
      %p225 = scmp.lt.s32.totalorder %s20, 1
      %s226 = scalar_select %p225, %s20, 1
      %p227 = scmp.lt.s32.totalorder %s224, 15
      %s228 = scalar_select %p227, %s224, 15
      %s229 = smul.addr %s228, 2
      %s230 = smul.addr %s226, 32
      %s231 = sadd.s32 %s229, %s230
      %s232 = smul.addr %s231, 4
      %s233 = scalar_lea.vmem %s5, %s232
      %p234 = scmp.lt.s32.totalorder %s20, 1
      %s235 = scalar_select %p234, %s20, 1
      %s236 = smul.addr %s235, 54
      %s237 = smul.addr %s236, 4
      %s238 = scalar_lea.vmem %s0, %s237
      %s239 = smul.u32 8, %s21
      %p240 = scmp.lt.s32.totalorder %s20, 1
      %s241 = scalar_select %p240, %s20, 1
      %p242 = scmp.lt.s32.totalorder %s239, 15
      %s243 = scalar_select %p242, %s239, 15
      %s244 = smul.addr %s243, 2
      %s245 = smul.addr %s241, 32
      %s246 = sadd.s32 %s244, %s245
      %s247 = smul.addr %s246, 4
      %s248 = scalar_lea.vmem %s5, %s247
      %s249 = smul.u32 8, %s21
      %s251 = smul.u32 %s21, 8
      %s252 = smul.u32 %s251, 3
      %s253 = smul.addr %s252, 4
      %s254 = scalar_lea.vmem %s238, %s253
      %v255 = vld [vmem:[%s254] sm:$0xf]
      %v256 = vld [vmem:[%s254 + $0x4] sm:$0xf]
      %v257 = vld [vmem:[%s254 + $0xc] sm:$0xf]
      %v258 = vld [vmem:[%s254 + $0x10] sm:$0xf]
      %v259 = vld [vmem:[%s254 + $0x18] sm:$0xf]
      %v260 = vld [vmem:[%s254 + $0x1c] sm:$0xf]
      %v261 = vld [vmem:[%s254 + $0x24] sm:$0xf]
      %v262 = vld [vmem:[%s254 + $0x28] sm:$0xf]
      %v263 = vld [vmem:[%s254 + $0x30] sm:$0xf]
      %v264 = vld [vmem:[%s254 + $0x34] sm:$0xf]
      %v265 = vld [vmem:[%s254 + $0x3c] sm:$0xf]
      %v266 = vld [vmem:[%s254 + $0x40] sm:$0xf]
      %v267 = vld [vmem:[%s254 + $0x48] sm:$0xf]
      %v268 = vld [vmem:[%s254 + $0x4c] sm:$0xf]
      %v269 = vld [vmem:[%s254 + $0x54] sm:$0xf]
      %v270 = vld [vmem:[%s254 + $0x58] sm:$0xf]
      %v271 = vld [vmem:[%s1] sm:$0xf]
      %v272 = vld [vmem:[%s1 + $0x4] sm:$0xf]
      %v273 = vld [vmem:[%s1 + $0x8] sm:$0xf]
      %v274 = vld [vmem:[%s1 + $0xc] sm:$0xf]
      %v275 = vld [vmem:[%s1 + $0x10] sm:$0xf]
      %v276 = vld [vmem:[%s1 + $0x14] sm:$0xf]
      %v277 = vld [vmem:[%s1 + $0x18] sm:$0xf]
      %v278 = vld [vmem:[%s1 + $0x1c] sm:$0xf]
      %v279 = vld [vmem:[%s1 + $0x20] sm:$0xf]
      %v280 = vld [vmem:[%s1 + $0x24] sm:$0xf]
      %v281 = vld [vmem:[%s1 + $0x28] sm:$0xf]
      %v282 = vld [vmem:[%s1 + $0x2c] sm:$0xf]
      %v283 = vld [vmem:[%s1 + $0x30] sm:$0xf]
      %v284 = vld [vmem:[%s1 + $0x34] sm:$0xf]
      %v285 = vld [vmem:[%s1 + $0x38] sm:$0xf]
      %v286 = vld [vmem:[%s1 + $0x3c] sm:$0xf]
      %v287 = vld [vmem:[%s254 + $0x8] sm:$0x1]
      %v288 = vld [vmem:[%s254 + $0x14] sm:$0x1]
      %v289 = vld [vmem:[%s254 + $0x20] sm:$0x1]
      %v290 = vld [vmem:[%s254 + $0x2c] sm:$0x1]
      %v291 = vld [vmem:[%s254 + $0x38] sm:$0x1]
      %v292 = vld [vmem:[%s254 + $0x44] sm:$0x1]
      %v293 = vld [vmem:[%s254 + $0x50] sm:$0x1]
      %v294 = vld [vmem:[%s254 + $0x5c] sm:$0x1]
      %vm295 = vsmask.f32 3328
      %vm296 = vsmask.f32 7440
      %vm297 = vmor %vm295, %vm296
      %v299 = vshrl.u32 %v255, 16
      %v301 = vrot.slane %v299, 4
      %v302 = vshll.u32 %v255, 16
      %v304 = vrot.slane %v302, 5
      %v305 = vor.u32 %v301, %v304
      %v306 = vrot.slane %v305, 4
      %v308 = vshll.u32 %v256, 16
      %v310 = vrot.slane %v308, 5
      %v311 = vsel %vm297, %v306, %v310
      %v312 = vshrl.u32 %v256, 16
      %v314 = vrot.slane %v312, 4
      %v315 = vor.u32 %v314, %v310
      %v316 = vrot.slane %v315, 4
      %v318 = vshll.u32 %v287, 16
      %v320 = vrot.slane %v318, 5
      %v321 = vsel %vm297, %v316, %v320
      %v323 = vshrl.u32 %v257, 16
      %v325 = vrot.slane %v323, 4
      %v326 = vshll.u32 %v257, 16
      %v328 = vrot.slane %v326, 5
      %v329 = vor.u32 %v325, %v328
      %v330 = vrot.slane %v329, 4
      %v332 = vshll.u32 %v258, 16
      %v334 = vrot.slane %v332, 5
      %v335 = vsel %vm297, %v330, %v334
      %v336 = vshrl.u32 %v258, 16
      %v338 = vrot.slane %v336, 4
      %v339 = vor.u32 %v338, %v334
      %v340 = vrot.slane %v339, 4
      %v342 = vshll.u32 %v288, 16
      %v344 = vrot.slane %v342, 5
      %v345 = vsel %vm297, %v340, %v344
      %v347 = vshrl.u32 %v259, 16
      %v349 = vrot.slane %v347, 4
      %v350 = vshll.u32 %v259, 16
      %v352 = vrot.slane %v350, 5
      %v353 = vor.u32 %v349, %v352
      %v354 = vrot.slane %v353, 4
      %v356 = vshll.u32 %v260, 16
      %v358 = vrot.slane %v356, 5
      %v359 = vsel %vm297, %v354, %v358
      %v360 = vshrl.u32 %v260, 16
      %v362 = vrot.slane %v360, 4
      %v363 = vor.u32 %v362, %v358
      %v364 = vrot.slane %v363, 4
      %v366 = vshll.u32 %v289, 16
      %v368 = vrot.slane %v366, 5
      %v369 = vsel %vm297, %v364, %v368
      %v371 = vshrl.u32 %v261, 16
      %v373 = vrot.slane %v371, 4
      %v374 = vshll.u32 %v261, 16
      %v376 = vrot.slane %v374, 5
      %v377 = vor.u32 %v373, %v376
      %v378 = vrot.slane %v377, 4
      %v380 = vshll.u32 %v262, 16
      %v382 = vrot.slane %v380, 5
      %v383 = vsel %vm297, %v378, %v382
      %v384 = vshrl.u32 %v262, 16
      %v386 = vrot.slane %v384, 4
      %v387 = vor.u32 %v386, %v382
      %v388 = vrot.slane %v387, 4
      %v390 = vshll.u32 %v290, 16
      %v392 = vrot.slane %v390, 5
      %v393 = vsel %vm297, %v388, %v392
      %v395 = vshrl.u32 %v263, 16
      %v397 = vrot.slane %v395, 4
      %v398 = vshll.u32 %v263, 16
      %v400 = vrot.slane %v398, 5
      %v401 = vor.u32 %v397, %v400
      %v402 = vrot.slane %v401, 4
      %v404 = vshll.u32 %v264, 16
      %v406 = vrot.slane %v404, 5
      %v407 = vsel %vm297, %v402, %v406
      %v408 = vshrl.u32 %v264, 16
      %v410 = vrot.slane %v408, 4
      %v411 = vor.u32 %v410, %v406
      %v412 = vrot.slane %v411, 4
      %v414 = vshll.u32 %v291, 16
      %v416 = vrot.slane %v414, 5
      %v417 = vsel %vm297, %v412, %v416
      %v419 = vshrl.u32 %v265, 16
      %v421 = vrot.slane %v419, 4
      %v422 = vshll.u32 %v265, 16
      %v424 = vrot.slane %v422, 5
      %v425 = vor.u32 %v421, %v424
      %v426 = vrot.slane %v425, 4
      %v428 = vshll.u32 %v266, 16
      %v430 = vrot.slane %v428, 5
      %v431 = vsel %vm297, %v426, %v430
      %v432 = vshrl.u32 %v266, 16
      %v434 = vrot.slane %v432, 4
      %v435 = vor.u32 %v434, %v430
      %v436 = vrot.slane %v435, 4
      %v438 = vshll.u32 %v292, 16
      %v440 = vrot.slane %v438, 5
      %v441 = vsel %vm297, %v436, %v440
      %v443 = vshrl.u32 %v267, 16
      %v445 = vrot.slane %v443, 4
      %v446 = vshll.u32 %v267, 16
      %v448 = vrot.slane %v446, 5
      %v449 = vor.u32 %v445, %v448
      %v450 = vrot.slane %v449, 4
      %v452 = vshll.u32 %v268, 16
      %v454 = vrot.slane %v452, 5
      %v455 = vsel %vm297, %v450, %v454
      %v456 = vshrl.u32 %v268, 16
      %v458 = vrot.slane %v456, 4
      %v459 = vor.u32 %v458, %v454
      %v460 = vrot.slane %v459, 4
      %v462 = vshll.u32 %v293, 16
      %v464 = vrot.slane %v462, 5
      %v465 = vsel %vm297, %v460, %v464
      %v467 = vshrl.u32 %v269, 16
      %v469 = vrot.slane %v467, 4
      %v470 = vshll.u32 %v269, 16
      %v472 = vrot.slane %v470, 5
      %v473 = vor.u32 %v469, %v472
      %v474 = vrot.slane %v473, 4
      %v476 = vshll.u32 %v270, 16
      %v478 = vrot.slane %v476, 5
      %v479 = vsel %vm297, %v474, %v478
      %v480 = vshrl.u32 %v270, 16
      %v482 = vrot.slane %v480, 4
      %v483 = vor.u32 %v482, %v478
      %v484 = vrot.slane %v483, 4
      %v486 = vshll.u32 %v294, 16
      %v488 = vrot.slane %v486, 5
      %v489 = vsel %vm297, %v484, %v488
      %s490 = scalar_lea.vmem %s1, 64
      %v491 = vld [vmem:[%s490] sm:$0xf]
      %v492 = vld [vmem:[%s490 + $0x4] sm:$0xf]
      %v493 = vld [vmem:[%s490 + $0x8] sm:$0xf]
      %v494 = vld [vmem:[%s490 + $0xc] sm:$0xf]
      %v495 = vld [vmem:[%s490 + $0x10] sm:$0xf]
      %v496 = vld [vmem:[%s490 + $0x14] sm:$0xf]
      %v497 = vld [vmem:[%s490 + $0x18] sm:$0xf]
      %v498 = vld [vmem:[%s490 + $0x1c] sm:$0xf]
      %v499 = vld [vmem:[%s490 + $0x20] sm:$0xf]
      %v500 = vld [vmem:[%s490 + $0x24] sm:$0xf]
      %v501 = vld [vmem:[%s490 + $0x28] sm:$0xf]
      %v502 = vld [vmem:[%s490 + $0x2c] sm:$0xf]
      %v503 = vld [vmem:[%s490 + $0x30] sm:$0xf]
      %v504 = vld [vmem:[%s490 + $0x34] sm:$0xf]
      %v505 = vld [vmem:[%s490 + $0x38] sm:$0xf]
      %v506 = vld [vmem:[%s490 + $0x3c] sm:$0xf]
      %v507 = vunpack.c.l.b16 %v311
      %v508 = vunpack.c.l.b16 %v321
      %v509 = vunpack.c.l.b16 %v335
      %v510 = vunpack.c.l.b16 %v345
      %v511 = vunpack.c.l.b16 %v359
      %v512 = vunpack.c.l.b16 %v369
      %v513 = vunpack.c.l.b16 %v383
      %v514 = vunpack.c.l.b16 %v393
      %v515 = vunpack.c.l.b16 %v407
      %v516 = vunpack.c.l.b16 %v417
      %v517 = vunpack.c.l.b16 %v431
      %v518 = vunpack.c.l.b16 %v441
      %v519 = vunpack.c.l.b16 %v455
      %v520 = vunpack.c.l.b16 %v465
      %v521 = vunpack.c.l.b16 %v479
      %v522 = vunpack.c.l.b16 %v489
      %v523 = vpack.c.b16 %v508, %v507
      %v524 = vpack.c.b16 %v510, %v509
      %v525 = vpack.c.b16 %v512, %v511
      %v526 = vpack.c.b16 %v514, %v513
      %v527 = vpack.c.b16 %v516, %v515
      %v528 = vpack.c.b16 %v518, %v517
      %v529 = vpack.c.b16 %v520, %v519
      %v530 = vpack.c.b16 %v522, %v521
      %v555 = vunpack.c.l.b16 %v491
      %v556 = vunpack.c.l.b16 %v492
      %v557 = vunpack.c.l.b16 %v493
      %v558 = vunpack.c.l.b16 %v494
      %v559 = vunpack.c.l.b16 %v495
      %v560 = vunpack.c.l.b16 %v496
      %v561 = vunpack.c.l.b16 %v497
      %v562 = vunpack.c.l.b16 %v498
      %v563 = vunpack.c.l.b16 %v499
      %v564 = vunpack.c.l.b16 %v500
      %v565 = vunpack.c.l.b16 %v501
      %v566 = vunpack.c.l.b16 %v502
      %v567 = vunpack.c.l.b16 %v503
      %v568 = vunpack.c.l.b16 %v504
      %v569 = vunpack.c.l.b16 %v505
      %v570 = vunpack.c.l.b16 %v506
      %v571 = vpack.c.b16 %v556, %v555
      %v572 = vpack.c.b16 %v558, %v557
      %v573 = vpack.c.b16 %v560, %v559
      %v574 = vpack.c.b16 %v562, %v561
      %v575 = vpack.c.b16 %v564, %v563
      %v576 = vpack.c.b16 %v566, %v565
      %v577 = vpack.c.b16 %v568, %v567
      %v578 = vpack.c.b16 %v570, %v569
      %587 = vmatprep.subr.bf16.mxu0 0
      %588 = vmatpush1.bf16.msra.mxu0 %v578
      %589 = vmatprep.subr.bf16.mxu0 0
      %590 = vmatpush1.bf16.msra.mxu0 %v577
      %591 = vmatprep.subr.bf16.mxu0 0
      %592 = vmatpush1.bf16.msra.mxu0 %v576
      %593 = vmatprep.subr.bf16.mxu0 0
      %594 = vmatpush1.bf16.msra.mxu0 %v575
      %595 = vmatprep.subr.bf16.mxu0 0
      %596 = vmatpush1.bf16.msra.mxu0 %v574
      %597 = vmatprep.subr.bf16.mxu0 0
      %598 = vmatpush1.bf16.msra.mxu0 %v573
      %599 = vmatprep.subr.bf16.mxu0 0
      %600 = vmatpush1.bf16.msra.mxu0 %v572
      %601 = vmatprep.subr.bf16.mxu0 0
      %602 = vmatpush1.bf16.msra.mxu0 %v571
      %603 = vmatprep.subr.bf16.mxu0 0
      %604 = vmatpush2.bf16.msra.mxu0 0
      %605 = vmatprep.subr.bf16.mxu0 0
      %606 = vmatpush2.bf16.msra.mxu0 0
      %607 = vmatprep.subr.bf16.mxu0 0
      %608 = vmatpush2.bf16.msra.mxu0 0
      %609 = vmatprep.subr.bf16.mxu0 0
      %610 = vmatpush2.bf16.msra.mxu0 0
      %611 = vmatprep.subr.bf16.mxu0 0
      %612 = vmatpush2.bf16.msra.mxu0 0
      %613 = vmatprep.subr.bf16.mxu0 0
      %614 = vmatpush2.bf16.msra.mxu0 0
      %615 = vmatprep.subr.bf16.mxu0 0
      %616 = vmatpush2.bf16.msra.mxu0 0
      %617 = vmatprep.subr.bf16.mxu0 0
      %618 = vmatpush2.bf16.msra.mxu0 0
      %619 = vmatprep.mubr.bf16.mxu0 0
      %620 = vmatmul.mubr.bf16.gmra.mxu0 %v523
      %v621 = vpop.f32.mrf.mxu0
      %v622 = vadd.f32 0.0, %v621
      %v623 = vpop.f32.mrf.mxu0
      %v624 = vpop.f32.mrf.mxu0
      %v625 = vadd.f32 0.0, %v624
      %v626 = vpop.f32.mrf.mxu0
      %627 = vmatprep.mubr.bf16.mxu0 0
      %628 = vmatmul.mubr.bf16.gmra.mxu0 %v524
      %v629 = vpop.f32.mrf.mxu0
      %v630 = vadd.f32 0.0, %v629
      %v631 = vpop.f32.mrf.mxu0
      %v632 = vpop.f32.mrf.mxu0
      %v633 = vadd.f32 0.0, %v632
      %v634 = vpop.f32.mrf.mxu0
      %635 = vmatprep.mubr.bf16.mxu0 0
      %636 = vmatmul.mubr.bf16.gmra.mxu0 %v525
      %v637 = vpop.f32.mrf.mxu0
      %v638 = vadd.f32 0.0, %v637
      %v639 = vpop.f32.mrf.mxu0
      %v640 = vpop.f32.mrf.mxu0
      %v641 = vadd.f32 0.0, %v640
      %v642 = vpop.f32.mrf.mxu0
      %643 = vmatprep.mubr.bf16.mxu0 0
      %644 = vmatmul.mubr.bf16.gmra.mxu0 %v526
      %v645 = vpop.f32.mrf.mxu0
      %v646 = vadd.f32 0.0, %v645
      %v647 = vpop.f32.mrf.mxu0
      %v648 = vpop.f32.mrf.mxu0
      %v649 = vadd.f32 0.0, %v648
      %v650 = vpop.f32.mrf.mxu0
      %651 = vmatprep.mubr.bf16.mxu0 0
      %652 = vmatmul.mubr.bf16.gmra.mxu0 %v527
      %v653 = vpop.f32.mrf.mxu0
      %v654 = vadd.f32 0.0, %v653
      %v655 = vpop.f32.mrf.mxu0
      %v656 = vpop.f32.mrf.mxu0
      %v657 = vadd.f32 0.0, %v656
      %v658 = vpop.f32.mrf.mxu0
      %659 = vmatprep.mubr.bf16.mxu0 0
      %660 = vmatmul.mubr.bf16.gmra.mxu0 %v528
      %v661 = vpop.f32.mrf.mxu0
      %v662 = vadd.f32 0.0, %v661
      %v663 = vpop.f32.mrf.mxu0
      %v664 = vpop.f32.mrf.mxu0
      %v665 = vadd.f32 0.0, %v664
      %v666 = vpop.f32.mrf.mxu0
      %667 = vmatprep.mubr.bf16.mxu0 0
      %668 = vmatmul.mubr.bf16.gmra.mxu0 %v529
      %v669 = vpop.f32.mrf.mxu0
      %v670 = vadd.f32 0.0, %v669
      %v671 = vpop.f32.mrf.mxu0
      %v672 = vpop.f32.mrf.mxu0
      %v673 = vadd.f32 0.0, %v672
      %v674 = vpop.f32.mrf.mxu0
      %675 = vmatprep.mubr.bf16.mxu0 0
      %676 = vmatmul.mubr.bf16.gmra.mxu0 %v530
      %v677 = vpop.f32.mrf.mxu0
      %v678 = vadd.f32 0.0, %v677
      %v679 = vpop.f32.mrf.mxu0
      %v680 = vpop.f32.mrf.mxu0
      %v681 = vadd.f32 0.0, %v680
      %v682 = vpop.f32.mrf.mxu0
      %683 = vdwg.mxu0
      %v700 = vunpack.c.l.b16 %v255
      %v701 = vunpack.c.l.b16 %v256
      %v702 = vunpack.c.l.b16 %v257
      %v703 = vunpack.c.l.b16 %v258
      %v704 = vunpack.c.l.b16 %v259
      %v705 = vunpack.c.l.b16 %v260
      %v706 = vunpack.c.l.b16 %v261
      %v707 = vunpack.c.l.b16 %v262
      %v708 = vunpack.c.l.b16 %v263
      %v709 = vunpack.c.l.b16 %v264
      %v710 = vunpack.c.l.b16 %v265
      %v711 = vunpack.c.l.b16 %v266
      %v712 = vunpack.c.l.b16 %v267
      %v713 = vunpack.c.l.b16 %v268
      %v714 = vunpack.c.l.b16 %v269
      %v715 = vunpack.c.l.b16 %v270
      %v716 = vpack.c.b16 %v701, %v700
      %v717 = vpack.c.b16 %v703, %v702
      %v718 = vpack.c.b16 %v705, %v704
      %v719 = vpack.c.b16 %v707, %v706
      %v720 = vpack.c.b16 %v709, %v708
      %v721 = vpack.c.b16 %v711, %v710
      %v722 = vpack.c.b16 %v713, %v712
      %v723 = vpack.c.b16 %v715, %v714
      %v748 = vunpack.c.l.b16 %v271
      %v749 = vunpack.c.l.b16 %v272
      %v750 = vunpack.c.l.b16 %v273
      %v751 = vunpack.c.l.b16 %v274
      %v752 = vunpack.c.l.b16 %v275
      %v753 = vunpack.c.l.b16 %v276
      %v754 = vunpack.c.l.b16 %v277
      %v755 = vunpack.c.l.b16 %v278
      %v756 = vunpack.c.l.b16 %v279
      %v757 = vunpack.c.l.b16 %v280
      %v758 = vunpack.c.l.b16 %v281
      %v759 = vunpack.c.l.b16 %v282
      %v760 = vunpack.c.l.b16 %v283
      %v761 = vunpack.c.l.b16 %v284
      %v762 = vunpack.c.l.b16 %v285
      %v763 = vunpack.c.l.b16 %v286
      %v764 = vpack.c.b16 %v749, %v748
      %v765 = vpack.c.b16 %v751, %v750
      %v766 = vpack.c.b16 %v753, %v752
      %v767 = vpack.c.b16 %v755, %v754
      %v768 = vpack.c.b16 %v757, %v756
      %v769 = vpack.c.b16 %v759, %v758
      %v770 = vpack.c.b16 %v761, %v760
      %v771 = vpack.c.b16 %v763, %v762
      %780 = vmatprep.subr.bf16.mxu0 0
      %781 = vmatpush1.bf16.msra.mxu0 %v771
      %782 = vmatprep.subr.bf16.mxu0 0
      %783 = vmatpush1.bf16.msra.mxu0 %v770
      %784 = vmatprep.subr.bf16.mxu0 0
      %785 = vmatpush1.bf16.msra.mxu0 %v769
      %786 = vmatprep.subr.bf16.mxu0 0
      %787 = vmatpush1.bf16.msra.mxu0 %v768
      %788 = vmatprep.subr.bf16.mxu0 0
      %789 = vmatpush1.bf16.msra.mxu0 %v767
      %790 = vmatprep.subr.bf16.mxu0 0
      %791 = vmatpush1.bf16.msra.mxu0 %v766
      %792 = vmatprep.subr.bf16.mxu0 0
      %793 = vmatpush1.bf16.msra.mxu0 %v765
      %794 = vmatprep.subr.bf16.mxu0 0
      %795 = vmatpush1.bf16.msra.mxu0 %v764
      %796 = vmatprep.subr.bf16.mxu0 0
      %797 = vmatpush2.bf16.msra.mxu0 0
      %798 = vmatprep.subr.bf16.mxu0 0
      %799 = vmatpush2.bf16.msra.mxu0 0
      %800 = vmatprep.subr.bf16.mxu0 0
      %801 = vmatpush2.bf16.msra.mxu0 0
      %802 = vmatprep.subr.bf16.mxu0 0
      %803 = vmatpush2.bf16.msra.mxu0 0
      %804 = vmatprep.subr.bf16.mxu0 0
      %805 = vmatpush2.bf16.msra.mxu0 0
      %806 = vmatprep.subr.bf16.mxu0 0
      %807 = vmatpush2.bf16.msra.mxu0 0
      %808 = vmatprep.subr.bf16.mxu0 0
      %809 = vmatpush2.bf16.msra.mxu0 0
      %810 = vmatprep.subr.bf16.mxu0 0
      %811 = vmatpush2.bf16.msra.mxu0 0
      %812 = vmatprep.mubr.bf16.mxu0 0
      %813 = vmatmul.mubr.bf16.gmra.mxu0 %v716
      %v814 = vpop.f32.mrf.mxu0
      %v815 = vadd.f32 %v622, %v814
      %v816 = vpop.f32.mrf.mxu0
      %v817 = vpop.f32.mrf.mxu0
      %v818 = vadd.f32 %v625, %v817
      %v819 = vpop.f32.mrf.mxu0
      %820 = vmatprep.mubr.bf16.mxu0 0
      %821 = vmatmul.mubr.bf16.gmra.mxu0 %v717
      %v822 = vpop.f32.mrf.mxu0
      %v823 = vadd.f32 %v630, %v822
      %v824 = vpop.f32.mrf.mxu0
      %v825 = vpop.f32.mrf.mxu0
      %v826 = vadd.f32 %v633, %v825
      %v827 = vpop.f32.mrf.mxu0
      %828 = vmatprep.mubr.bf16.mxu0 0
      %829 = vmatmul.mubr.bf16.gmra.mxu0 %v718
      %v830 = vpop.f32.mrf.mxu0
      %v831 = vadd.f32 %v638, %v830
      %v832 = vpop.f32.mrf.mxu0
      %v833 = vpop.f32.mrf.mxu0
      %v834 = vadd.f32 %v641, %v833
      %v835 = vpop.f32.mrf.mxu0
      %836 = vmatprep.mubr.bf16.mxu0 0
      %837 = vmatmul.mubr.bf16.gmra.mxu0 %v719
      %v838 = vpop.f32.mrf.mxu0
      %v839 = vadd.f32 %v646, %v838
      %v840 = vpop.f32.mrf.mxu0
      %v841 = vpop.f32.mrf.mxu0
      %v842 = vadd.f32 %v649, %v841
      %v843 = vpop.f32.mrf.mxu0
      %844 = vmatprep.mubr.bf16.mxu0 0
      %845 = vmatmul.mubr.bf16.gmra.mxu0 %v720
      %v846 = vpop.f32.mrf.mxu0
      %v847 = vadd.f32 %v654, %v846
      %v848 = vpop.f32.mrf.mxu0
      %v849 = vpop.f32.mrf.mxu0
      %v850 = vadd.f32 %v657, %v849
      %v851 = vpop.f32.mrf.mxu0
      %852 = vmatprep.mubr.bf16.mxu0 0
      %853 = vmatmul.mubr.bf16.gmra.mxu0 %v721
      %v854 = vpop.f32.mrf.mxu0
      %v855 = vadd.f32 %v662, %v854
      %v856 = vpop.f32.mrf.mxu0
      %v857 = vpop.f32.mrf.mxu0
      %v858 = vadd.f32 %v665, %v857
      %v859 = vpop.f32.mrf.mxu0
      %860 = vmatprep.mubr.bf16.mxu0 0
      %861 = vmatmul.mubr.bf16.gmra.mxu0 %v722
      %v862 = vpop.f32.mrf.mxu0
      %v863 = vadd.f32 %v670, %v862
      %v864 = vpop.f32.mrf.mxu0
      %v865 = vpop.f32.mrf.mxu0
      %v866 = vadd.f32 %v673, %v865
      %v867 = vpop.f32.mrf.mxu0
      %868 = vmatprep.mubr.bf16.mxu0 0
      %869 = vmatmul.mubr.bf16.gmra.mxu0 %v723
      %v870 = vpop.f32.mrf.mxu0
      %v871 = vadd.f32 %v678, %v870
      %v872 = vpop.f32.mrf.mxu0
      %v873 = vpop.f32.mrf.mxu0
      %v874 = vadd.f32 %v681, %v873
      %v875 = vpop.f32.mrf.mxu0
      %876 = vdwg.mxu0
      %v877 = vld [vmem:[%s254] sm:$0xe]
      %v878 = vld [vmem:[%s254 + $0xc] sm:$0xe]
      %v879 = vld [vmem:[%s254 + $0x18] sm:$0xe]
      %v880 = vld [vmem:[%s254 + $0x24] sm:$0xe]
      %v881 = vld [vmem:[%s254 + $0x30] sm:$0xe]
      %v882 = vld [vmem:[%s254 + $0x3c] sm:$0xe]
      %v883 = vld [vmem:[%s254 + $0x48] sm:$0xe]
      %v884 = vld [vmem:[%s254 + $0x54] sm:$0xe]
      %vm901 = vcmask 1042432
      %vm902 = vcmask 1046532
      %vm903 = vmor %vm901, %vm902
      %v904 = vrot.slane %v877, 5
      %v905 = vrot.slane %v904, 4
      %v906 = vrot.slane %v256, 5
      %v907 = vsel %vm903, %v905, %v906
      %v908 = vrot.slane %v906, 4
      %v909 = vrot.slane %v287, 5
      %v910 = vsel %vm903, %v908, %v909
      %v911 = vrot.slane %v878, 5
      %v912 = vrot.slane %v911, 4
      %v913 = vrot.slane %v258, 5
      %v914 = vsel %vm903, %v912, %v913
      %v915 = vrot.slane %v913, 4
      %v916 = vrot.slane %v288, 5
      %v917 = vsel %vm903, %v915, %v916
      %v918 = vrot.slane %v879, 5
      %v919 = vrot.slane %v918, 4
      %v920 = vrot.slane %v260, 5
      %v921 = vsel %vm903, %v919, %v920
      %v922 = vrot.slane %v920, 4
      %v923 = vrot.slane %v289, 5
      %v924 = vsel %vm903, %v922, %v923
      %v925 = vrot.slane %v880, 5
      %v926 = vrot.slane %v925, 4
      %v927 = vrot.slane %v262, 5
      %v928 = vsel %vm903, %v926, %v927
      %v929 = vrot.slane %v927, 4
      %v930 = vrot.slane %v290, 5
      %v931 = vsel %vm903, %v929, %v930
      %v932 = vrot.slane %v881, 5
      %v933 = vrot.slane %v932, 4
      %v934 = vrot.slane %v264, 5
      %v935 = vsel %vm903, %v933, %v934
      %v936 = vrot.slane %v934, 4
      %v937 = vrot.slane %v291, 5
      %v938 = vsel %vm903, %v936, %v937
      %v939 = vrot.slane %v882, 5
      %v940 = vrot.slane %v939, 4
      %v941 = vrot.slane %v266, 5
      %v942 = vsel %vm903, %v940, %v941
      %v943 = vrot.slane %v941, 4
      %v944 = vrot.slane %v292, 5
      %v945 = vsel %vm903, %v943, %v944
      %v946 = vrot.slane %v883, 5
      %v947 = vrot.slane %v946, 4
      %v948 = vrot.slane %v268, 5
      %v949 = vsel %vm903, %v947, %v948
      %v950 = vrot.slane %v948, 4
      %v951 = vrot.slane %v293, 5
      %v952 = vsel %vm903, %v950, %v951
      %v953 = vrot.slane %v884, 5
      %v954 = vrot.slane %v953, 4
      %v955 = vrot.slane %v270, 5
      %v956 = vsel %vm903, %v954, %v955
      %v957 = vrot.slane %v955, 4
      %v958 = vrot.slane %v294, 5
      %v959 = vsel %vm903, %v957, %v958
      %s960 = scalar_lea.vmem %s1, 128
      %v961 = vld [vmem:[%s960] sm:$0xf]
      %v962 = vld [vmem:[%s960 + $0x4] sm:$0xf]
      %v963 = vld [vmem:[%s960 + $0x8] sm:$0xf]
      %v964 = vld [vmem:[%s960 + $0xc] sm:$0xf]
      %v965 = vld [vmem:[%s960 + $0x10] sm:$0xf]
      %v966 = vld [vmem:[%s960 + $0x14] sm:$0xf]
      %v967 = vld [vmem:[%s960 + $0x18] sm:$0xf]
      %v968 = vld [vmem:[%s960 + $0x1c] sm:$0xf]
      %v969 = vld [vmem:[%s960 + $0x20] sm:$0xf]
      %v970 = vld [vmem:[%s960 + $0x24] sm:$0xf]
      %v971 = vld [vmem:[%s960 + $0x28] sm:$0xf]
      %v972 = vld [vmem:[%s960 + $0x2c] sm:$0xf]
      %v973 = vld [vmem:[%s960 + $0x30] sm:$0xf]
      %v974 = vld [vmem:[%s960 + $0x34] sm:$0xf]
      %v975 = vld [vmem:[%s960 + $0x38] sm:$0xf]
      %v976 = vld [vmem:[%s960 + $0x3c] sm:$0xf]
      %v977 = vunpack.c.l.b16 %v907
      %v978 = vunpack.c.l.b16 %v910
      %v979 = vunpack.c.l.b16 %v914
      %v980 = vunpack.c.l.b16 %v917
      %v981 = vunpack.c.l.b16 %v921
      %v982 = vunpack.c.l.b16 %v924
      %v983 = vunpack.c.l.b16 %v928
      %v984 = vunpack.c.l.b16 %v931
      %v985 = vunpack.c.l.b16 %v935
      %v986 = vunpack.c.l.b16 %v938
      %v987 = vunpack.c.l.b16 %v942
      %v988 = vunpack.c.l.b16 %v945
      %v989 = vunpack.c.l.b16 %v949
      %v990 = vunpack.c.l.b16 %v952
      %v991 = vunpack.c.l.b16 %v956
      %v992 = vunpack.c.l.b16 %v959
      %v993 = vpack.c.b16 %v978, %v977
      %v994 = vpack.c.b16 %v980, %v979
      %v995 = vpack.c.b16 %v982, %v981
      %v996 = vpack.c.b16 %v984, %v983
      %v997 = vpack.c.b16 %v986, %v985
      %v998 = vpack.c.b16 %v988, %v987
      %v999 = vpack.c.b16 %v990, %v989
      %v1000 = vpack.c.b16 %v992, %v991
      %v1025 = vunpack.c.l.b16 %v961
      %v1026 = vunpack.c.l.b16 %v962
      %v1027 = vunpack.c.l.b16 %v963
      %v1028 = vunpack.c.l.b16 %v964
      %v1029 = vunpack.c.l.b16 %v965
      %v1030 = vunpack.c.l.b16 %v966
      %v1031 = vunpack.c.l.b16 %v967
      %v1032 = vunpack.c.l.b16 %v968
      %v1033 = vunpack.c.l.b16 %v969
      %v1034 = vunpack.c.l.b16 %v970
      %v1035 = vunpack.c.l.b16 %v971
      %v1036 = vunpack.c.l.b16 %v972
      %v1037 = vunpack.c.l.b16 %v973
      %v1038 = vunpack.c.l.b16 %v974
      %v1039 = vunpack.c.l.b16 %v975
      %v1040 = vunpack.c.l.b16 %v976
      %v1041 = vpack.c.b16 %v1026, %v1025
      %v1042 = vpack.c.b16 %v1028, %v1027
      %v1043 = vpack.c.b16 %v1030, %v1029
      %v1044 = vpack.c.b16 %v1032, %v1031
      %v1045 = vpack.c.b16 %v1034, %v1033
      %v1046 = vpack.c.b16 %v1036, %v1035
      %v1047 = vpack.c.b16 %v1038, %v1037
      %v1048 = vpack.c.b16 %v1040, %v1039
      %1057 = vmatprep.subr.bf16.mxu0 0
      %1058 = vmatpush1.bf16.msra.mxu0 %v1048
      %1059 = vmatprep.subr.bf16.mxu0 0
      %1060 = vmatpush1.bf16.msra.mxu0 %v1047
      %1061 = vmatprep.subr.bf16.mxu0 0
      %1062 = vmatpush1.bf16.msra.mxu0 %v1046
      %1063 = vmatprep.subr.bf16.mxu0 0
      %1064 = vmatpush1.bf16.msra.mxu0 %v1045
      %1065 = vmatprep.subr.bf16.mxu0 0
      %1066 = vmatpush1.bf16.msra.mxu0 %v1044
      %1067 = vmatprep.subr.bf16.mxu0 0
      %1068 = vmatpush1.bf16.msra.mxu0 %v1043
      %1069 = vmatprep.subr.bf16.mxu0 0
      %1070 = vmatpush1.bf16.msra.mxu0 %v1042
      %1071 = vmatprep.subr.bf16.mxu0 0
      %1072 = vmatpush1.bf16.msra.mxu0 %v1041
      %1073 = vmatprep.subr.bf16.mxu0 0
      %1074 = vmatpush2.bf16.msra.mxu0 0
      %1075 = vmatprep.subr.bf16.mxu0 0
      %1076 = vmatpush2.bf16.msra.mxu0 0
      %1077 = vmatprep.subr.bf16.mxu0 0
      %1078 = vmatpush2.bf16.msra.mxu0 0
      %1079 = vmatprep.subr.bf16.mxu0 0
      %1080 = vmatpush2.bf16.msra.mxu0 0
      %1081 = vmatprep.subr.bf16.mxu0 0
      %1082 = vmatpush2.bf16.msra.mxu0 0
      %1083 = vmatprep.subr.bf16.mxu0 0
      %1084 = vmatpush2.bf16.msra.mxu0 0
      %1085 = vmatprep.subr.bf16.mxu0 0
      %1086 = vmatpush2.bf16.msra.mxu0 0
      %1087 = vmatprep.subr.bf16.mxu0 0
      %1088 = vmatpush2.bf16.msra.mxu0 0
      %1089 = vmatprep.mubr.bf16.mxu0 0
      %1090 = vmatmul.mubr.bf16.gmra.mxu0 %v993
      %v1091 = vpop.f32.mrf.mxu0
      %v1092 = vadd.f32 0.0, %v1091
      %v1093 = vpop.f32.mrf.mxu0
      %v1094 = vpop.f32.mrf.mxu0
      %v1095 = vadd.f32 0.0, %v1094
      %v1096 = vpop.f32.mrf.mxu0
      %1097 = vmatprep.mubr.bf16.mxu0 0
      %1098 = vmatmul.mubr.bf16.gmra.mxu0 %v994
      %v1099 = vpop.f32.mrf.mxu0
      %v1100 = vadd.f32 0.0, %v1099
      %v1101 = vpop.f32.mrf.mxu0
      %v1102 = vpop.f32.mrf.mxu0
      %v1103 = vadd.f32 0.0, %v1102
      %v1104 = vpop.f32.mrf.mxu0
      %1105 = vmatprep.mubr.bf16.mxu0 0
      %1106 = vmatmul.mubr.bf16.gmra.mxu0 %v995
      %v1107 = vpop.f32.mrf.mxu0
      %v1108 = vadd.f32 0.0, %v1107
      %v1109 = vpop.f32.mrf.mxu0
      %v1110 = vpop.f32.mrf.mxu0
      %v1111 = vadd.f32 0.0, %v1110
      %v1112 = vpop.f32.mrf.mxu0
      %1113 = vmatprep.mubr.bf16.mxu0 0
      %1114 = vmatmul.mubr.bf16.gmra.mxu0 %v996
      %v1115 = vpop.f32.mrf.mxu0
      %v1116 = vadd.f32 0.0, %v1115
      %v1117 = vpop.f32.mrf.mxu0
      %v1118 = vpop.f32.mrf.mxu0
      %v1119 = vadd.f32 0.0, %v1118
      %v1120 = vpop.f32.mrf.mxu0
      %1121 = vmatprep.mubr.bf16.mxu0 0
      %1122 = vmatmul.mubr.bf16.gmra.mxu0 %v997
      %v1123 = vpop.f32.mrf.mxu0
      %v1124 = vadd.f32 0.0, %v1123
      %v1125 = vpop.f32.mrf.mxu0
      %v1126 = vpop.f32.mrf.mxu0
      %v1127 = vadd.f32 0.0, %v1126
      %v1128 = vpop.f32.mrf.mxu0
      %1129 = vmatprep.mubr.bf16.mxu0 0
      %1130 = vmatmul.mubr.bf16.gmra.mxu0 %v998
      %v1131 = vpop.f32.mrf.mxu0
      %v1132 = vadd.f32 0.0, %v1131
      %v1133 = vpop.f32.mrf.mxu0
      %v1134 = vpop.f32.mrf.mxu0
      %v1135 = vadd.f32 0.0, %v1134
      %v1136 = vpop.f32.mrf.mxu0
      %1137 = vmatprep.mubr.bf16.mxu0 0
      %1138 = vmatmul.mubr.bf16.gmra.mxu0 %v999
      %v1139 = vpop.f32.mrf.mxu0
      %v1140 = vadd.f32 0.0, %v1139
      %v1141 = vpop.f32.mrf.mxu0
      %v1142 = vpop.f32.mrf.mxu0
      %v1143 = vadd.f32 0.0, %v1142
      %v1144 = vpop.f32.mrf.mxu0
      %1145 = vmatprep.mubr.bf16.mxu0 0
      %1146 = vmatmul.mubr.bf16.gmra.mxu0 %v1000
      %v1147 = vpop.f32.mrf.mxu0
      %v1148 = vadd.f32 0.0, %v1147
      %v1149 = vpop.f32.mrf.mxu0
      %v1150 = vpop.f32.mrf.mxu0
      %v1151 = vadd.f32 0.0, %v1150
      %v1152 = vpop.f32.mrf.mxu0
      %1153 = vdwg.mxu0
      %v1154 = vadd.f32 %v815, %v1092
      %v1155 = vadd.f32 %v818, %v1095
      %v1156 = vadd.f32 %v823, %v1100
      %v1157 = vadd.f32 %v826, %v1103
      %v1158 = vadd.f32 %v831, %v1108
      %v1159 = vadd.f32 %v834, %v1111
      %v1160 = vadd.f32 %v839, %v1116
      %v1161 = vadd.f32 %v842, %v1119
      %v1162 = vadd.f32 %v847, %v1124
      %v1163 = vadd.f32 %v850, %v1127
      %v1164 = vadd.f32 %v855, %v1132
      %v1165 = vadd.f32 %v858, %v1135
      %v1166 = vadd.f32 %v863, %v1140
      %v1167 = vadd.f32 %v866, %v1143
      %v1168 = vadd.f32 %v871, %v1148
      %v1169 = vadd.f32 %v874, %v1151
      %s1170 = sadd.s32 %s251, 1
      %s1171 = smul.u32 %s1170, 3
      %s1172 = smul.addr %s1171, 4
      %s1173 = scalar_lea.vmem %s238, %s1172
      %v1174 = vld [vmem:[%s1173] sm:$0xf]
      %v1175 = vld [vmem:[%s1173 + $0x4] sm:$0xf]
      %v1176 = vld [vmem:[%s1173 + $0xc] sm:$0xf]
      %v1177 = vld [vmem:[%s1173 + $0x10] sm:$0xf]
      %v1178 = vld [vmem:[%s1173 + $0x18] sm:$0xf]
      %v1179 = vld [vmem:[%s1173 + $0x1c] sm:$0xf]
      %v1180 = vld [vmem:[%s1173 + $0x24] sm:$0xf]
      %v1181 = vld [vmem:[%s1173 + $0x28] sm:$0xf]
      %v1182 = vld [vmem:[%s1173 + $0x30] sm:$0xf]
      %v1183 = vld [vmem:[%s1173 + $0x34] sm:$0xf]
      %v1184 = vld [vmem:[%s1173 + $0x3c] sm:$0xf]
      %v1185 = vld [vmem:[%s1173 + $0x40] sm:$0xf]
      %v1186 = vld [vmem:[%s1173 + $0x48] sm:$0xf]
      %v1187 = vld [vmem:[%s1173 + $0x4c] sm:$0xf]
      %v1188 = vld [vmem:[%s1173 + $0x54] sm:$0xf]
      %v1189 = vld [vmem:[%s1173 + $0x58] sm:$0xf]
      %s1190 = scalar_lea.vmem %s1, 192
      %v1191 = vld [vmem:[%s1190] sm:$0xf]
      %v1192 = vld [vmem:[%s1190 + $0x4] sm:$0xf]
      %v1193 = vld [vmem:[%s1190 + $0x8] sm:$0xf]
      %v1194 = vld [vmem:[%s1190 + $0xc] sm:$0xf]
      %v1195 = vld [vmem:[%s1190 + $0x10] sm:$0xf]
      %v1196 = vld [vmem:[%s1190 + $0x14] sm:$0xf]
      %v1197 = vld [vmem:[%s1190 + $0x18] sm:$0xf]
      %v1198 = vld [vmem:[%s1190 + $0x1c] sm:$0xf]
      %v1199 = vld [vmem:[%s1190 + $0x20] sm:$0xf]
      %v1200 = vld [vmem:[%s1190 + $0x24] sm:$0xf]
      %v1201 = vld [vmem:[%s1190 + $0x28] sm:$0xf]
      %v1202 = vld [vmem:[%s1190 + $0x2c] sm:$0xf]
      %v1203 = vld [vmem:[%s1190 + $0x30] sm:$0xf]
      %v1204 = vld [vmem:[%s1190 + $0x34] sm:$0xf]
      %v1205 = vld [vmem:[%s1190 + $0x38] sm:$0xf]
      %v1206 = vld [vmem:[%s1190 + $0x3c] sm:$0xf]
      %v1223 = vunpack.c.l.b16 %v1174
      %v1224 = vunpack.c.l.b16 %v1175
      %v1225 = vunpack.c.l.b16 %v1176
      %v1226 = vunpack.c.l.b16 %v1177
      %v1227 = vunpack.c.l.b16 %v1178
      %v1228 = vunpack.c.l.b16 %v1179
      %v1229 = vunpack.c.l.b16 %v1180
      %v1230 = vunpack.c.l.b16 %v1181
      %v1231 = vunpack.c.l.b16 %v1182
      %v1232 = vunpack.c.l.b16 %v1183
      %v1233 = vunpack.c.l.b16 %v1184
      %v1234 = vunpack.c.l.b16 %v1185
      %v1235 = vunpack.c.l.b16 %v1186
      %v1236 = vunpack.c.l.b16 %v1187
      %v1237 = vunpack.c.l.b16 %v1188
      %v1238 = vunpack.c.l.b16 %v1189
      %v1239 = vpack.c.b16 %v1224, %v1223
      %v1240 = vpack.c.b16 %v1226, %v1225
      %v1241 = vpack.c.b16 %v1228, %v1227
      %v1242 = vpack.c.b16 %v1230, %v1229
      %v1243 = vpack.c.b16 %v1232, %v1231
      %v1244 = vpack.c.b16 %v1234, %v1233
      %v1245 = vpack.c.b16 %v1236, %v1235
      %v1246 = vpack.c.b16 %v1238, %v1237
      %v1271 = vunpack.c.l.b16 %v1191
      %v1272 = vunpack.c.l.b16 %v1192
      %v1273 = vunpack.c.l.b16 %v1193
      %v1274 = vunpack.c.l.b16 %v1194
      %v1275 = vunpack.c.l.b16 %v1195
      %v1276 = vunpack.c.l.b16 %v1196
      %v1277 = vunpack.c.l.b16 %v1197
      %v1278 = vunpack.c.l.b16 %v1198
      %v1279 = vunpack.c.l.b16 %v1199
      %v1280 = vunpack.c.l.b16 %v1200
      %v1281 = vunpack.c.l.b16 %v1201
      %v1282 = vunpack.c.l.b16 %v1202
      %v1283 = vunpack.c.l.b16 %v1203
      %v1284 = vunpack.c.l.b16 %v1204
      %v1285 = vunpack.c.l.b16 %v1205
      %v1286 = vunpack.c.l.b16 %v1206
      %v1287 = vpack.c.b16 %v1272, %v1271
      %v1288 = vpack.c.b16 %v1274, %v1273
      %v1289 = vpack.c.b16 %v1276, %v1275
      %v1290 = vpack.c.b16 %v1278, %v1277
      %v1291 = vpack.c.b16 %v1280, %v1279
      %v1292 = vpack.c.b16 %v1282, %v1281
      %v1293 = vpack.c.b16 %v1284, %v1283
      %v1294 = vpack.c.b16 %v1286, %v1285
      %1303 = vmatprep.subr.bf16.mxu0 0
      %1304 = vmatpush1.bf16.msra.mxu0 %v1294
      %1305 = vmatprep.subr.bf16.mxu0 0
      %1306 = vmatpush1.bf16.msra.mxu0 %v1293
      %1307 = vmatprep.subr.bf16.mxu0 0
      %1308 = vmatpush1.bf16.msra.mxu0 %v1292
      %1309 = vmatprep.subr.bf16.mxu0 0
      %1310 = vmatpush1.bf16.msra.mxu0 %v1291
      %1311 = vmatprep.subr.bf16.mxu0 0
      %1312 = vmatpush1.bf16.msra.mxu0 %v1290
      %1313 = vmatprep.subr.bf16.mxu0 0
      %1314 = vmatpush1.bf16.msra.mxu0 %v1289
      %1315 = vmatprep.subr.bf16.mxu0 0
      %1316 = vmatpush1.bf16.msra.mxu0 %v1288
      %1317 = vmatprep.subr.bf16.mxu0 0
      %1318 = vmatpush1.bf16.msra.mxu0 %v1287
      %1319 = vmatprep.subr.bf16.mxu0 0
      %1320 = vmatpush2.bf16.msra.mxu0 0
      %1321 = vmatprep.subr.bf16.mxu0 0
      %1322 = vmatpush2.bf16.msra.mxu0 0
      %1323 = vmatprep.subr.bf16.mxu0 0
      %1324 = vmatpush2.bf16.msra.mxu0 0
      %1325 = vmatprep.subr.bf16.mxu0 0
      %1326 = vmatpush2.bf16.msra.mxu0 0
      %1327 = vmatprep.subr.bf16.mxu0 0
      %1328 = vmatpush2.bf16.msra.mxu0 0
      %1329 = vmatprep.subr.bf16.mxu0 0
      %1330 = vmatpush2.bf16.msra.mxu0 0
      %1331 = vmatprep.subr.bf16.mxu0 0
      %1332 = vmatpush2.bf16.msra.mxu0 0
      %1333 = vmatprep.subr.bf16.mxu0 0
      %1334 = vmatpush2.bf16.msra.mxu0 0
      %1335 = vmatprep.mubr.bf16.mxu0 0
      %1336 = vmatmul.mubr.bf16.gmra.mxu0 %v1239
      %v1337 = vpop.f32.mrf.mxu0
      %v1338 = vadd.f32 0.0, %v1337
      %v1339 = vpop.f32.mrf.mxu0
      %v1340 = vpop.f32.mrf.mxu0
      %v1341 = vadd.f32 0.0, %v1340
      %v1342 = vpop.f32.mrf.mxu0
      %1343 = vmatprep.mubr.bf16.mxu0 0
      %1344 = vmatmul.mubr.bf16.gmra.mxu0 %v1240
      %v1345 = vpop.f32.mrf.mxu0
      %v1346 = vadd.f32 0.0, %v1345
      %v1347 = vpop.f32.mrf.mxu0
      %v1348 = vpop.f32.mrf.mxu0
      %v1349 = vadd.f32 0.0, %v1348
      %v1350 = vpop.f32.mrf.mxu0
      %1351 = vmatprep.mubr.bf16.mxu0 0
      %1352 = vmatmul.mubr.bf16.gmra.mxu0 %v1241
      %v1353 = vpop.f32.mrf.mxu0
      %v1354 = vadd.f32 0.0, %v1353
      %v1355 = vpop.f32.mrf.mxu0
      %v1356 = vpop.f32.mrf.mxu0
      %v1357 = vadd.f32 0.0, %v1356
      %v1358 = vpop.f32.mrf.mxu0
      %1359 = vmatprep.mubr.bf16.mxu0 0
      %1360 = vmatmul.mubr.bf16.gmra.mxu0 %v1242
      %v1361 = vpop.f32.mrf.mxu0
      %v1362 = vadd.f32 0.0, %v1361
      %v1363 = vpop.f32.mrf.mxu0
      %v1364 = vpop.f32.mrf.mxu0
      %v1365 = vadd.f32 0.0, %v1364
      %v1366 = vpop.f32.mrf.mxu0
      %1367 = vmatprep.mubr.bf16.mxu0 0
      %1368 = vmatmul.mubr.bf16.gmra.mxu0 %v1243
      %v1369 = vpop.f32.mrf.mxu0
      %v1370 = vadd.f32 0.0, %v1369
      %v1371 = vpop.f32.mrf.mxu0
      %v1372 = vpop.f32.mrf.mxu0
      %v1373 = vadd.f32 0.0, %v1372
      %v1374 = vpop.f32.mrf.mxu0
      %1375 = vmatprep.mubr.bf16.mxu0 0
      %1376 = vmatmul.mubr.bf16.gmra.mxu0 %v1244
      %v1377 = vpop.f32.mrf.mxu0
      %v1378 = vadd.f32 0.0, %v1377
      %v1379 = vpop.f32.mrf.mxu0
      %v1380 = vpop.f32.mrf.mxu0
      %v1381 = vadd.f32 0.0, %v1380
      %v1382 = vpop.f32.mrf.mxu0
      %1383 = vmatprep.mubr.bf16.mxu0 0
      %1384 = vmatmul.mubr.bf16.gmra.mxu0 %v1245
      %v1385 = vpop.f32.mrf.mxu0
      %v1386 = vadd.f32 0.0, %v1385
      %v1387 = vpop.f32.mrf.mxu0
      %v1388 = vpop.f32.mrf.mxu0
      %v1389 = vadd.f32 0.0, %v1388
      %v1390 = vpop.f32.mrf.mxu0
      %1391 = vmatprep.mubr.bf16.mxu0 0
      %1392 = vmatmul.mubr.bf16.gmra.mxu0 %v1246
      %v1393 = vpop.f32.mrf.mxu0
      %v1394 = vadd.f32 0.0, %v1393
      %v1395 = vpop.f32.mrf.mxu0
      %v1396 = vpop.f32.mrf.mxu0
      %v1397 = vadd.f32 0.0, %v1396
      %v1398 = vpop.f32.mrf.mxu0
      %1399 = vdwg.mxu0
      %v1400 = vadd.f32 %v1154, %v1338
      %v1401 = vadd.f32 %v1155, %v1341
      %v1402 = vadd.f32 %v1156, %v1346
      %v1403 = vadd.f32 %v1157, %v1349
      %v1404 = vadd.f32 %v1158, %v1354
      %v1405 = vadd.f32 %v1159, %v1357
      %v1406 = vadd.f32 %v1160, %v1362
      %v1407 = vadd.f32 %v1161, %v1365
      %v1408 = vadd.f32 %v1162, %v1370
      %v1409 = vadd.f32 %v1163, %v1373
      %v1410 = vadd.f32 %v1164, %v1378
      %v1411 = vadd.f32 %v1165, %v1381
      %v1412 = vadd.f32 %v1166, %v1386
      %v1413 = vadd.f32 %v1167, %v1389
      %v1414 = vadd.f32 %v1168, %v1394
      %v1415 = vadd.f32 %v1169, %v1397
      %v1416 = vld [vmem:[%s1173] sm:$0xf]
      %v1417 = vld [vmem:[%s1173 + $0x4] sm:$0xf]
      %v1418 = vld [vmem:[%s1173 + $0x8] sm:$0x1]
      %v1419 = vld [vmem:[%s1173 + $0xc] sm:$0xf]
      %v1420 = vld [vmem:[%s1173 + $0x10] sm:$0xf]
      %v1421 = vld [vmem:[%s1173 + $0x14] sm:$0x1]
      %v1422 = vld [vmem:[%s1173 + $0x18] sm:$0xf]
      %v1423 = vld [vmem:[%s1173 + $0x1c] sm:$0xf]
      %v1424 = vld [vmem:[%s1173 + $0x20] sm:$0x1]
      %v1425 = vld [vmem:[%s1173 + $0x24] sm:$0xf]
      %v1426 = vld [vmem:[%s1173 + $0x28] sm:$0xf]
      %v1427 = vld [vmem:[%s1173 + $0x2c] sm:$0x1]
      %v1428 = vld [vmem:[%s1173 + $0x30] sm:$0xf]
      %v1429 = vld [vmem:[%s1173 + $0x34] sm:$0xf]
      %v1430 = vld [vmem:[%s1173 + $0x38] sm:$0x1]
      %v1431 = vld [vmem:[%s1173 + $0x3c] sm:$0xf]
      %v1432 = vld [vmem:[%s1173 + $0x40] sm:$0xf]
      %v1433 = vld [vmem:[%s1173 + $0x44] sm:$0x1]
      %v1434 = vld [vmem:[%s1173 + $0x48] sm:$0xf]
      %v1435 = vld [vmem:[%s1173 + $0x4c] sm:$0xf]
      %v1436 = vld [vmem:[%s1173 + $0x50] sm:$0x1]
      %v1437 = vld [vmem:[%s1173 + $0x54] sm:$0xf]
      %v1438 = vld [vmem:[%s1173 + $0x58] sm:$0xf]
      %v1439 = vld [vmem:[%s1173 + $0x5c] sm:$0x1]
      %v1441 = vshrl.u32 %v1416, 16
      %v1443 = vrot.slane %v1441, 4
      %v1444 = vshll.u32 %v1416, 16
      %v1446 = vrot.slane %v1444, 5
      %v1447 = vor.u32 %v1443, %v1446
      %v1448 = vrot.slane %v1447, 4
      %v1450 = vshll.u32 %v1417, 16
      %v1452 = vrot.slane %v1450, 5
      %v1453 = vsel %vm297, %v1448, %v1452
      %v1454 = vshrl.u32 %v1417, 16
      %v1456 = vrot.slane %v1454, 4
      %v1457 = vor.u32 %v1456, %v1452
      %v1458 = vrot.slane %v1457, 4
      %v1460 = vshll.u32 %v1418, 16
      %v1462 = vrot.slane %v1460, 5
      %v1463 = vsel %vm297, %v1458, %v1462
      %v1465 = vshrl.u32 %v1419, 16
      %v1467 = vrot.slane %v1465, 4
      %v1468 = vshll.u32 %v1419, 16
      %v1470 = vrot.slane %v1468, 5
      %v1471 = vor.u32 %v1467, %v1470
      %v1472 = vrot.slane %v1471, 4
      %v1474 = vshll.u32 %v1420, 16
      %v1476 = vrot.slane %v1474, 5
      %v1477 = vsel %vm297, %v1472, %v1476
      %v1478 = vshrl.u32 %v1420, 16
      %v1480 = vrot.slane %v1478, 4
      %v1481 = vor.u32 %v1480, %v1476
      %v1482 = vrot.slane %v1481, 4
      %v1484 = vshll.u32 %v1421, 16
      %v1486 = vrot.slane %v1484, 5
      %v1487 = vsel %vm297, %v1482, %v1486
      %v1489 = vshrl.u32 %v1422, 16
      %v1491 = vrot.slane %v1489, 4
      %v1492 = vshll.u32 %v1422, 16
      %v1494 = vrot.slane %v1492, 5
      %v1495 = vor.u32 %v1491, %v1494
      %v1496 = vrot.slane %v1495, 4
      %v1498 = vshll.u32 %v1423, 16
      %v1500 = vrot.slane %v1498, 5
      %v1501 = vsel %vm297, %v1496, %v1500
      %v1502 = vshrl.u32 %v1423, 16
      %v1504 = vrot.slane %v1502, 4
      %v1505 = vor.u32 %v1504, %v1500
      %v1506 = vrot.slane %v1505, 4
      %v1508 = vshll.u32 %v1424, 16
      %v1510 = vrot.slane %v1508, 5
      %v1511 = vsel %vm297, %v1506, %v1510
      %v1513 = vshrl.u32 %v1425, 16
      %v1515 = vrot.slane %v1513, 4
      %v1516 = vshll.u32 %v1425, 16
      %v1518 = vrot.slane %v1516, 5
      %v1519 = vor.u32 %v1515, %v1518
      %v1520 = vrot.slane %v1519, 4
      %v1522 = vshll.u32 %v1426, 16
      %v1524 = vrot.slane %v1522, 5
      %v1525 = vsel %vm297, %v1520, %v1524
      %v1526 = vshrl.u32 %v1426, 16
      %v1528 = vrot.slane %v1526, 4
      %v1529 = vor.u32 %v1528, %v1524
      %v1530 = vrot.slane %v1529, 4
      %v1532 = vshll.u32 %v1427, 16
      %v1534 = vrot.slane %v1532, 5
      %v1535 = vsel %vm297, %v1530, %v1534
      %v1537 = vshrl.u32 %v1428, 16
      %v1539 = vrot.slane %v1537, 4
      %v1540 = vshll.u32 %v1428, 16
      %v1542 = vrot.slane %v1540, 5
      %v1543 = vor.u32 %v1539, %v1542
      %v1544 = vrot.slane %v1543, 4
      %v1546 = vshll.u32 %v1429, 16
      %v1548 = vrot.slane %v1546, 5
      %v1549 = vsel %vm297, %v1544, %v1548
      %v1550 = vshrl.u32 %v1429, 16
      %v1552 = vrot.slane %v1550, 4
      %v1553 = vor.u32 %v1552, %v1548
      %v1554 = vrot.slane %v1553, 4
      %v1556 = vshll.u32 %v1430, 16
      %v1558 = vrot.slane %v1556, 5
      %v1559 = vsel %vm297, %v1554, %v1558
      %v1561 = vshrl.u32 %v1431, 16
      %v1563 = vrot.slane %v1561, 4
      %v1564 = vshll.u32 %v1431, 16
      %v1566 = vrot.slane %v1564, 5
      %v1567 = vor.u32 %v1563, %v1566
      %v1568 = vrot.slane %v1567, 4
      %v1570 = vshll.u32 %v1432, 16
      %v1572 = vrot.slane %v1570, 5
      %v1573 = vsel %vm297, %v1568, %v1572
      %v1574 = vshrl.u32 %v1432, 16
      %v1576 = vrot.slane %v1574, 4
      %v1577 = vor.u32 %v1576, %v1572
      %v1578 = vrot.slane %v1577, 4
      %v1580 = vshll.u32 %v1433, 16
      %v1582 = vrot.slane %v1580, 5
      %v1583 = vsel %vm297, %v1578, %v1582
      %v1585 = vshrl.u32 %v1434, 16
      %v1587 = vrot.slane %v1585, 4
      %v1588 = vshll.u32 %v1434, 16
      %v1590 = vrot.slane %v1588, 5
      %v1591 = vor.u32 %v1587, %v1590
      %v1592 = vrot.slane %v1591, 4
      %v1594 = vshll.u32 %v1435, 16
      %v1596 = vrot.slane %v1594, 5
      %v1597 = vsel %vm297, %v1592, %v1596
      %v1598 = vshrl.u32 %v1435, 16
      %v1600 = vrot.slane %v1598, 4
      %v1601 = vor.u32 %v1600, %v1596
      %v1602 = vrot.slane %v1601, 4
      %v1604 = vshll.u32 %v1436, 16
      %v1606 = vrot.slane %v1604, 5
      %v1607 = vsel %vm297, %v1602, %v1606
      %v1609 = vshrl.u32 %v1437, 16
      %v1611 = vrot.slane %v1609, 4
      %v1612 = vshll.u32 %v1437, 16
      %v1614 = vrot.slane %v1612, 5
      %v1615 = vor.u32 %v1611, %v1614
      %v1616 = vrot.slane %v1615, 4
      %v1618 = vshll.u32 %v1438, 16
      %v1620 = vrot.slane %v1618, 5
      %v1621 = vsel %vm297, %v1616, %v1620
      %v1622 = vshrl.u32 %v1438, 16
      %v1624 = vrot.slane %v1622, 4
      %v1625 = vor.u32 %v1624, %v1620
      %v1626 = vrot.slane %v1625, 4
      %v1628 = vshll.u32 %v1439, 16
      %v1630 = vrot.slane %v1628, 5
      %v1631 = vsel %vm297, %v1626, %v1630
      %s1648 = scalar_lea.vmem %s1, 256
      %v1649 = vld [vmem:[%s1648] sm:$0xf]
      %v1650 = vld [vmem:[%s1648 + $0x4] sm:$0xf]
      %v1651 = vld [vmem:[%s1648 + $0x8] sm:$0xf]
      %v1652 = vld [vmem:[%s1648 + $0xc] sm:$0xf]
      %v1653 = vld [vmem:[%s1648 + $0x10] sm:$0xf]
      %v1654 = vld [vmem:[%s1648 + $0x14] sm:$0xf]
      %v1655 = vld [vmem:[%s1648 + $0x18] sm:$0xf]
      %v1656 = vld [vmem:[%s1648 + $0x1c] sm:$0xf]
      %v1657 = vld [vmem:[%s1648 + $0x20] sm:$0xf]
      %v1658 = vld [vmem:[%s1648 + $0x24] sm:$0xf]
      %v1659 = vld [vmem:[%s1648 + $0x28] sm:$0xf]
      %v1660 = vld [vmem:[%s1648 + $0x2c] sm:$0xf]
      %v1661 = vld [vmem:[%s1648 + $0x30] sm:$0xf]
      %v1662 = vld [vmem:[%s1648 + $0x34] sm:$0xf]
      %v1663 = vld [vmem:[%s1648 + $0x38] sm:$0xf]
      %v1664 = vld [vmem:[%s1648 + $0x3c] sm:$0xf]
      %v1665 = vunpack.c.l.b16 %v1453
      %v1666 = vunpack.c.l.b16 %v1463
      %v1667 = vunpack.c.l.b16 %v1477
      %v1668 = vunpack.c.l.b16 %v1487
      %v1669 = vunpack.c.l.b16 %v1501
      %v1670 = vunpack.c.l.b16 %v1511
      %v1671 = vunpack.c.l.b16 %v1525
      %v1672 = vunpack.c.l.b16 %v1535
      %v1673 = vunpack.c.l.b16 %v1549
      %v1674 = vunpack.c.l.b16 %v1559
      %v1675 = vunpack.c.l.b16 %v1573
      %v1676 = vunpack.c.l.b16 %v1583
      %v1677 = vunpack.c.l.b16 %v1597
      %v1678 = vunpack.c.l.b16 %v1607
      %v1679 = vunpack.c.l.b16 %v1621
      %v1680 = vunpack.c.l.b16 %v1631
      %v1681 = vpack.c.b16 %v1666, %v1665
      %v1682 = vpack.c.b16 %v1668, %v1667
      %v1683 = vpack.c.b16 %v1670, %v1669
      %v1684 = vpack.c.b16 %v1672, %v1671
      %v1685 = vpack.c.b16 %v1674, %v1673
      %v1686 = vpack.c.b16 %v1676, %v1675
      %v1687 = vpack.c.b16 %v1678, %v1677
      %v1688 = vpack.c.b16 %v1680, %v1679
      %v1713 = vunpack.c.l.b16 %v1649
      %v1714 = vunpack.c.l.b16 %v1650
      %v1715 = vunpack.c.l.b16 %v1651
      %v1716 = vunpack.c.l.b16 %v1652
      %v1717 = vunpack.c.l.b16 %v1653
      %v1718 = vunpack.c.l.b16 %v1654
      %v1719 = vunpack.c.l.b16 %v1655
      %v1720 = vunpack.c.l.b16 %v1656
      %v1721 = vunpack.c.l.b16 %v1657
      %v1722 = vunpack.c.l.b16 %v1658
      %v1723 = vunpack.c.l.b16 %v1659
      %v1724 = vunpack.c.l.b16 %v1660
      %v1725 = vunpack.c.l.b16 %v1661
      %v1726 = vunpack.c.l.b16 %v1662
      %v1727 = vunpack.c.l.b16 %v1663
      %v1728 = vunpack.c.l.b16 %v1664
      %v1729 = vpack.c.b16 %v1714, %v1713
      %v1730 = vpack.c.b16 %v1716, %v1715
      %v1731 = vpack.c.b16 %v1718, %v1717
      %v1732 = vpack.c.b16 %v1720, %v1719
      %v1733 = vpack.c.b16 %v1722, %v1721
      %v1734 = vpack.c.b16 %v1724, %v1723
      %v1735 = vpack.c.b16 %v1726, %v1725
      %v1736 = vpack.c.b16 %v1728, %v1727
      %1745 = vmatprep.subr.bf16.mxu0 0
      %1746 = vmatpush1.bf16.msra.mxu0 %v1736
      %1747 = vmatprep.subr.bf16.mxu0 0
      %1748 = vmatpush1.bf16.msra.mxu0 %v1735
      %1749 = vmatprep.subr.bf16.mxu0 0
      %1750 = vmatpush1.bf16.msra.mxu0 %v1734
      %1751 = vmatprep.subr.bf16.mxu0 0
      %1752 = vmatpush1.bf16.msra.mxu0 %v1733
      %1753 = vmatprep.subr.bf16.mxu0 0
      %1754 = vmatpush1.bf16.msra.mxu0 %v1732
      %1755 = vmatprep.subr.bf16.mxu0 0
      %1756 = vmatpush1.bf16.msra.mxu0 %v1731
      %1757 = vmatprep.subr.bf16.mxu0 0
      %1758 = vmatpush1.bf16.msra.mxu0 %v1730
      %1759 = vmatprep.subr.bf16.mxu0 0
      %1760 = vmatpush1.bf16.msra.mxu0 %v1729
      %1761 = vmatprep.subr.bf16.mxu0 0
      %1762 = vmatpush2.bf16.msra.mxu0 0
      %1763 = vmatprep.subr.bf16.mxu0 0
      %1764 = vmatpush2.bf16.msra.mxu0 0
      %1765 = vmatprep.subr.bf16.mxu0 0
      %1766 = vmatpush2.bf16.msra.mxu0 0
      %1767 = vmatprep.subr.bf16.mxu0 0
      %1768 = vmatpush2.bf16.msra.mxu0 0
      %1769 = vmatprep.subr.bf16.mxu0 0
      %1770 = vmatpush2.bf16.msra.mxu0 0
      %1771 = vmatprep.subr.bf16.mxu0 0
      %1772 = vmatpush2.bf16.msra.mxu0 0
      %1773 = vmatprep.subr.bf16.mxu0 0
      %1774 = vmatpush2.bf16.msra.mxu0 0
      %1775 = vmatprep.subr.bf16.mxu0 0
      %1776 = vmatpush2.bf16.msra.mxu0 0
      %1777 = vmatprep.mubr.bf16.mxu0 0
      %1778 = vmatmul.mubr.bf16.gmra.mxu0 %v1681
      %v1779 = vpop.f32.mrf.mxu0
      %v1780 = vadd.f32 0.0, %v1779
      %v1781 = vpop.f32.mrf.mxu0
      %v1782 = vpop.f32.mrf.mxu0
      %v1783 = vadd.f32 0.0, %v1782
      %v1784 = vpop.f32.mrf.mxu0
      %1785 = vmatprep.mubr.bf16.mxu0 0
      %1786 = vmatmul.mubr.bf16.gmra.mxu0 %v1682
      %v1787 = vpop.f32.mrf.mxu0
      %v1788 = vadd.f32 0.0, %v1787
      %v1789 = vpop.f32.mrf.mxu0
      %v1790 = vpop.f32.mrf.mxu0
      %v1791 = vadd.f32 0.0, %v1790
      %v1792 = vpop.f32.mrf.mxu0
      %1793 = vmatprep.mubr.bf16.mxu0 0
      %1794 = vmatmul.mubr.bf16.gmra.mxu0 %v1683
      %v1795 = vpop.f32.mrf.mxu0
      %v1796 = vadd.f32 0.0, %v1795
      %v1797 = vpop.f32.mrf.mxu0
      %v1798 = vpop.f32.mrf.mxu0
      %v1799 = vadd.f32 0.0, %v1798
      %v1800 = vpop.f32.mrf.mxu0
      %1801 = vmatprep.mubr.bf16.mxu0 0
      %1802 = vmatmul.mubr.bf16.gmra.mxu0 %v1684
      %v1803 = vpop.f32.mrf.mxu0
      %v1804 = vadd.f32 0.0, %v1803
      %v1805 = vpop.f32.mrf.mxu0
      %v1806 = vpop.f32.mrf.mxu0
      %v1807 = vadd.f32 0.0, %v1806
      %v1808 = vpop.f32.mrf.mxu0
      %1809 = vmatprep.mubr.bf16.mxu0 0
      %1810 = vmatmul.mubr.bf16.gmra.mxu0 %v1685
      %v1811 = vpop.f32.mrf.mxu0
      %v1812 = vadd.f32 0.0, %v1811
      %v1813 = vpop.f32.mrf.mxu0
      %v1814 = vpop.f32.mrf.mxu0
      %v1815 = vadd.f32 0.0, %v1814
      %v1816 = vpop.f32.mrf.mxu0
      %1817 = vmatprep.mubr.bf16.mxu0 0
      %1818 = vmatmul.mubr.bf16.gmra.mxu0 %v1686
      %v1819 = vpop.f32.mrf.mxu0
      %v1820 = vadd.f32 0.0, %v1819
      %v1821 = vpop.f32.mrf.mxu0
      %v1822 = vpop.f32.mrf.mxu0
      %v1823 = vadd.f32 0.0, %v1822
      %v1824 = vpop.f32.mrf.mxu0
      %1825 = vmatprep.mubr.bf16.mxu0 0
      %1826 = vmatmul.mubr.bf16.gmra.mxu0 %v1687
      %v1827 = vpop.f32.mrf.mxu0
      %v1828 = vadd.f32 0.0, %v1827
      %v1829 = vpop.f32.mrf.mxu0
      %v1830 = vpop.f32.mrf.mxu0
      %v1831 = vadd.f32 0.0, %v1830
      %v1832 = vpop.f32.mrf.mxu0
      %1833 = vmatprep.mubr.bf16.mxu0 0
      %1834 = vmatmul.mubr.bf16.gmra.mxu0 %v1688
      %v1835 = vpop.f32.mrf.mxu0
      %v1836 = vadd.f32 0.0, %v1835
      %v1837 = vpop.f32.mrf.mxu0
      %v1838 = vpop.f32.mrf.mxu0
      %v1839 = vadd.f32 0.0, %v1838
      %v1840 = vpop.f32.mrf.mxu0
      %1841 = vdwg.mxu0
      %v1842 = vadd.f32 %v1400, %v1780
      %v1843 = vadd.f32 %v1401, %v1783
      %v1844 = vadd.f32 %v1402, %v1788
      %v1845 = vadd.f32 %v1403, %v1791
      %v1846 = vadd.f32 %v1404, %v1796
      %v1847 = vadd.f32 %v1405, %v1799
      %v1848 = vadd.f32 %v1406, %v1804
      %v1849 = vadd.f32 %v1407, %v1807
      %v1850 = vadd.f32 %v1408, %v1812
      %v1851 = vadd.f32 %v1409, %v1815
      %v1852 = vadd.f32 %v1410, %v1820
      %v1853 = vadd.f32 %v1411, %v1823
      %v1854 = vadd.f32 %v1412, %v1828
      %v1855 = vadd.f32 %v1413, %v1831
      %v1856 = vadd.f32 %v1414, %v1836
      %v1857 = vadd.f32 %v1415, %v1839
      %v1858 = vld [vmem:[%s1173] sm:$0xe]
      %v1859 = vld [vmem:[%s1173 + $0xc] sm:$0xe]
      %v1860 = vld [vmem:[%s1173 + $0x18] sm:$0xe]
      %v1861 = vld [vmem:[%s1173 + $0x24] sm:$0xe]
      %v1862 = vld [vmem:[%s1173 + $0x30] sm:$0xe]
      %v1863 = vld [vmem:[%s1173 + $0x3c] sm:$0xe]
      %v1864 = vld [vmem:[%s1173 + $0x48] sm:$0xe]
      %v1865 = vld [vmem:[%s1173 + $0x54] sm:$0xe]
      %v1890 = vrot.slane %v1858, 5
      %v1891 = vrot.slane %v1890, 4
      %v1892 = vrot.slane %v1417, 5
      %v1893 = vsel %vm903, %v1891, %v1892
      %v1894 = vrot.slane %v1892, 4
      %v1895 = vrot.slane %v1418, 5
      %v1896 = vsel %vm903, %v1894, %v1895
      %v1897 = vrot.slane %v1859, 5
      %v1898 = vrot.slane %v1897, 4
      %v1899 = vrot.slane %v1420, 5
      %v1900 = vsel %vm903, %v1898, %v1899
      %v1901 = vrot.slane %v1899, 4
      %v1902 = vrot.slane %v1421, 5
      %v1903 = vsel %vm903, %v1901, %v1902
      %v1904 = vrot.slane %v1860, 5
      %v1905 = vrot.slane %v1904, 4
      %v1906 = vrot.slane %v1423, 5
      %v1907 = vsel %vm903, %v1905, %v1906
      %v1908 = vrot.slane %v1906, 4
      %v1909 = vrot.slane %v1424, 5
      %v1910 = vsel %vm903, %v1908, %v1909
      %v1911 = vrot.slane %v1861, 5
      %v1912 = vrot.slane %v1911, 4
      %v1913 = vrot.slane %v1426, 5
      %v1914 = vsel %vm903, %v1912, %v1913
      %v1915 = vrot.slane %v1913, 4
      %v1916 = vrot.slane %v1427, 5
      %v1917 = vsel %vm903, %v1915, %v1916
      %v1918 = vrot.slane %v1862, 5
      %v1919 = vrot.slane %v1918, 4
      %v1920 = vrot.slane %v1429, 5
      %v1921 = vsel %vm903, %v1919, %v1920
      %v1922 = vrot.slane %v1920, 4
      %v1923 = vrot.slane %v1430, 5
      %v1924 = vsel %vm903, %v1922, %v1923
      %v1925 = vrot.slane %v1863, 5
      %v1926 = vrot.slane %v1925, 4
      %v1927 = vrot.slane %v1432, 5
      %v1928 = vsel %vm903, %v1926, %v1927
      %v1929 = vrot.slane %v1927, 4
      %v1930 = vrot.slane %v1433, 5
      %v1931 = vsel %vm903, %v1929, %v1930
      %v1932 = vrot.slane %v1864, 5
      %v1933 = vrot.slane %v1932, 4
      %v1934 = vrot.slane %v1435, 5
      %v1935 = vsel %vm903, %v1933, %v1934
      %v1936 = vrot.slane %v1934, 4
      %v1937 = vrot.slane %v1436, 5
      %v1938 = vsel %vm903, %v1936, %v1937
      %v1939 = vrot.slane %v1865, 5
      %v1940 = vrot.slane %v1939, 4
      %v1941 = vrot.slane %v1438, 5
      %v1942 = vsel %vm903, %v1940, %v1941
      %v1943 = vrot.slane %v1941, 4
      %v1944 = vrot.slane %v1439, 5
      %v1945 = vsel %vm903, %v1943, %v1944
      %s1946 = scalar_lea.vmem %s1, 320
      %v1947 = vld [vmem:[%s1946] sm:$0xf]
      %v1948 = vld [vmem:[%s1946 + $0x4] sm:$0xf]
      %v1949 = vld [vmem:[%s1946 + $0x8] sm:$0xf]
      %v1950 = vld [vmem:[%s1946 + $0xc] sm:$0xf]
      %v1951 = vld [vmem:[%s1946 + $0x10] sm:$0xf]
      %v1952 = vld [vmem:[%s1946 + $0x14] sm:$0xf]
      %v1953 = vld [vmem:[%s1946 + $0x18] sm:$0xf]
      %v1954 = vld [vmem:[%s1946 + $0x1c] sm:$0xf]
      %v1955 = vld [vmem:[%s1946 + $0x20] sm:$0xf]
      %v1956 = vld [vmem:[%s1946 + $0x24] sm:$0xf]
      %v1957 = vld [vmem:[%s1946 + $0x28] sm:$0xf]
      %v1958 = vld [vmem:[%s1946 + $0x2c] sm:$0xf]
      %v1959 = vld [vmem:[%s1946 + $0x30] sm:$0xf]
      %v1960 = vld [vmem:[%s1946 + $0x34] sm:$0xf]
      %v1961 = vld [vmem:[%s1946 + $0x38] sm:$0xf]
      %v1962 = vld [vmem:[%s1946 + $0x3c] sm:$0xf]
      %v1963 = vunpack.c.l.b16 %v1893
      %v1964 = vunpack.c.l.b16 %v1896
      %v1965 = vunpack.c.l.b16 %v1900
      %v1966 = vunpack.c.l.b16 %v1903
      %v1967 = vunpack.c.l.b16 %v1907
      %v1968 = vunpack.c.l.b16 %v1910
      %v1969 = vunpack.c.l.b16 %v1914
      %v1970 = vunpack.c.l.b16 %v1917
      %v1971 = vunpack.c.l.b16 %v1921
      %v1972 = vunpack.c.l.b16 %v1924
      %v1973 = vunpack.c.l.b16 %v1928
      %v1974 = vunpack.c.l.b16 %v1931
      %v1975 = vunpack.c.l.b16 %v1935
      %v1976 = vunpack.c.l.b16 %v1938
      %v1977 = vunpack.c.l.b16 %v1942
      %v1978 = vunpack.c.l.b16 %v1945
      %v1979 = vpack.c.b16 %v1964, %v1963
      %v1980 = vpack.c.b16 %v1966, %v1965
      %v1981 = vpack.c.b16 %v1968, %v1967
      %v1982 = vpack.c.b16 %v1970, %v1969
      %v1983 = vpack.c.b16 %v1972, %v1971
      %v1984 = vpack.c.b16 %v1974, %v1973
      %v1985 = vpack.c.b16 %v1976, %v1975
      %v1986 = vpack.c.b16 %v1978, %v1977
      %v2011 = vunpack.c.l.b16 %v1947
      %v2012 = vunpack.c.l.b16 %v1948
      %v2013 = vunpack.c.l.b16 %v1949
      %v2014 = vunpack.c.l.b16 %v1950
      %v2015 = vunpack.c.l.b16 %v1951
      %v2016 = vunpack.c.l.b16 %v1952
      %v2017 = vunpack.c.l.b16 %v1953
      %v2018 = vunpack.c.l.b16 %v1954
      %v2019 = vunpack.c.l.b16 %v1955
      %v2020 = vunpack.c.l.b16 %v1956
      %v2021 = vunpack.c.l.b16 %v1957
      %v2022 = vunpack.c.l.b16 %v1958
      %v2023 = vunpack.c.l.b16 %v1959
      %v2024 = vunpack.c.l.b16 %v1960
      %v2025 = vunpack.c.l.b16 %v1961
      %v2026 = vunpack.c.l.b16 %v1962
      %v2027 = vpack.c.b16 %v2012, %v2011
      %v2028 = vpack.c.b16 %v2014, %v2013
      %v2029 = vpack.c.b16 %v2016, %v2015
      %v2030 = vpack.c.b16 %v2018, %v2017
      %v2031 = vpack.c.b16 %v2020, %v2019
      %v2032 = vpack.c.b16 %v2022, %v2021
      %v2033 = vpack.c.b16 %v2024, %v2023
      %v2034 = vpack.c.b16 %v2026, %v2025
      %2043 = vmatprep.subr.bf16.mxu0 0
      %2044 = vmatpush1.bf16.msra.mxu0 %v2034
      %2045 = vmatprep.subr.bf16.mxu0 0
      %2046 = vmatpush1.bf16.msra.mxu0 %v2033
      %2047 = vmatprep.subr.bf16.mxu0 0
      %2048 = vmatpush1.bf16.msra.mxu0 %v2032
      %2049 = vmatprep.subr.bf16.mxu0 0
      %2050 = vmatpush1.bf16.msra.mxu0 %v2031
      %2051 = vmatprep.subr.bf16.mxu0 0
      %2052 = vmatpush1.bf16.msra.mxu0 %v2030
      %2053 = vmatprep.subr.bf16.mxu0 0
      %2054 = vmatpush1.bf16.msra.mxu0 %v2029
      %2055 = vmatprep.subr.bf16.mxu0 0
      %2056 = vmatpush1.bf16.msra.mxu0 %v2028
      %2057 = vmatprep.subr.bf16.mxu0 0
      %2058 = vmatpush1.bf16.msra.mxu0 %v2027
      %2059 = vmatprep.subr.bf16.mxu0 0
      %2060 = vmatpush2.bf16.msra.mxu0 0
      %2061 = vmatprep.subr.bf16.mxu0 0
      %2062 = vmatpush2.bf16.msra.mxu0 0
      %2063 = vmatprep.subr.bf16.mxu0 0
      %2064 = vmatpush2.bf16.msra.mxu0 0
      %2065 = vmatprep.subr.bf16.mxu0 0
      %2066 = vmatpush2.bf16.msra.mxu0 0
      %2067 = vmatprep.subr.bf16.mxu0 0
      %2068 = vmatpush2.bf16.msra.mxu0 0
      %2069 = vmatprep.subr.bf16.mxu0 0
      %2070 = vmatpush2.bf16.msra.mxu0 0
      %2071 = vmatprep.subr.bf16.mxu0 0
      %2072 = vmatpush2.bf16.msra.mxu0 0
      %2073 = vmatprep.subr.bf16.mxu0 0
      %2074 = vmatpush2.bf16.msra.mxu0 0
      %2075 = vmatprep.mubr.bf16.mxu0 0
      %2076 = vmatmul.mubr.bf16.gmra.mxu0 %v1979
      %v2077 = vpop.f32.mrf.mxu0
      %v2078 = vadd.f32 0.0, %v2077
      %v2079 = vpop.f32.mrf.mxu0
      %v2080 = vpop.f32.mrf.mxu0
      %v2081 = vadd.f32 0.0, %v2080
      %v2082 = vpop.f32.mrf.mxu0
      %2083 = vmatprep.mubr.bf16.mxu0 0
      %2084 = vmatmul.mubr.bf16.gmra.mxu0 %v1980
      %v2085 = vpop.f32.mrf.mxu0
      %v2086 = vadd.f32 0.0, %v2085
      %v2087 = vpop.f32.mrf.mxu0
      %v2088 = vpop.f32.mrf.mxu0
      %v2089 = vadd.f32 0.0, %v2088
      %v2090 = vpop.f32.mrf.mxu0
      %2091 = vmatprep.mubr.bf16.mxu0 0
      %2092 = vmatmul.mubr.bf16.gmra.mxu0 %v1981
      %v2093 = vpop.f32.mrf.mxu0
      %v2094 = vadd.f32 0.0, %v2093
      %v2095 = vpop.f32.mrf.mxu0
      %v2096 = vpop.f32.mrf.mxu0
      %v2097 = vadd.f32 0.0, %v2096
      %v2098 = vpop.f32.mrf.mxu0
      %2099 = vmatprep.mubr.bf16.mxu0 0
      %2100 = vmatmul.mubr.bf16.gmra.mxu0 %v1982
      %v2101 = vpop.f32.mrf.mxu0
      %v2102 = vadd.f32 0.0, %v2101
      %v2103 = vpop.f32.mrf.mxu0
      %v2104 = vpop.f32.mrf.mxu0
      %v2105 = vadd.f32 0.0, %v2104
      %v2106 = vpop.f32.mrf.mxu0
      %2107 = vmatprep.mubr.bf16.mxu0 0
      %2108 = vmatmul.mubr.bf16.gmra.mxu0 %v1983
      %v2109 = vpop.f32.mrf.mxu0
      %v2110 = vadd.f32 0.0, %v2109
      %v2111 = vpop.f32.mrf.mxu0
      %v2112 = vpop.f32.mrf.mxu0
      %v2113 = vadd.f32 0.0, %v2112
      %v2114 = vpop.f32.mrf.mxu0
      %2115 = vmatprep.mubr.bf16.mxu0 0
      %2116 = vmatmul.mubr.bf16.gmra.mxu0 %v1984
      %v2117 = vpop.f32.mrf.mxu0
      %v2118 = vadd.f32 0.0, %v2117
      %v2119 = vpop.f32.mrf.mxu0
      %v2120 = vpop.f32.mrf.mxu0
      %v2121 = vadd.f32 0.0, %v2120
      %v2122 = vpop.f32.mrf.mxu0
      %2123 = vmatprep.mubr.bf16.mxu0 0
      %2124 = vmatmul.mubr.bf16.gmra.mxu0 %v1985
      %v2125 = vpop.f32.mrf.mxu0
      %v2126 = vadd.f32 0.0, %v2125
      %v2127 = vpop.f32.mrf.mxu0
      %v2128 = vpop.f32.mrf.mxu0
      %v2129 = vadd.f32 0.0, %v2128
      %v2130 = vpop.f32.mrf.mxu0
      %2131 = vmatprep.mubr.bf16.mxu0 0
      %2132 = vmatmul.mubr.bf16.gmra.mxu0 %v1986
      %v2133 = vpop.f32.mrf.mxu0
      %v2134 = vadd.f32 0.0, %v2133
      %v2135 = vpop.f32.mrf.mxu0
      %v2136 = vpop.f32.mrf.mxu0
      %v2137 = vadd.f32 0.0, %v2136
      %v2138 = vpop.f32.mrf.mxu0
      %2139 = vdwg.mxu0
      %v2140 = vadd.f32 %v1842, %v2078
      %v2141 = vadd.f32 %v1843, %v2081
      %v2142 = vadd.f32 %v1844, %v2086
      %v2143 = vadd.f32 %v1845, %v2089
      %v2144 = vadd.f32 %v1846, %v2094
      %v2145 = vadd.f32 %v1847, %v2097
      %v2146 = vadd.f32 %v1848, %v2102
      %v2147 = vadd.f32 %v1849, %v2105
      %v2148 = vadd.f32 %v1850, %v2110
      %v2149 = vadd.f32 %v1851, %v2113
      %v2150 = vadd.f32 %v1852, %v2118
      %v2151 = vadd.f32 %v1853, %v2121
      %v2152 = vadd.f32 %v1854, %v2126
      %v2153 = vadd.f32 %v1855, %v2129
      %v2154 = vadd.f32 %v1856, %v2134
      %v2155 = vadd.f32 %v1857, %v2137
      %s2156 = sadd.s32 %s251, 2
      %s2157 = smul.u32 %s2156, 3
      %s2158 = smul.addr %s2157, 4
      %s2159 = scalar_lea.vmem %s238, %s2158
      %v2160 = vld [vmem:[%s2159] sm:$0xf]
      %v2161 = vld [vmem:[%s2159 + $0x4] sm:$0xf]
      %v2162 = vld [vmem:[%s2159 + $0xc] sm:$0xf]
      %v2163 = vld [vmem:[%s2159 + $0x10] sm:$0xf]
      %v2164 = vld [vmem:[%s2159 + $0x18] sm:$0xf]
      %v2165 = vld [vmem:[%s2159 + $0x1c] sm:$0xf]
      %v2166 = vld [vmem:[%s2159 + $0x24] sm:$0xf]
      %v2167 = vld [vmem:[%s2159 + $0x28] sm:$0xf]
      %v2168 = vld [vmem:[%s2159 + $0x30] sm:$0xf]
      %v2169 = vld [vmem:[%s2159 + $0x34] sm:$0xf]
      %v2170 = vld [vmem:[%s2159 + $0x3c] sm:$0xf]
      %v2171 = vld [vmem:[%s2159 + $0x40] sm:$0xf]
      %v2172 = vld [vmem:[%s2159 + $0x48] sm:$0xf]
      %v2173 = vld [vmem:[%s2159 + $0x4c] sm:$0xf]
      %v2174 = vld [vmem:[%s2159 + $0x54] sm:$0xf]
      %v2175 = vld [vmem:[%s2159 + $0x58] sm:$0xf]
      %s2176 = scalar_lea.vmem %s1, 384
      %v2177 = vld [vmem:[%s2176] sm:$0xf]
      %v2178 = vld [vmem:[%s2176 + $0x4] sm:$0xf]
      %v2179 = vld [vmem:[%s2176 + $0x8] sm:$0xf]
      %v2180 = vld [vmem:[%s2176 + $0xc] sm:$0xf]
      %v2181 = vld [vmem:[%s2176 + $0x10] sm:$0xf]
      %v2182 = vld [vmem:[%s2176 + $0x14] sm:$0xf]
      %v2183 = vld [vmem:[%s2176 + $0x18] sm:$0xf]
      %v2184 = vld [vmem:[%s2176 + $0x1c] sm:$0xf]
      %v2185 = vld [vmem:[%s2176 + $0x20] sm:$0xf]
      %v2186 = vld [vmem:[%s2176 + $0x24] sm:$0xf]
      %v2187 = vld [vmem:[%s2176 + $0x28] sm:$0xf]
      %v2188 = vld [vmem:[%s2176 + $0x2c] sm:$0xf]
      %v2189 = vld [vmem:[%s2176 + $0x30] sm:$0xf]
      %v2190 = vld [vmem:[%s2176 + $0x34] sm:$0xf]
      %v2191 = vld [vmem:[%s2176 + $0x38] sm:$0xf]
      %v2192 = vld [vmem:[%s2176 + $0x3c] sm:$0xf]
      %v2209 = vunpack.c.l.b16 %v2160
      %v2210 = vunpack.c.l.b16 %v2161
      %v2211 = vunpack.c.l.b16 %v2162
      %v2212 = vunpack.c.l.b16 %v2163
      %v2213 = vunpack.c.l.b16 %v2164
      %v2214 = vunpack.c.l.b16 %v2165
      %v2215 = vunpack.c.l.b16 %v2166
      %v2216 = vunpack.c.l.b16 %v2167
      %v2217 = vunpack.c.l.b16 %v2168
      %v2218 = vunpack.c.l.b16 %v2169
      %v2219 = vunpack.c.l.b16 %v2170
      %v2220 = vunpack.c.l.b16 %v2171
      %v2221 = vunpack.c.l.b16 %v2172
      %v2222 = vunpack.c.l.b16 %v2173
      %v2223 = vunpack.c.l.b16 %v2174
      %v2224 = vunpack.c.l.b16 %v2175
      %v2225 = vpack.c.b16 %v2210, %v2209
      %v2226 = vpack.c.b16 %v2212, %v2211
      %v2227 = vpack.c.b16 %v2214, %v2213
      %v2228 = vpack.c.b16 %v2216, %v2215
      %v2229 = vpack.c.b16 %v2218, %v2217
      %v2230 = vpack.c.b16 %v2220, %v2219
      %v2231 = vpack.c.b16 %v2222, %v2221
      %v2232 = vpack.c.b16 %v2224, %v2223
      %v2257 = vunpack.c.l.b16 %v2177
      %v2258 = vunpack.c.l.b16 %v2178
      %v2259 = vunpack.c.l.b16 %v2179
      %v2260 = vunpack.c.l.b16 %v2180
      %v2261 = vunpack.c.l.b16 %v2181
      %v2262 = vunpack.c.l.b16 %v2182
      %v2263 = vunpack.c.l.b16 %v2183
      %v2264 = vunpack.c.l.b16 %v2184
      %v2265 = vunpack.c.l.b16 %v2185
      %v2266 = vunpack.c.l.b16 %v2186
      %v2267 = vunpack.c.l.b16 %v2187
      %v2268 = vunpack.c.l.b16 %v2188
      %v2269 = vunpack.c.l.b16 %v2189
      %v2270 = vunpack.c.l.b16 %v2190
      %v2271 = vunpack.c.l.b16 %v2191
      %v2272 = vunpack.c.l.b16 %v2192
      %v2273 = vpack.c.b16 %v2258, %v2257
      %v2274 = vpack.c.b16 %v2260, %v2259
      %v2275 = vpack.c.b16 %v2262, %v2261
      %v2276 = vpack.c.b16 %v2264, %v2263
      %v2277 = vpack.c.b16 %v2266, %v2265
      %v2278 = vpack.c.b16 %v2268, %v2267
      %v2279 = vpack.c.b16 %v2270, %v2269
      %v2280 = vpack.c.b16 %v2272, %v2271
      %2289 = vmatprep.subr.bf16.mxu0 0
      %2290 = vmatpush1.bf16.msra.mxu0 %v2280
      %2291 = vmatprep.subr.bf16.mxu0 0
      %2292 = vmatpush1.bf16.msra.mxu0 %v2279
      %2293 = vmatprep.subr.bf16.mxu0 0
      %2294 = vmatpush1.bf16.msra.mxu0 %v2278
      %2295 = vmatprep.subr.bf16.mxu0 0
      %2296 = vmatpush1.bf16.msra.mxu0 %v2277
      %2297 = vmatprep.subr.bf16.mxu0 0
      %2298 = vmatpush1.bf16.msra.mxu0 %v2276
      %2299 = vmatprep.subr.bf16.mxu0 0
      %2300 = vmatpush1.bf16.msra.mxu0 %v2275
      %2301 = vmatprep.subr.bf16.mxu0 0
      %2302 = vmatpush1.bf16.msra.mxu0 %v2274
      %2303 = vmatprep.subr.bf16.mxu0 0
      %2304 = vmatpush1.bf16.msra.mxu0 %v2273
      %2305 = vmatprep.subr.bf16.mxu0 0
      %2306 = vmatpush2.bf16.msra.mxu0 0
      %2307 = vmatprep.subr.bf16.mxu0 0
      %2308 = vmatpush2.bf16.msra.mxu0 0
      %2309 = vmatprep.subr.bf16.mxu0 0
      %2310 = vmatpush2.bf16.msra.mxu0 0
      %2311 = vmatprep.subr.bf16.mxu0 0
      %2312 = vmatpush2.bf16.msra.mxu0 0
      %2313 = vmatprep.subr.bf16.mxu0 0
      %2314 = vmatpush2.bf16.msra.mxu0 0
      %2315 = vmatprep.subr.bf16.mxu0 0
      %2316 = vmatpush2.bf16.msra.mxu0 0
      %2317 = vmatprep.subr.bf16.mxu0 0
      %2318 = vmatpush2.bf16.msra.mxu0 0
      %2319 = vmatprep.subr.bf16.mxu0 0
      %2320 = vmatpush2.bf16.msra.mxu0 0
      %2321 = vmatprep.mubr.bf16.mxu0 0
      %2322 = vmatmul.mubr.bf16.gmra.mxu0 %v2225
      %v2323 = vpop.f32.mrf.mxu0
      %v2324 = vadd.f32 0.0, %v2323
      %v2325 = vpop.f32.mrf.mxu0
      %v2326 = vpop.f32.mrf.mxu0
      %v2327 = vadd.f32 0.0, %v2326
      %v2328 = vpop.f32.mrf.mxu0
      %2329 = vmatprep.mubr.bf16.mxu0 0
      %2330 = vmatmul.mubr.bf16.gmra.mxu0 %v2226
      %v2331 = vpop.f32.mrf.mxu0
      %v2332 = vadd.f32 0.0, %v2331
      %v2333 = vpop.f32.mrf.mxu0
      %v2334 = vpop.f32.mrf.mxu0
      %v2335 = vadd.f32 0.0, %v2334
      %v2336 = vpop.f32.mrf.mxu0
      %2337 = vmatprep.mubr.bf16.mxu0 0
      %2338 = vmatmul.mubr.bf16.gmra.mxu0 %v2227
      %v2339 = vpop.f32.mrf.mxu0
      %v2340 = vadd.f32 0.0, %v2339
      %v2341 = vpop.f32.mrf.mxu0
      %v2342 = vpop.f32.mrf.mxu0
      %v2343 = vadd.f32 0.0, %v2342
      %v2344 = vpop.f32.mrf.mxu0
      %2345 = vmatprep.mubr.bf16.mxu0 0
      %2346 = vmatmul.mubr.bf16.gmra.mxu0 %v2228
      %v2347 = vpop.f32.mrf.mxu0
      %v2348 = vadd.f32 0.0, %v2347
      %v2349 = vpop.f32.mrf.mxu0
      %v2350 = vpop.f32.mrf.mxu0
      %v2351 = vadd.f32 0.0, %v2350
      %v2352 = vpop.f32.mrf.mxu0
      %2353 = vmatprep.mubr.bf16.mxu0 0
      %2354 = vmatmul.mubr.bf16.gmra.mxu0 %v2229
      %v2355 = vpop.f32.mrf.mxu0
      %v2356 = vadd.f32 0.0, %v2355
      %v2357 = vpop.f32.mrf.mxu0
      %v2358 = vpop.f32.mrf.mxu0
      %v2359 = vadd.f32 0.0, %v2358
      %v2360 = vpop.f32.mrf.mxu0
      %2361 = vmatprep.mubr.bf16.mxu0 0
      %2362 = vmatmul.mubr.bf16.gmra.mxu0 %v2230
      %v2363 = vpop.f32.mrf.mxu0
      %v2364 = vadd.f32 0.0, %v2363
      %v2365 = vpop.f32.mrf.mxu0
      %v2366 = vpop.f32.mrf.mxu0
      %v2367 = vadd.f32 0.0, %v2366
      %v2368 = vpop.f32.mrf.mxu0
      %2369 = vmatprep.mubr.bf16.mxu0 0
      %2370 = vmatmul.mubr.bf16.gmra.mxu0 %v2231
      %v2371 = vpop.f32.mrf.mxu0
      %v2372 = vadd.f32 0.0, %v2371
      %v2373 = vpop.f32.mrf.mxu0
      %v2374 = vpop.f32.mrf.mxu0
      %v2375 = vadd.f32 0.0, %v2374
      %v2376 = vpop.f32.mrf.mxu0
      %2377 = vmatprep.mubr.bf16.mxu0 0
      %2378 = vmatmul.mubr.bf16.gmra.mxu0 %v2232
      %v2379 = vpop.f32.mrf.mxu0
      %v2380 = vadd.f32 0.0, %v2379
      %v2381 = vpop.f32.mrf.mxu0
      %v2382 = vpop.f32.mrf.mxu0
      %v2383 = vadd.f32 0.0, %v2382
      %v2384 = vpop.f32.mrf.mxu0
      %2385 = vdwg.mxu0
      %v2386 = vadd.f32 %v2140, %v2324
      %v2387 = vadd.f32 %v2141, %v2327
      %v2388 = vadd.f32 %v2142, %v2332
      %v2389 = vadd.f32 %v2143, %v2335
      %v2390 = vadd.f32 %v2144, %v2340
      %v2391 = vadd.f32 %v2145, %v2343
      %v2392 = vadd.f32 %v2146, %v2348
      %v2393 = vadd.f32 %v2147, %v2351
      %v2394 = vadd.f32 %v2148, %v2356
      %v2395 = vadd.f32 %v2149, %v2359
      %v2396 = vadd.f32 %v2150, %v2364
      %v2397 = vadd.f32 %v2151, %v2367
      %v2398 = vadd.f32 %v2152, %v2372
      %v2399 = vadd.f32 %v2153, %v2375
      %v2400 = vadd.f32 %v2154, %v2380
      %v2401 = vadd.f32 %v2155, %v2383
      %v2402 = vld [vmem:[%s2159] sm:$0xf]
      %v2403 = vld [vmem:[%s2159 + $0x4] sm:$0xf]
      %v2404 = vld [vmem:[%s2159 + $0x8] sm:$0x1]
      %v2405 = vld [vmem:[%s2159 + $0xc] sm:$0xf]
      %v2406 = vld [vmem:[%s2159 + $0x10] sm:$0xf]
      %v2407 = vld [vmem:[%s2159 + $0x14] sm:$0x1]
      %v2408 = vld [vmem:[%s2159 + $0x18] sm:$0xf]
      %v2409 = vld [vmem:[%s2159 + $0x1c] sm:$0xf]
      %v2410 = vld [vmem:[%s2159 + $0x20] sm:$0x1]
      %v2411 = vld [vmem:[%s2159 + $0x24] sm:$0xf]
      %v2412 = vld [vmem:[%s2159 + $0x28] sm:$0xf]
      %v2413 = vld [vmem:[%s2159 + $0x2c] sm:$0x1]
      %v2414 = vld [vmem:[%s2159 + $0x30] sm:$0xf]
      %v2415 = vld [vmem:[%s2159 + $0x34] sm:$0xf]
      %v2416 = vld [vmem:[%s2159 + $0x38] sm:$0x1]
      %v2417 = vld [vmem:[%s2159 + $0x3c] sm:$0xf]
      %v2418 = vld [vmem:[%s2159 + $0x40] sm:$0xf]
      %v2419 = vld [vmem:[%s2159 + $0x44] sm:$0x1]
      %v2420 = vld [vmem:[%s2159 + $0x48] sm:$0xf]
      %v2421 = vld [vmem:[%s2159 + $0x4c] sm:$0xf]
      %v2422 = vld [vmem:[%s2159 + $0x50] sm:$0x1]
      %v2423 = vld [vmem:[%s2159 + $0x54] sm:$0xf]
      %v2424 = vld [vmem:[%s2159 + $0x58] sm:$0xf]
      %v2425 = vld [vmem:[%s2159 + $0x5c] sm:$0x1]
      %v2427 = vshrl.u32 %v2402, 16
      %v2429 = vrot.slane %v2427, 4
      %v2430 = vshll.u32 %v2402, 16
      %v2432 = vrot.slane %v2430, 5
      %v2433 = vor.u32 %v2429, %v2432
      %v2434 = vrot.slane %v2433, 4
      %v2436 = vshll.u32 %v2403, 16
      %v2438 = vrot.slane %v2436, 5
      %v2439 = vsel %vm297, %v2434, %v2438
      %v2440 = vshrl.u32 %v2403, 16
      %v2442 = vrot.slane %v2440, 4
      %v2443 = vor.u32 %v2442, %v2438
      %v2444 = vrot.slane %v2443, 4
      %v2446 = vshll.u32 %v2404, 16
      %v2448 = vrot.slane %v2446, 5
      %v2449 = vsel %vm297, %v2444, %v2448
      %v2451 = vshrl.u32 %v2405, 16
      %v2453 = vrot.slane %v2451, 4
      %v2454 = vshll.u32 %v2405, 16
      %v2456 = vrot.slane %v2454, 5
      %v2457 = vor.u32 %v2453, %v2456
      %v2458 = vrot.slane %v2457, 4
      %v2460 = vshll.u32 %v2406, 16
      %v2462 = vrot.slane %v2460, 5
      %v2463 = vsel %vm297, %v2458, %v2462
      %v2464 = vshrl.u32 %v2406, 16
      %v2466 = vrot.slane %v2464, 4
      %v2467 = vor.u32 %v2466, %v2462
      %v2468 = vrot.slane %v2467, 4
      %v2470 = vshll.u32 %v2407, 16
      %v2472 = vrot.slane %v2470, 5
      %v2473 = vsel %vm297, %v2468, %v2472
      %v2475 = vshrl.u32 %v2408, 16
      %v2477 = vrot.slane %v2475, 4
      %v2478 = vshll.u32 %v2408, 16
      %v2480 = vrot.slane %v2478, 5
      %v2481 = vor.u32 %v2477, %v2480
      %v2482 = vrot.slane %v2481, 4
      %v2484 = vshll.u32 %v2409, 16
      %v2486 = vrot.slane %v2484, 5
      %v2487 = vsel %vm297, %v2482, %v2486
      %v2488 = vshrl.u32 %v2409, 16
      %v2490 = vrot.slane %v2488, 4
      %v2491 = vor.u32 %v2490, %v2486
      %v2492 = vrot.slane %v2491, 4
      %v2494 = vshll.u32 %v2410, 16
      %v2496 = vrot.slane %v2494, 5
      %v2497 = vsel %vm297, %v2492, %v2496
      %v2499 = vshrl.u32 %v2411, 16
      %v2501 = vrot.slane %v2499, 4
      %v2502 = vshll.u32 %v2411, 16
      %v2504 = vrot.slane %v2502, 5
      %v2505 = vor.u32 %v2501, %v2504
      %v2506 = vrot.slane %v2505, 4
      %v2508 = vshll.u32 %v2412, 16
      %v2510 = vrot.slane %v2508, 5
      %v2511 = vsel %vm297, %v2506, %v2510
      %v2512 = vshrl.u32 %v2412, 16
      %v2514 = vrot.slane %v2512, 4
      %v2515 = vor.u32 %v2514, %v2510
      %v2516 = vrot.slane %v2515, 4
      %v2518 = vshll.u32 %v2413, 16
      %v2520 = vrot.slane %v2518, 5
      %v2521 = vsel %vm297, %v2516, %v2520
      %v2523 = vshrl.u32 %v2414, 16
      %v2525 = vrot.slane %v2523, 4
      %v2526 = vshll.u32 %v2414, 16
      %v2528 = vrot.slane %v2526, 5
      %v2529 = vor.u32 %v2525, %v2528
      %v2530 = vrot.slane %v2529, 4
      %v2532 = vshll.u32 %v2415, 16
      %v2534 = vrot.slane %v2532, 5
      %v2535 = vsel %vm297, %v2530, %v2534
      %v2536 = vshrl.u32 %v2415, 16
      %v2538 = vrot.slane %v2536, 4
      %v2539 = vor.u32 %v2538, %v2534
      %v2540 = vrot.slane %v2539, 4
      %v2542 = vshll.u32 %v2416, 16
      %v2544 = vrot.slane %v2542, 5
      %v2545 = vsel %vm297, %v2540, %v2544
      %v2547 = vshrl.u32 %v2417, 16
      %v2549 = vrot.slane %v2547, 4
      %v2550 = vshll.u32 %v2417, 16
      %v2552 = vrot.slane %v2550, 5
      %v2553 = vor.u32 %v2549, %v2552
      %v2554 = vrot.slane %v2553, 4
      %v2556 = vshll.u32 %v2418, 16
      %v2558 = vrot.slane %v2556, 5
      %v2559 = vsel %vm297, %v2554, %v2558
      %v2560 = vshrl.u32 %v2418, 16
      %v2562 = vrot.slane %v2560, 4
      %v2563 = vor.u32 %v2562, %v2558
      %v2564 = vrot.slane %v2563, 4
      %v2566 = vshll.u32 %v2419, 16
      %v2568 = vrot.slane %v2566, 5
      %v2569 = vsel %vm297, %v2564, %v2568
      %v2571 = vshrl.u32 %v2420, 16
      %v2573 = vrot.slane %v2571, 4
      %v2574 = vshll.u32 %v2420, 16
      %v2576 = vrot.slane %v2574, 5
      %v2577 = vor.u32 %v2573, %v2576
      %v2578 = vrot.slane %v2577, 4
      %v2580 = vshll.u32 %v2421, 16
      %v2582 = vrot.slane %v2580, 5
      %v2583 = vsel %vm297, %v2578, %v2582
      %v2584 = vshrl.u32 %v2421, 16
      %v2586 = vrot.slane %v2584, 4
      %v2587 = vor.u32 %v2586, %v2582
      %v2588 = vrot.slane %v2587, 4
      %v2590 = vshll.u32 %v2422, 16
      %v2592 = vrot.slane %v2590, 5
      %v2593 = vsel %vm297, %v2588, %v2592
      %v2595 = vshrl.u32 %v2423, 16
      %v2597 = vrot.slane %v2595, 4
      %v2598 = vshll.u32 %v2423, 16
      %v2600 = vrot.slane %v2598, 5
      %v2601 = vor.u32 %v2597, %v2600
      %v2602 = vrot.slane %v2601, 4
      %v2604 = vshll.u32 %v2424, 16
      %v2606 = vrot.slane %v2604, 5
      %v2607 = vsel %vm297, %v2602, %v2606
      %v2608 = vshrl.u32 %v2424, 16
      %v2610 = vrot.slane %v2608, 4
      %v2611 = vor.u32 %v2610, %v2606
      %v2612 = vrot.slane %v2611, 4
      %v2614 = vshll.u32 %v2425, 16
      %v2616 = vrot.slane %v2614, 5
      %v2617 = vsel %vm297, %v2612, %v2616
      %s2618 = scalar_lea.vmem %s1, 448
      %v2619 = vld [vmem:[%s2618] sm:$0xf]
      %v2620 = vld [vmem:[%s2618 + $0x4] sm:$0xf]
      %v2621 = vld [vmem:[%s2618 + $0x8] sm:$0xf]
      %v2622 = vld [vmem:[%s2618 + $0xc] sm:$0xf]
      %v2623 = vld [vmem:[%s2618 + $0x10] sm:$0xf]
      %v2624 = vld [vmem:[%s2618 + $0x14] sm:$0xf]
      %v2625 = vld [vmem:[%s2618 + $0x18] sm:$0xf]
      %v2626 = vld [vmem:[%s2618 + $0x1c] sm:$0xf]
      %v2627 = vld [vmem:[%s2618 + $0x20] sm:$0xf]
      %v2628 = vld [vmem:[%s2618 + $0x24] sm:$0xf]
      %v2629 = vld [vmem:[%s2618 + $0x28] sm:$0xf]
      %v2630 = vld [vmem:[%s2618 + $0x2c] sm:$0xf]
      %v2631 = vld [vmem:[%s2618 + $0x30] sm:$0xf]
      %v2632 = vld [vmem:[%s2618 + $0x34] sm:$0xf]
      %v2633 = vld [vmem:[%s2618 + $0x38] sm:$0xf]
      %v2634 = vld [vmem:[%s2618 + $0x3c] sm:$0xf]
      %v2635 = vunpack.c.l.b16 %v2439
      %v2636 = vunpack.c.l.b16 %v2449
      %v2637 = vunpack.c.l.b16 %v2463
      %v2638 = vunpack.c.l.b16 %v2473
      %v2639 = vunpack.c.l.b16 %v2487
      %v2640 = vunpack.c.l.b16 %v2497
      %v2641 = vunpack.c.l.b16 %v2511
      %v2642 = vunpack.c.l.b16 %v2521
      %v2643 = vunpack.c.l.b16 %v2535
      %v2644 = vunpack.c.l.b16 %v2545
      %v2645 = vunpack.c.l.b16 %v2559
      %v2646 = vunpack.c.l.b16 %v2569
      %v2647 = vunpack.c.l.b16 %v2583
      %v2648 = vunpack.c.l.b16 %v2593
      %v2649 = vunpack.c.l.b16 %v2607
      %v2650 = vunpack.c.l.b16 %v2617
      %v2651 = vpack.c.b16 %v2636, %v2635
      %v2652 = vpack.c.b16 %v2638, %v2637
      %v2653 = vpack.c.b16 %v2640, %v2639
      %v2654 = vpack.c.b16 %v2642, %v2641
      %v2655 = vpack.c.b16 %v2644, %v2643
      %v2656 = vpack.c.b16 %v2646, %v2645
      %v2657 = vpack.c.b16 %v2648, %v2647
      %v2658 = vpack.c.b16 %v2650, %v2649
      %v2683 = vunpack.c.l.b16 %v2619
      %v2684 = vunpack.c.l.b16 %v2620
      %v2685 = vunpack.c.l.b16 %v2621
      %v2686 = vunpack.c.l.b16 %v2622
      %v2687 = vunpack.c.l.b16 %v2623
      %v2688 = vunpack.c.l.b16 %v2624
      %v2689 = vunpack.c.l.b16 %v2625
      %v2690 = vunpack.c.l.b16 %v2626
      %v2691 = vunpack.c.l.b16 %v2627
      %v2692 = vunpack.c.l.b16 %v2628
      %v2693 = vunpack.c.l.b16 %v2629
      %v2694 = vunpack.c.l.b16 %v2630
      %v2695 = vunpack.c.l.b16 %v2631
      %v2696 = vunpack.c.l.b16 %v2632
      %v2697 = vunpack.c.l.b16 %v2633
      %v2698 = vunpack.c.l.b16 %v2634
      %v2699 = vpack.c.b16 %v2684, %v2683
      %v2700 = vpack.c.b16 %v2686, %v2685
      %v2701 = vpack.c.b16 %v2688, %v2687
      %v2702 = vpack.c.b16 %v2690, %v2689
      %v2703 = vpack.c.b16 %v2692, %v2691
      %v2704 = vpack.c.b16 %v2694, %v2693
      %v2705 = vpack.c.b16 %v2696, %v2695
      %v2706 = vpack.c.b16 %v2698, %v2697
      %2715 = vmatprep.subr.bf16.mxu0 0
      %2716 = vmatpush1.bf16.msra.mxu0 %v2706
      %2717 = vmatprep.subr.bf16.mxu0 0
      %2718 = vmatpush1.bf16.msra.mxu0 %v2705
      %2719 = vmatprep.subr.bf16.mxu0 0
      %2720 = vmatpush1.bf16.msra.mxu0 %v2704
      %2721 = vmatprep.subr.bf16.mxu0 0
      %2722 = vmatpush1.bf16.msra.mxu0 %v2703
      %2723 = vmatprep.subr.bf16.mxu0 0
      %2724 = vmatpush1.bf16.msra.mxu0 %v2702
      %2725 = vmatprep.subr.bf16.mxu0 0
      %2726 = vmatpush1.bf16.msra.mxu0 %v2701
      %2727 = vmatprep.subr.bf16.mxu0 0
      %2728 = vmatpush1.bf16.msra.mxu0 %v2700
      %2729 = vmatprep.subr.bf16.mxu0 0
      %2730 = vmatpush1.bf16.msra.mxu0 %v2699
      %2731 = vmatprep.subr.bf16.mxu0 0
      %2732 = vmatpush2.bf16.msra.mxu0 0
      %2733 = vmatprep.subr.bf16.mxu0 0
      %2734 = vmatpush2.bf16.msra.mxu0 0
      %2735 = vmatprep.subr.bf16.mxu0 0
      %2736 = vmatpush2.bf16.msra.mxu0 0
      %2737 = vmatprep.subr.bf16.mxu0 0
      %2738 = vmatpush2.bf16.msra.mxu0 0
      %2739 = vmatprep.subr.bf16.mxu0 0
      %2740 = vmatpush2.bf16.msra.mxu0 0
      %2741 = vmatprep.subr.bf16.mxu0 0
      %2742 = vmatpush2.bf16.msra.mxu0 0
      %2743 = vmatprep.subr.bf16.mxu0 0
      %2744 = vmatpush2.bf16.msra.mxu0 0
      %2745 = vmatprep.subr.bf16.mxu0 0
      %2746 = vmatpush2.bf16.msra.mxu0 0
      %2747 = vmatprep.mubr.bf16.mxu0 0
      %2748 = vmatmul.mubr.bf16.gmra.mxu0 %v2651
      %v2749 = vpop.f32.mrf.mxu0
      %v2750 = vadd.f32 0.0, %v2749
      %v2751 = vpop.f32.mrf.mxu0
      %v2752 = vpop.f32.mrf.mxu0
      %v2753 = vadd.f32 0.0, %v2752
      %v2754 = vpop.f32.mrf.mxu0
      %2755 = vmatprep.mubr.bf16.mxu0 0
      %2756 = vmatmul.mubr.bf16.gmra.mxu0 %v2652
      %v2757 = vpop.f32.mrf.mxu0
      %v2758 = vadd.f32 0.0, %v2757
      %v2759 = vpop.f32.mrf.mxu0
      %v2760 = vpop.f32.mrf.mxu0
      %v2761 = vadd.f32 0.0, %v2760
      %v2762 = vpop.f32.mrf.mxu0
      %2763 = vmatprep.mubr.bf16.mxu0 0
      %2764 = vmatmul.mubr.bf16.gmra.mxu0 %v2653
      %v2765 = vpop.f32.mrf.mxu0
      %v2766 = vadd.f32 0.0, %v2765
      %v2767 = vpop.f32.mrf.mxu0
      %v2768 = vpop.f32.mrf.mxu0
      %v2769 = vadd.f32 0.0, %v2768
      %v2770 = vpop.f32.mrf.mxu0
      %2771 = vmatprep.mubr.bf16.mxu0 0
      %2772 = vmatmul.mubr.bf16.gmra.mxu0 %v2654
      %v2773 = vpop.f32.mrf.mxu0
      %v2774 = vadd.f32 0.0, %v2773
      %v2775 = vpop.f32.mrf.mxu0
      %v2776 = vpop.f32.mrf.mxu0
      %v2777 = vadd.f32 0.0, %v2776
      %v2778 = vpop.f32.mrf.mxu0
      %2779 = vmatprep.mubr.bf16.mxu0 0
      %2780 = vmatmul.mubr.bf16.gmra.mxu0 %v2655
      %v2781 = vpop.f32.mrf.mxu0
      %v2782 = vadd.f32 0.0, %v2781
      %v2783 = vpop.f32.mrf.mxu0
      %v2784 = vpop.f32.mrf.mxu0
      %v2785 = vadd.f32 0.0, %v2784
      %v2786 = vpop.f32.mrf.mxu0
      %2787 = vmatprep.mubr.bf16.mxu0 0
      %2788 = vmatmul.mubr.bf16.gmra.mxu0 %v2656
      %v2789 = vpop.f32.mrf.mxu0
      %v2790 = vadd.f32 0.0, %v2789
      %v2791 = vpop.f32.mrf.mxu0
      %v2792 = vpop.f32.mrf.mxu0
      %v2793 = vadd.f32 0.0, %v2792
      %v2794 = vpop.f32.mrf.mxu0
      %2795 = vmatprep.mubr.bf16.mxu0 0
      %2796 = vmatmul.mubr.bf16.gmra.mxu0 %v2657
      %v2797 = vpop.f32.mrf.mxu0
      %v2798 = vadd.f32 0.0, %v2797
      %v2799 = vpop.f32.mrf.mxu0
      %v2800 = vpop.f32.mrf.mxu0
      %v2801 = vadd.f32 0.0, %v2800
      %v2802 = vpop.f32.mrf.mxu0
      %2803 = vmatprep.mubr.bf16.mxu0 0
      %2804 = vmatmul.mubr.bf16.gmra.mxu0 %v2658
      %v2805 = vpop.f32.mrf.mxu0
      %v2806 = vadd.f32 0.0, %v2805
      %v2807 = vpop.f32.mrf.mxu0
      %v2808 = vpop.f32.mrf.mxu0
      %v2809 = vadd.f32 0.0, %v2808
      %v2810 = vpop.f32.mrf.mxu0
      %2811 = vdwg.mxu0
      %v2812 = vadd.f32 %v2386, %v2750
      %v2813 = vadd.f32 %v2387, %v2753
      %v2814 = vadd.f32 %v2388, %v2758
      %v2815 = vadd.f32 %v2389, %v2761
      %v2816 = vadd.f32 %v2390, %v2766
      %v2817 = vadd.f32 %v2391, %v2769
      %v2818 = vadd.f32 %v2392, %v2774
      %v2819 = vadd.f32 %v2393, %v2777
      %v2820 = vadd.f32 %v2394, %v2782
      %v2821 = vadd.f32 %v2395, %v2785
      %v2822 = vadd.f32 %v2396, %v2790
      %v2823 = vadd.f32 %v2397, %v2793
      %v2824 = vadd.f32 %v2398, %v2798
      %v2825 = vadd.f32 %v2399, %v2801
      %v2826 = vadd.f32 %v2400, %v2806
      %v2827 = vadd.f32 %v2401, %v2809
      %v2828 = vld [vmem:[%s2159] sm:$0xe]
      %v2829 = vld [vmem:[%s2159 + $0xc] sm:$0xe]
      %v2830 = vld [vmem:[%s2159 + $0x18] sm:$0xe]
      %v2831 = vld [vmem:[%s2159 + $0x24] sm:$0xe]
      %v2832 = vld [vmem:[%s2159 + $0x30] sm:$0xe]
      %v2833 = vld [vmem:[%s2159 + $0x3c] sm:$0xe]
      %v2834 = vld [vmem:[%s2159 + $0x48] sm:$0xe]
      %v2835 = vld [vmem:[%s2159 + $0x54] sm:$0xe]
      %v2860 = vrot.slane %v2828, 5
      %v2861 = vrot.slane %v2860, 4
      %v2862 = vrot.slane %v2403, 5
      %v2863 = vsel %vm903, %v2861, %v2862
      %v2864 = vrot.slane %v2862, 4
      %v2865 = vrot.slane %v2404, 5
      %v2866 = vsel %vm903, %v2864, %v2865
      %v2867 = vrot.slane %v2829, 5
      %v2868 = vrot.slane %v2867, 4
      %v2869 = vrot.slane %v2406, 5
      %v2870 = vsel %vm903, %v2868, %v2869
      %v2871 = vrot.slane %v2869, 4
      %v2872 = vrot.slane %v2407, 5
      %v2873 = vsel %vm903, %v2871, %v2872
      %v2874 = vrot.slane %v2830, 5
      %v2875 = vrot.slane %v2874, 4
      %v2876 = vrot.slane %v2409, 5
      %v2877 = vsel %vm903, %v2875, %v2876
      %v2878 = vrot.slane %v2876, 4
      %v2879 = vrot.slane %v2410, 5
      %v2880 = vsel %vm903, %v2878, %v2879
      %v2881 = vrot.slane %v2831, 5
      %v2882 = vrot.slane %v2881, 4
      %v2883 = vrot.slane %v2412, 5
      %v2884 = vsel %vm903, %v2882, %v2883
      %v2885 = vrot.slane %v2883, 4
      %v2886 = vrot.slane %v2413, 5
      %v2887 = vsel %vm903, %v2885, %v2886
      %v2888 = vrot.slane %v2832, 5
      %v2889 = vrot.slane %v2888, 4
      %v2890 = vrot.slane %v2415, 5
      %v2891 = vsel %vm903, %v2889, %v2890
      %v2892 = vrot.slane %v2890, 4
      %v2893 = vrot.slane %v2416, 5
      %v2894 = vsel %vm903, %v2892, %v2893
      %v2895 = vrot.slane %v2833, 5
      %v2896 = vrot.slane %v2895, 4
      %v2897 = vrot.slane %v2418, 5
      %v2898 = vsel %vm903, %v2896, %v2897
      %v2899 = vrot.slane %v2897, 4
      %v2900 = vrot.slane %v2419, 5
      %v2901 = vsel %vm903, %v2899, %v2900
      %v2902 = vrot.slane %v2834, 5
      %v2903 = vrot.slane %v2902, 4
      %v2904 = vrot.slane %v2421, 5
      %v2905 = vsel %vm903, %v2903, %v2904
      %v2906 = vrot.slane %v2904, 4
      %v2907 = vrot.slane %v2422, 5
      %v2908 = vsel %vm903, %v2906, %v2907
      %v2909 = vrot.slane %v2835, 5
      %v2910 = vrot.slane %v2909, 4
      %v2911 = vrot.slane %v2424, 5
      %v2912 = vsel %vm903, %v2910, %v2911
      %v2913 = vrot.slane %v2911, 4
      %v2914 = vrot.slane %v2425, 5
      %v2915 = vsel %vm903, %v2913, %v2914
      %s2916 = scalar_lea.vmem %s1, 512
      %v2917 = vld [vmem:[%s2916] sm:$0xf]
      %v2918 = vld [vmem:[%s2916 + $0x4] sm:$0xf]
      %v2919 = vld [vmem:[%s2916 + $0x8] sm:$0xf]
      %v2920 = vld [vmem:[%s2916 + $0xc] sm:$0xf]
      %v2921 = vld [vmem:[%s2916 + $0x10] sm:$0xf]
      %v2922 = vld [vmem:[%s2916 + $0x14] sm:$0xf]
      %v2923 = vld [vmem:[%s2916 + $0x18] sm:$0xf]
      %v2924 = vld [vmem:[%s2916 + $0x1c] sm:$0xf]
      %v2925 = vld [vmem:[%s2916 + $0x20] sm:$0xf]
      %v2926 = vld [vmem:[%s2916 + $0x24] sm:$0xf]
      %v2927 = vld [vmem:[%s2916 + $0x28] sm:$0xf]
      %v2928 = vld [vmem:[%s2916 + $0x2c] sm:$0xf]
      %v2929 = vld [vmem:[%s2916 + $0x30] sm:$0xf]
      %v2930 = vld [vmem:[%s2916 + $0x34] sm:$0xf]
      %v2931 = vld [vmem:[%s2916 + $0x38] sm:$0xf]
      %v2932 = vld [vmem:[%s2916 + $0x3c] sm:$0xf]
      %v2933 = vunpack.c.l.b16 %v2863
      %v2934 = vunpack.c.l.b16 %v2866
      %v2935 = vunpack.c.l.b16 %v2870
      %v2936 = vunpack.c.l.b16 %v2873
      %v2937 = vunpack.c.l.b16 %v2877
      %v2938 = vunpack.c.l.b16 %v2880
      %v2939 = vunpack.c.l.b16 %v2884
      %v2940 = vunpack.c.l.b16 %v2887
      %v2941 = vunpack.c.l.b16 %v2891
      %v2942 = vunpack.c.l.b16 %v2894
      %v2943 = vunpack.c.l.b16 %v2898
      %v2944 = vunpack.c.l.b16 %v2901
      %v2945 = vunpack.c.l.b16 %v2905
      %v2946 = vunpack.c.l.b16 %v2908
      %v2947 = vunpack.c.l.b16 %v2912
      %v2948 = vunpack.c.l.b16 %v2915
      %v2949 = vpack.c.b16 %v2934, %v2933
      %v2950 = vpack.c.b16 %v2936, %v2935
      %v2951 = vpack.c.b16 %v2938, %v2937
      %v2952 = vpack.c.b16 %v2940, %v2939
      %v2953 = vpack.c.b16 %v2942, %v2941
      %v2954 = vpack.c.b16 %v2944, %v2943
      %v2955 = vpack.c.b16 %v2946, %v2945
      %v2956 = vpack.c.b16 %v2948, %v2947
      %v2981 = vunpack.c.l.b16 %v2917
      %v2982 = vunpack.c.l.b16 %v2918
      %v2983 = vunpack.c.l.b16 %v2919
      %v2984 = vunpack.c.l.b16 %v2920
      %v2985 = vunpack.c.l.b16 %v2921
      %v2986 = vunpack.c.l.b16 %v2922
      %v2987 = vunpack.c.l.b16 %v2923
      %v2988 = vunpack.c.l.b16 %v2924
      %v2989 = vunpack.c.l.b16 %v2925
      %v2990 = vunpack.c.l.b16 %v2926
      %v2991 = vunpack.c.l.b16 %v2927
      %v2992 = vunpack.c.l.b16 %v2928
      %v2993 = vunpack.c.l.b16 %v2929
      %v2994 = vunpack.c.l.b16 %v2930
      %v2995 = vunpack.c.l.b16 %v2931
      %v2996 = vunpack.c.l.b16 %v2932
      %v2997 = vpack.c.b16 %v2982, %v2981
      %v2998 = vpack.c.b16 %v2984, %v2983
      %v2999 = vpack.c.b16 %v2986, %v2985
      %v3000 = vpack.c.b16 %v2988, %v2987
      %v3001 = vpack.c.b16 %v2990, %v2989
      %v3002 = vpack.c.b16 %v2992, %v2991
      %v3003 = vpack.c.b16 %v2994, %v2993
      %v3004 = vpack.c.b16 %v2996, %v2995
      %3013 = vmatprep.subr.bf16.mxu0 0
      %3014 = vmatpush1.bf16.msra.mxu0 %v3004
      %3015 = vmatprep.subr.bf16.mxu0 0
      %3016 = vmatpush1.bf16.msra.mxu0 %v3003
      %3017 = vmatprep.subr.bf16.mxu0 0
      %3018 = vmatpush1.bf16.msra.mxu0 %v3002
      %3019 = vmatprep.subr.bf16.mxu0 0
      %3020 = vmatpush1.bf16.msra.mxu0 %v3001
      %3021 = vmatprep.subr.bf16.mxu0 0
      %3022 = vmatpush1.bf16.msra.mxu0 %v3000
      %3023 = vmatprep.subr.bf16.mxu0 0
      %3024 = vmatpush1.bf16.msra.mxu0 %v2999
      %3025 = vmatprep.subr.bf16.mxu0 0
      %3026 = vmatpush1.bf16.msra.mxu0 %v2998
      %3027 = vmatprep.subr.bf16.mxu0 0
      %3028 = vmatpush1.bf16.msra.mxu0 %v2997
      %3029 = vmatprep.subr.bf16.mxu0 0
      %3030 = vmatpush2.bf16.msra.mxu0 0
      %3031 = vmatprep.subr.bf16.mxu0 0
      %3032 = vmatpush2.bf16.msra.mxu0 0
      %3033 = vmatprep.subr.bf16.mxu0 0
      %3034 = vmatpush2.bf16.msra.mxu0 0
      %3035 = vmatprep.subr.bf16.mxu0 0
      %3036 = vmatpush2.bf16.msra.mxu0 0
      %3037 = vmatprep.subr.bf16.mxu0 0
      %3038 = vmatpush2.bf16.msra.mxu0 0
      %3039 = vmatprep.subr.bf16.mxu0 0
      %3040 = vmatpush2.bf16.msra.mxu0 0
      %3041 = vmatprep.subr.bf16.mxu0 0
      %3042 = vmatpush2.bf16.msra.mxu0 0
      %3043 = vmatprep.subr.bf16.mxu0 0
      %3044 = vmatpush2.bf16.msra.mxu0 0
      %3045 = vmatprep.mubr.bf16.mxu0 0
      %3046 = vmatmul.mubr.bf16.gmra.mxu0 %v2949
      %v3047 = vpop.f32.mrf.mxu0
      %v3048 = vadd.f32 0.0, %v3047
      %v3049 = vpop.f32.mrf.mxu0
      %v3050 = vpop.f32.mrf.mxu0
      %v3051 = vadd.f32 0.0, %v3050
      %v3052 = vpop.f32.mrf.mxu0
      %3053 = vmatprep.mubr.bf16.mxu0 0
      %3054 = vmatmul.mubr.bf16.gmra.mxu0 %v2950
      %v3055 = vpop.f32.mrf.mxu0
      %v3056 = vadd.f32 0.0, %v3055
      %v3057 = vpop.f32.mrf.mxu0
      %v3058 = vpop.f32.mrf.mxu0
      %v3059 = vadd.f32 0.0, %v3058
      %v3060 = vpop.f32.mrf.mxu0
      %3061 = vmatprep.mubr.bf16.mxu0 0
      %3062 = vmatmul.mubr.bf16.gmra.mxu0 %v2951
      %v3063 = vpop.f32.mrf.mxu0
      %v3064 = vadd.f32 0.0, %v3063
      %v3065 = vpop.f32.mrf.mxu0
      %v3066 = vpop.f32.mrf.mxu0
      %v3067 = vadd.f32 0.0, %v3066
      %v3068 = vpop.f32.mrf.mxu0
      %3069 = vmatprep.mubr.bf16.mxu0 0
      %3070 = vmatmul.mubr.bf16.gmra.mxu0 %v2952
      %v3071 = vpop.f32.mrf.mxu0
      %v3072 = vadd.f32 0.0, %v3071
      %v3073 = vpop.f32.mrf.mxu0
      %v3074 = vpop.f32.mrf.mxu0
      %v3075 = vadd.f32 0.0, %v3074
      %v3076 = vpop.f32.mrf.mxu0
      %3077 = vmatprep.mubr.bf16.mxu0 0
      %3078 = vmatmul.mubr.bf16.gmra.mxu0 %v2953
      %v3079 = vpop.f32.mrf.mxu0
      %v3080 = vadd.f32 0.0, %v3079
      %v3081 = vpop.f32.mrf.mxu0
      %v3082 = vpop.f32.mrf.mxu0
      %v3083 = vadd.f32 0.0, %v3082
      %v3084 = vpop.f32.mrf.mxu0
      %3085 = vmatprep.mubr.bf16.mxu0 0
      %3086 = vmatmul.mubr.bf16.gmra.mxu0 %v2954
      %v3087 = vpop.f32.mrf.mxu0
      %v3088 = vadd.f32 0.0, %v3087
      %v3089 = vpop.f32.mrf.mxu0
      %v3090 = vpop.f32.mrf.mxu0
      %v3091 = vadd.f32 0.0, %v3090
      %v3092 = vpop.f32.mrf.mxu0
      %3093 = vmatprep.mubr.bf16.mxu0 0
      %3094 = vmatmul.mubr.bf16.gmra.mxu0 %v2955
      %v3095 = vpop.f32.mrf.mxu0
      %v3096 = vadd.f32 0.0, %v3095
      %v3097 = vpop.f32.mrf.mxu0
      %v3098 = vpop.f32.mrf.mxu0
      %v3099 = vadd.f32 0.0, %v3098
      %v3100 = vpop.f32.mrf.mxu0
      %3101 = vmatprep.mubr.bf16.mxu0 0
      %3102 = vmatmul.mubr.bf16.gmra.mxu0 %v2956
      %v3103 = vpop.f32.mrf.mxu0
      %v3104 = vadd.f32 0.0, %v3103
      %v3105 = vpop.f32.mrf.mxu0
      %v3106 = vpop.f32.mrf.mxu0
      %v3107 = vadd.f32 0.0, %v3106
      %v3108 = vpop.f32.mrf.mxu0
      %3109 = vdwg.mxu0
      %v3110 = vadd.f32 %v2812, %v3048
      %v3111 = vadd.f32 %v2813, %v3051
      %v3112 = vadd.f32 %v2814, %v3056
      %v3113 = vadd.f32 %v2815, %v3059
      %v3114 = vadd.f32 %v2816, %v3064
      %v3115 = vadd.f32 %v2817, %v3067
      %v3116 = vadd.f32 %v2818, %v3072
      %v3117 = vadd.f32 %v2819, %v3075
      %v3118 = vadd.f32 %v2820, %v3080
      %v3119 = vadd.f32 %v2821, %v3083
      %v3120 = vadd.f32 %v2822, %v3088
      %v3121 = vadd.f32 %v2823, %v3091
      %v3122 = vadd.f32 %v2824, %v3096
      %v3123 = vadd.f32 %v2825, %v3099
      %v3124 = vadd.f32 %v2826, %v3104
      %v3125 = vadd.f32 %v2827, %v3107
      %v3126 = vld [vmem:[%s2] sm:$0x1]
      %v3128 = vlaneseq
      %v3129 = vshrl.u32 %v3128, 7
      %v3130 = vsub.s32 0, %v3129
      %v3131 = vrot.slane %v3126, %v3130
      %v3133 = vadd.f32 %v3110, %v3131
      %v3134 = vadd.f32 %v3111, %v3131
      %v3135 = vadd.f32 %v3112, %v3131
      %v3136 = vadd.f32 %v3113, %v3131
      %v3137 = vadd.f32 %v3114, %v3131
      %v3138 = vadd.f32 %v3115, %v3131
      %v3139 = vadd.f32 %v3116, %v3131
      %v3140 = vadd.f32 %v3117, %v3131
      %v3141 = vadd.f32 %v3118, %v3131
      %v3142 = vadd.f32 %v3119, %v3131
      %v3143 = vadd.f32 %v3120, %v3131
      %v3144 = vadd.f32 %v3121, %v3131
      %v3145 = vadd.f32 %v3122, %v3131
      %v3146 = vadd.f32 %v3123, %v3131
      %v3147 = vadd.f32 %v3124, %v3131
      %v3148 = vadd.f32 %v3125, %v3131
      %v3149 = vmax.f32 %v3133, 0.0
      %v3150 = vmax.f32 %v3134, 0.0
      %v3151 = vmax.f32 %v3135, 0.0
      %v3152 = vmax.f32 %v3136, 0.0
      %v3153 = vmax.f32 %v3137, 0.0
      %v3154 = vmax.f32 %v3138, 0.0
      %v3155 = vmax.f32 %v3139, 0.0
      %v3156 = vmax.f32 %v3140, 0.0
      %v3157 = vmax.f32 %v3141, 0.0
      %v3158 = vmax.f32 %v3142, 0.0
      %v3159 = vmax.f32 %v3143, 0.0
      %v3160 = vmax.f32 %v3144, 0.0
      %v3161 = vmax.f32 %v3145, 0.0
      %v3162 = vmax.f32 %v3146, 0.0
      %v3163 = vmax.f32 %v3147, 0.0
      %v3164 = vmax.f32 %v3148, 0.0
      %v3165 = vpack.c.bf16 %v3150, %v3149
      %v3166 = vpack.c.bf16 %v3152, %v3151
      %v3167 = vpack.c.bf16 %v3154, %v3153
      %v3168 = vpack.c.bf16 %v3156, %v3155
      %v3169 = vpack.c.bf16 %v3158, %v3157
      %v3170 = vpack.c.bf16 %v3160, %v3159
      %v3171 = vpack.c.bf16 %v3162, %v3161
      %v3172 = vpack.c.bf16 %v3164, %v3163
      %v3173 = vld [vmem:[%s3] sm:$0xf]
      %v3174 = vld [vmem:[%s3 + $0x4] sm:$0xf]
      %v3175 = vld [vmem:[%s3 + $0x8] sm:$0xf]
      %v3176 = vld [vmem:[%s3 + $0xc] sm:$0xf]
      %v3177 = vld [vmem:[%s3 + $0x10] sm:$0xf]
      %v3178 = vld [vmem:[%s3 + $0x14] sm:$0xf]
      %v3179 = vld [vmem:[%s3 + $0x18] sm:$0xf]
      %v3180 = vld [vmem:[%s3 + $0x1c] sm:$0xf]
      %v3181 = vld [vmem:[%s3 + $0x20] sm:$0xf]
      %v3182 = vld [vmem:[%s3 + $0x24] sm:$0xf]
      %v3183 = vld [vmem:[%s3 + $0x28] sm:$0xf]
      %v3184 = vld [vmem:[%s3 + $0x2c] sm:$0xf]
      %v3185 = vld [vmem:[%s3 + $0x30] sm:$0xf]
      %v3186 = vld [vmem:[%s3 + $0x34] sm:$0xf]
      %v3187 = vld [vmem:[%s3 + $0x38] sm:$0xf]
      %v3188 = vld [vmem:[%s3 + $0x3c] sm:$0xf]
      %v3189 = vld [vmem:[%s4] sm:$0x1]
      %v3191 = vlaneseq
      %v3192 = vshrl.u32 %v3191, 7
      %v3193 = vsub.s32 0, %v3192
      %v3194 = vrot.slane %v3189, %v3193
      %v3212 = vunpack.c.l.b16 %v3173
      %v3213 = vunpack.c.l.b16 %v3174
      %v3214 = vunpack.c.l.b16 %v3175
      %v3215 = vunpack.c.l.b16 %v3176
      %v3216 = vunpack.c.l.b16 %v3177
      %v3217 = vunpack.c.l.b16 %v3178
      %v3218 = vunpack.c.l.b16 %v3179
      %v3219 = vunpack.c.l.b16 %v3180
      %v3220 = vunpack.c.l.b16 %v3181
      %v3221 = vunpack.c.l.b16 %v3182
      %v3222 = vunpack.c.l.b16 %v3183
      %v3223 = vunpack.c.l.b16 %v3184
      %v3224 = vunpack.c.l.b16 %v3185
      %v3225 = vunpack.c.l.b16 %v3186
      %v3226 = vunpack.c.l.b16 %v3187
      %v3227 = vunpack.c.l.b16 %v3188
      %v3228 = vpack.c.b16 %v3213, %v3212
      %v3229 = vpack.c.b16 %v3215, %v3214
      %v3230 = vpack.c.b16 %v3217, %v3216
      %v3231 = vpack.c.b16 %v3219, %v3218
      %v3232 = vpack.c.b16 %v3221, %v3220
      %v3233 = vpack.c.b16 %v3223, %v3222
      %v3234 = vpack.c.b16 %v3225, %v3224
      %v3235 = vpack.c.b16 %v3227, %v3226
      %3244 = vmatprep.subr.bf16.mxu0 0
      %3245 = vmatpush1.bf16.msra.mxu0 %v3235
      %3246 = vmatprep.subr.bf16.mxu0 0
      %3247 = vmatpush1.bf16.msra.mxu0 %v3234
      %3248 = vmatprep.subr.bf16.mxu0 0
      %3249 = vmatpush1.bf16.msra.mxu0 %v3233
      %3250 = vmatprep.subr.bf16.mxu0 0
      %3251 = vmatpush1.bf16.msra.mxu0 %v3232
      %3252 = vmatprep.subr.bf16.mxu0 0
      %3253 = vmatpush1.bf16.msra.mxu0 %v3231
      %3254 = vmatprep.subr.bf16.mxu0 0
      %3255 = vmatpush1.bf16.msra.mxu0 %v3230
      %3256 = vmatprep.subr.bf16.mxu0 0
      %3257 = vmatpush1.bf16.msra.mxu0 %v3229
      %3258 = vmatprep.subr.bf16.mxu0 0
      %3259 = vmatpush1.bf16.msra.mxu0 %v3228
      %3260 = vmatprep.subr.bf16.mxu0 0
      %3261 = vmatpush2.bf16.msra.mxu0 0
      %3262 = vmatprep.subr.bf16.mxu0 0
      %3263 = vmatpush2.bf16.msra.mxu0 0
      %3264 = vmatprep.subr.bf16.mxu0 0
      %3265 = vmatpush2.bf16.msra.mxu0 0
      %3266 = vmatprep.subr.bf16.mxu0 0
      %3267 = vmatpush2.bf16.msra.mxu0 0
      %3268 = vmatprep.subr.bf16.mxu0 0
      %3269 = vmatpush2.bf16.msra.mxu0 0
      %3270 = vmatprep.subr.bf16.mxu0 0
      %3271 = vmatpush2.bf16.msra.mxu0 0
      %3272 = vmatprep.subr.bf16.mxu0 0
      %3273 = vmatpush2.bf16.msra.mxu0 0
      %3274 = vmatprep.subr.bf16.mxu0 0
      %3275 = vmatpush2.bf16.msra.mxu0 0
      %3276 = vmatprep.mubr.bf16.mxu0 0
      %3277 = vmatmul.mubr.bf16.gmra.mxu0 %v3165
      %v3278 = vpop.f32.mrf.mxu0
      %v3279 = vadd.f32 %v3194, %v3278
      %v3280 = vpop.f32.mrf.mxu0
      %v3281 = vpop.f32.mrf.mxu0
      %v3282 = vadd.f32 %v3194, %v3281
      %v3283 = vpop.f32.mrf.mxu0
      %3284 = vmatprep.mubr.bf16.mxu0 0
      %3285 = vmatmul.mubr.bf16.gmra.mxu0 %v3166
      %v3286 = vpop.f32.mrf.mxu0
      %v3287 = vadd.f32 %v3194, %v3286
      %v3288 = vpop.f32.mrf.mxu0
      %v3289 = vpop.f32.mrf.mxu0
      %v3290 = vadd.f32 %v3194, %v3289
      %v3291 = vpop.f32.mrf.mxu0
      %3292 = vmatprep.mubr.bf16.mxu0 0
      %3293 = vmatmul.mubr.bf16.gmra.mxu0 %v3167
      %v3294 = vpop.f32.mrf.mxu0
      %v3295 = vadd.f32 %v3194, %v3294
      %v3296 = vpop.f32.mrf.mxu0
      %v3297 = vpop.f32.mrf.mxu0
      %v3298 = vadd.f32 %v3194, %v3297
      %v3299 = vpop.f32.mrf.mxu0
      %3300 = vmatprep.mubr.bf16.mxu0 0
      %3301 = vmatmul.mubr.bf16.gmra.mxu0 %v3168
      %v3302 = vpop.f32.mrf.mxu0
      %v3303 = vadd.f32 %v3194, %v3302
      %v3304 = vpop.f32.mrf.mxu0
      %v3305 = vpop.f32.mrf.mxu0
      %v3306 = vadd.f32 %v3194, %v3305
      %v3307 = vpop.f32.mrf.mxu0
      %3308 = vmatprep.mubr.bf16.mxu0 0
      %3309 = vmatmul.mubr.bf16.gmra.mxu0 %v3169
      %v3310 = vpop.f32.mrf.mxu0
      %v3311 = vadd.f32 %v3194, %v3310
      %v3312 = vpop.f32.mrf.mxu0
      %v3313 = vpop.f32.mrf.mxu0
      %v3314 = vadd.f32 %v3194, %v3313
      %v3315 = vpop.f32.mrf.mxu0
      %3316 = vmatprep.mubr.bf16.mxu0 0
      %3317 = vmatmul.mubr.bf16.gmra.mxu0 %v3170
      %v3318 = vpop.f32.mrf.mxu0
      %v3319 = vadd.f32 %v3194, %v3318
      %v3320 = vpop.f32.mrf.mxu0
      %v3321 = vpop.f32.mrf.mxu0
      %v3322 = vadd.f32 %v3194, %v3321
      %v3323 = vpop.f32.mrf.mxu0
      %3324 = vmatprep.mubr.bf16.mxu0 0
      %3325 = vmatmul.mubr.bf16.gmra.mxu0 %v3171
      %v3326 = vpop.f32.mrf.mxu0
      %v3327 = vadd.f32 %v3194, %v3326
      %v3328 = vpop.f32.mrf.mxu0
      %v3329 = vpop.f32.mrf.mxu0
      %v3330 = vadd.f32 %v3194, %v3329
      %v3331 = vpop.f32.mrf.mxu0
      %3332 = vmatprep.mubr.bf16.mxu0 0
      %3333 = vmatmul.mubr.bf16.gmra.mxu0 %v3172
      %v3334 = vpop.f32.mrf.mxu0
      %v3335 = vadd.f32 %v3194, %v3334
      %v3336 = vpop.f32.mrf.mxu0
      %v3337 = vpop.f32.mrf.mxu0
      %v3338 = vadd.f32 %v3194, %v3337
      %v3339 = vpop.f32.mrf.mxu0
      %3340 = vdwg.mxu0
      %v3341 = vunpack.c.l.bf16 %v1453
      %v3342 = vunpack.c.l.bf16 %v1463
      %v3343 = vunpack.c.l.bf16 %v1477
      %v3344 = vunpack.c.l.bf16 %v1487
      %v3345 = vunpack.c.l.bf16 %v1501
      %v3346 = vunpack.c.l.bf16 %v1511
      %v3347 = vunpack.c.l.bf16 %v1525
      %v3348 = vunpack.c.l.bf16 %v1535
      %v3349 = vunpack.c.l.bf16 %v1549
      %v3350 = vunpack.c.l.bf16 %v1559
      %v3351 = vunpack.c.l.bf16 %v1573
      %v3352 = vunpack.c.l.bf16 %v1583
      %v3353 = vunpack.c.l.bf16 %v1597
      %v3354 = vunpack.c.l.bf16 %v1607
      %v3355 = vunpack.c.l.bf16 %v1621
      %v3356 = vunpack.c.l.bf16 %v1631
      %v3357 = vadd.f32 %v3279, %v3341
      %v3358 = vadd.f32 %v3282, %v3342
      %v3359 = vadd.f32 %v3287, %v3343
      %v3360 = vadd.f32 %v3290, %v3344
      %v3361 = vadd.f32 %v3295, %v3345
      %v3362 = vadd.f32 %v3298, %v3346
      %v3363 = vadd.f32 %v3303, %v3347
      %v3364 = vadd.f32 %v3306, %v3348
      %v3365 = vadd.f32 %v3311, %v3349
      %v3366 = vadd.f32 %v3314, %v3350
      %v3367 = vadd.f32 %v3319, %v3351
      %v3368 = vadd.f32 %v3322, %v3352
      %v3369 = vadd.f32 %v3327, %v3353
      %v3370 = vadd.f32 %v3330, %v3354
      %v3371 = vadd.f32 %v3335, %v3355
      %v3372 = vadd.f32 %v3338, %v3356
      %v3373 = vmax.f32 %v3357, 0.0
      %v3374 = vmax.f32 %v3358, 0.0
      %v3375 = vmax.f32 %v3359, 0.0
      %v3376 = vmax.f32 %v3360, 0.0
      %v3377 = vmax.f32 %v3361, 0.0
      %v3378 = vmax.f32 %v3362, 0.0
      %v3379 = vmax.f32 %v3363, 0.0
      %v3380 = vmax.f32 %v3364, 0.0
      %v3381 = vmax.f32 %v3365, 0.0
      %v3382 = vmax.f32 %v3366, 0.0
      %v3383 = vmax.f32 %v3367, 0.0
      %v3384 = vmax.f32 %v3368, 0.0
      %v3385 = vmax.f32 %v3369, 0.0
      %v3386 = vmax.f32 %v3370, 0.0
      %v3387 = vmax.f32 %v3371, 0.0
      %v3388 = vmax.f32 %v3372, 0.0
      %v3389 = vpack.c.bf16 %v3374, %v3373
      %v3390 = vpack.c.bf16 %v3376, %v3375
      %v3391 = vpack.c.bf16 %v3378, %v3377
      %v3392 = vpack.c.bf16 %v3380, %v3379
      %v3393 = vpack.c.bf16 %v3382, %v3381
      %v3394 = vpack.c.bf16 %v3384, %v3383
      %v3395 = vpack.c.bf16 %v3386, %v3385
      %v3396 = vpack.c.bf16 %v3388, %v3387
      %v3405 = vunpack.c.l.b16 %v3389
      %v3406 = vunpack.c.h.b16 %v3389
      %v3407 = vunpack.c.l.b16 %v3390
      %v3408 = vunpack.c.h.b16 %v3390
      %v3409 = vunpack.c.l.b16 %v3391
      %v3410 = vunpack.c.h.b16 %v3391
      %v3411 = vunpack.c.l.b16 %v3392
      %v3412 = vunpack.c.h.b16 %v3392
      %v3413 = vunpack.c.l.b16 %v3393
      %v3414 = vunpack.c.h.b16 %v3393
      %v3415 = vunpack.c.l.b16 %v3394
      %v3416 = vunpack.c.h.b16 %v3394
      %v3417 = vunpack.c.l.b16 %v3395
      %v3418 = vunpack.c.h.b16 %v3395
      %v3419 = vunpack.c.l.b16 %v3396
      %v3420 = vunpack.c.h.b16 %v3396
      %v3421 = vpack.c.b16 %v3405, %v3405
      %v3422 = vpack.c.b16 %v3406, %v3406
      %v3423 = vpack.c.b16 %v3407, %v3407
      %v3424 = vpack.c.b16 %v3408, %v3408
      %v3425 = vpack.c.b16 %v3409, %v3409
      %v3426 = vpack.c.b16 %v3410, %v3410
      %v3427 = vpack.c.b16 %v3411, %v3411
      %v3428 = vpack.c.b16 %v3412, %v3412
      %v3429 = vpack.c.b16 %v3413, %v3413
      %v3430 = vpack.c.b16 %v3414, %v3414
      %v3431 = vpack.c.b16 %v3415, %v3415
      %v3432 = vpack.c.b16 %v3416, %v3416
      %v3433 = vpack.c.b16 %v3417, %v3417
      %v3434 = vpack.c.b16 %v3418, %v3418
      %v3435 = vpack.c.b16 %v3419, %v3419
      %v3436 = vpack.c.b16 %v3420, %v3420
      %3453 = vst [vmem:[%s248] sm:$0xf] %v3421
      %3454 = vst [vmem:[%s248 + $0x4] sm:$0xf] %v3422
      %3455 = vst [vmem:[%s248 + $0x8] sm:$0xf] %v3423
      %3456 = vst [vmem:[%s248 + $0xc] sm:$0xf] %v3424
      %3457 = vst [vmem:[%s248 + $0x10] sm:$0xf] %v3425
      %3458 = vst [vmem:[%s248 + $0x14] sm:$0xf] %v3426
      %3459 = vst [vmem:[%s248 + $0x18] sm:$0xf] %v3427
      %3460 = vst [vmem:[%s248 + $0x1c] sm:$0xf] %v3428
      %3461 = vst [vmem:[%s248 + $0x20] sm:$0xf] %v3429
      %3462 = vst [vmem:[%s248 + $0x24] sm:$0xf] %v3430
      %3463 = vst [vmem:[%s248 + $0x28] sm:$0xf] %v3431
      %3464 = vst [vmem:[%s248 + $0x2c] sm:$0xf] %v3432
      %3465 = vst [vmem:[%s248 + $0x30] sm:$0xf] %v3433
      %3466 = vst [vmem:[%s248 + $0x34] sm:$0xf] %v3434
      %3467 = vst [vmem:[%s248 + $0x38] sm:$0xf] %v3435
      %3468 = vst [vmem:[%s248 + $0x3c] sm:$0xf] %v3436
      %s3469 = smul.u32 8, %s21
      %p3470 = scmp.lt.s32.totalorder %s20, 1
      %s3471 = scalar_select %p3470, %s20, 1
      %p3472 = scmp.lt.s32.totalorder %s3469, 15
      %s3473 = scalar_select %p3472, %s3469, 15
      %s3474 = smul.addr %s3473, 2
      %s3475 = smul.addr %s3471, 32
      %s3476 = sadd.s32 %s3474, %s3475
      %s3477 = smul.addr %s3476, 4
      %s3478 = scalar_lea.vmem %s5, %s3477
      // Predicated region
      $region41: #{_lambda_.5} parent=39 // pred_check
        %p3479 = pneg %p158
      $region42: #{_lambda_.5} parent=39 // pred_check_branch
        %3481 = sbr.rel (%p3479) target = $region44
      $region43: #{_lambda_.5} parent=39 // pred_region
        %s3482 = smul.u32 8, %s21
      $region44: #{_lambda_.5} parent=39 // pred_fallthru
        _
    $region40: #{_lambda_.5} parent=5 // pred_fallthru
      _
    %p3483 = scmp.le.s32.totalorder 2, %s11
    // Predicated region
    $region45: #{_lambda_.5} parent=5 // pred_check
      %p3484 = pneg %p3483
    $region46: #{_lambda_.5} parent=5 // pred_check_branch
      %3486 = sbr.rel (%p3484) target = $region48
    $region47: #{_lambda_.5} parent=5 // pred_region
      %s3487 = ssub.s32 %s11, 2
      // Predicated region
      $region49: #{_lambda_.5} parent=47 // pred_check
        %p3488 = pneg %p164
      $region50: #{_lambda_.5} parent=47 // pred_check_branch
        %3490 = sbr.rel (%p3488) target = $region52
      $region51: #{_lambda_.5} parent=47 // pred_region
        %s3491 = smul.u32 8, %s23
        %p3492 = scmp.lt.s32.totalorder %s22, 1
        %s3493 = scalar_select %p3492, %s22, 1
        %p3494 = scmp.lt.s32.totalorder %s3491, 15
        %s3495 = scalar_select %p3494, %s3491, 15
        %s3496 = smul.addr %s3495, 2
        %s3497 = smul.addr %s3493, 32
        %s3498 = sadd.s32 %s3496, %s3497
        %s3499 = smul.addr %s3498, 4
        %s3500 = scalar_lea.vmem %s5, %s3499
      $region52: #{_lambda_.5} parent=47 // pred_fallthru
        _
    $region48: #{_lambda_.5} parent=5 // pred_fallthru
      _
  $region6: #{_lambda_.5} parent=0 // loop_footer
    %s15 = sadd.s32 1, %s11
  $region7: #{_lambda_.5} parent=0 // loop_footer_branch
    %10 = sbr.rel target = $region3
  $region8: #{_lambda_.5} parent=0 // loop_exit
    _

</llo_original>
